<compile_context>
chip_gen: v5e
topology: v5e:2x2
jax: 0.10.0
libtpu: 0.0.40
codegen_flags: <defaults>
</compile_context>

<pallas_src>
import functools

import jax
import jax.numpy as jnp
from jax import lax
from jax.experimental import pallas as pl
from jax.experimental.pallas import tpu as pltpu

TILE = 128  # lane tile (time axis)


def _round_up(x, m):
    return (x + m - 1) // m * m


# --------------------------- ResidualUnit kernel ---------------------------

def _residual_unit_kernel(xlo_ref, xhi_ref, w1_ref, b1_ref, w2_ref, b2_ref,
                          o_ref, *, dilation, fuse_output_elu):
    d = dilation
    # 256-lane working window: output tile j plus its causal halo (tile j+1 of
    # the left-padded input). All tap offsets below are static.
    xwin = jnp.concatenate([xlo_ref[0], xhi_ref[0]], axis=-1)        # (C, 256) bf16

    # Causal dilated conv, kernel_size=7: K-stack the 7 taps (K = 7*C) and run
    # ONE lane-dense bf16 MXU matmul with f32 accumulation.
    xstk = jnp.concatenate([xwin[:, k * d:k * d + TILE] for k in range(7)],
                           axis=0)                                   # (7*C, 128) bf16
    y = jnp.dot(w1_ref[...], xstk,
                preferred_element_type=jnp.float32) + b1_ref[...]    # (C, 128) f32

    # ELU (alpha=1) in f32; clamp the discarded positive branch before exp.
    y = jnp.where(y > 0.0, y, jnp.exp(jnp.minimum(y, 0.0)) - 1.0)

    # 1x1 conv: bf16 on the MXU, f32 accumulate.
    z = jnp.dot(w2_ref[...], y.astype(jnp.bfloat16),
                preferred_element_type=jnp.float32) + b2_ref[...]    # (C, 128) f32

    out = xwin[:, 6 * d:6 * d + TILE].astype(jnp.float32) + z        # residual add
    if fuse_output_elu:  # the nn.ELU() following each ResidualUnit in EncoderBlock
        out = jnp.where(out > 0.0, out, jnp.exp(jnp.minimum(out, 0.0)) - 1.0)
    o_ref[0] = out.astype(o_ref.dtype)


def residual_unit(x, w1, b1, w2, b2, *, dilation, fuse_output_elu=False,
                  out_dtype=jnp.float32):
    """SoundStream ResidualUnit.forward (weight_norm folded into effective weights).

    x: (B, C, T) channels-first. w1: (C, C, 7) PyTorch OIW layout, w2: (C, C[,1])."""
    bsz, c, t = x.shape
    w1 = w1.reshape(c, c, 7)
    w2 = w2.reshape(c, c)
    halo = 6 * dilation                      # causal padding of the k=7 dilated conv
    assert halo <= TILE, "dilation too large for the single-halo-tile scheme"
    tp = _round_up(t, TILE)
    ntiles = tp // TILE
    lx = tp + TILE                           # one extra 128-lane tile for the halo view

    # Single fused pad + bf16 cast pass over x (channels-first, lane-dense).
    xpad = jnp.pad(x.astype(jnp.bfloat16),
                   ((0, 0), (0, 0), (halo, lx - halo - t)))

    # Weights in transposed-GEMM layout, bf16; biases stay f32.
    w1s = jnp.transpose(w1, (0, 2, 1)).reshape(c, 7 * c).astype(jnp.bfloat16)
    w2s = w2.astype(jnp.bfloat16)
    b1c = b1.reshape(c, 1).astype(jnp.float32)
    b2c = b2.reshape(c, 1).astype(jnp.float32)

    kernel = functools.partial(_residual_unit_kernel, dilation=dilation,
                               fuse_output_elu=fuse_output_elu)
    out = pl.pallas_call(
        kernel,
        out_shape=jax.ShapeDtypeStruct((bsz, c, tp), out_dtype),
        grid=(bsz, ntiles),
        in_specs=[
            pl.BlockSpec((1, c, TILE), lambda nb, j: (nb, 0, j)),       # tile j
            pl.BlockSpec((1, c, TILE), lambda nb, j: (nb, 0, j + 1)),   # halo tile j+1
            pl.BlockSpec((c, 7 * c), lambda nb, j: (0, 0)),             # resident weights
            pl.BlockSpec((c, 1), lambda nb, j: (0, 0)),
            pl.BlockSpec((c, c), lambda nb, j: (0, 0)),
            pl.BlockSpec((c, 1), lambda nb, j: (0, 0)),
        ],
        out_specs=pl.BlockSpec((1, c, TILE), lambda nb, j: (nb, 0, j)),
        compiler_params=pltpu.CompilerParams(
            dimension_semantics=("parallel", "arbitrary"),
            vmem_limit_bytes=48 * 1024 * 1024),
    )(xpad, xpad, w1s, b1c, w2s, b2c)
    return out if tp == t else out[:, :, :t]


# ------------------- strided causal downsampling conv ----------------------

def _downsample_conv_kernel(plo_ref, phi_ref, w_ref, b_ref, o_ref, *,
                            channels, stride):
    c, s = channels, stride
    pwin = jnp.concatenate([plo_ref[0], phi_ref[0]], axis=-1)        # (s*C, 256) bf16
    # K-stack the 2*stride taps at the STRIDED (kept) positions only:
    # tap k = q*s + r reads phase r shifted by q output columns.
    taps = []
    for k in range(2 * s):
        q, r = divmod(k, s)
        taps.append(pwin[r * c:(r + 1) * c, q:q + TILE])
    stk = jnp.concatenate(taps, axis=0)                              # (2*s*C, 128) bf16
    z = jnp.dot(w_ref[...], stk,
                preferred_element_type=jnp.float32) + b_ref[...]     # (2C, 128) f32
    o_ref[0] = z.astype(o_ref.dtype)


def downsample_causal_conv(x, w, b, *, stride, out_dtype=jnp.float32):
    """EncoderBlock's weight_norm(CausalConv1d(C -> 2C, kernel=2*stride, stride)).

    Only the kept strided output positions are computed: the wrapper phase-splits
    the causally padded input so every kernel tap read is a contiguous lane slice."""
    bsz, c, t = x.shape
    cout, cin, kk = w.shape
    s = stride
    assert cin == c and kk == 2 * s
    to = (t - 1) // s + 1                     # causal output length
    uo = _round_up(to, TILE)
    ulen = uo + TILE                          # +1 halo tile for the q=1 taps

    xpad = jnp.pad(x.astype(jnp.bfloat16),
                   ((0, 0), (0, 0), (2 * s - 1, ulen * s - (t + 2 * s - 1))))
    # P[b, r*C + ch, u] = xpad[b, ch, u*s + r]   (phase-major space-to-depth)
    p = xpad.reshape(bsz, c, ulen, s).transpose(0, 3, 1, 2).reshape(bsz, s * c, ulen)

    ws = jnp.transpose(w, (0, 2, 1)).reshape(cout, 2 * s * c).astype(jnp.bfloat16)
    bc = b.reshape(cout, 1).astype(jnp.float32)

    kernel = functools.partial(_downsample_conv_kernel, channels=c, stride=s)
    out = pl.pallas_call(
        kernel,
        out_shape=jax.ShapeDtypeStruct((bsz, cout, uo), out_dtype),
        grid=(bsz, uo // TILE),
        in_specs=[
            pl.BlockSpec((1, s * c, TILE), lambda nb, j: (nb, 0, j)),
            pl.BlockSpec((1, s * c, TILE), lambda nb, j: (nb, 0, j + 1)),
            pl.BlockSpec((cout, 2 * s * c), lambda nb, j: (0, 0)),
            pl.BlockSpec((cout, 1), lambda nb, j: (0, 0)),
        ],
        out_specs=pl.BlockSpec((1, cout, TILE), lambda nb, j: (nb, 0, j)),
        compiler_params=pltpu.CompilerParams(
            dimension_semantics=("parallel", "arbitrary"),
            vmem_limit_bytes=48 * 1024 * 1024),
    )(p, p, ws, bc)
    return out if uo == to else out[:, :, :to]


# ------------------------------ EncoderBlock --------------------------------

@functools.partial(jax.jit, static_argnames=("stride",))
def encoder_block(x, params, *, stride):
    """SoundStream EncoderBlock.forward:
       RU(d=1) -> ELU -> RU(d=3) -> ELU -> RU(d=9) -> ELU -> CausalConv1d(C->2C, k=2s, s)."""
    ru_params, (wd, bd) = params
    h = x
    for (w1, b1, w2, b2), d in zip(ru_params, (1, 3, 9)):
        # intermediate activations stay bf16 kernel-to-kernel
        h = residual_unit(h, w1, b1, w2, b2, dilation=d,
                          fuse_output_elu=True, out_dtype=jnp.bfloat16)
    return downsample_causal_conv(h, wd, bd, stride=stride, out_dtype=jnp.float32)


# ------------------------ pure-JAX reference (check) ------------------------

def _q(a):
    return a.astype(jnp.bfloat16).astype(jnp.float32)


def _elu_ref(y):
    return jnp.where(y > 0.0, y, jnp.exp(jnp.minimum(y, 0.0)) - 1.0)


def _residual_unit_ref(x, w1, b1, w2, b2, dilation):
    dn = ("NCW", "OIW", "NCW")
    hi = lax.Precision.HIGHEST
    xp = jnp.pad(x, ((0, 0), (0, 0), (6 * dilation, 0)))            # causal left pad
    y = lax.conv_general_dilated(xp, w1, (1,), "VALID", rhs_dilation=(dilation,),
                                 dimension_numbers=dn, precision=hi) + b1[None, :, None]
    y = _q(_elu_ref(y))                     # kernel casts the activation to bf16 pre-1x1
    z = lax.conv_general_dilated(y, w2[:, :, None], (1,), "VALID",
                                 dimension_numbers=dn, precision=hi) + b2[None, :, None]
    return x + z


def encoder_block_ref(x, params, *, stride):
    ru_params, (wd, bd) = params
    h = _q(x)
    for (w1, b1, w2, b2), d in zip(ru_params, (1, 3, 9)):
        h = _q(_elu_ref(_residual_unit_ref(h, _q(w1), b1, _q(w2.reshape(w2.shape[0], -1)),
                                           b2, d)))
    xp = jnp.pad(h, ((0, 0), (0, 0), (2 * stride - 1, 0)))
    return lax.conv_general_dilated(xp, _q(wd), (stride,), "VALID",
                                    dimension_numbers=("NCW", "OIW", "NCW"),
                                    precision=lax.Precision.HIGHEST) + bd[None, :, None]


# ------------------------------ params / main -------------------------------

def init_params(key, c, stride):
    """Deterministic synthetic params (weight_norm folded), PyTorch-default-like scale."""
    ks = jax.random.split(key, 14)

    def uni(k, shape, fan_in):
        bound = 1.0 / float(fan_in) ** 0.5
        return jax.random.uniform(k, shape, jnp.float32, -bound, bound)

    ru_params = []
    i = 0
    for _ in range(3):
        w1 = uni(ks[i], (c, c, 7), c * 7)
        b1 = uni(ks[i + 1], (c,), c * 7)
        w2 = uni(ks[i + 2], (c, c), c)
        b2 = uni(ks[i + 3], (c,), c)
        ru_params.append((w1, b1, w2, b2))
        i += 4
    wd = uni(ks[i], (2 * c, c, 2 * stride), c * 2 * stride)
    bd = uni(ks[i + 1], (2 * c,), c * 2 * stride)
    return (tuple(ru_params), (wd, bd))


if __name__ == "__main__":
    B, C, T, STRIDE = 2, 32, 512, 2          # EncoderBlock(out_channels=2*C, stride=2)

    key = jax.random.PRNGKey(0)
    kx, kp = jax.random.split(key)
    x = jax.random.normal(kx, (B, C, T), jnp.float32)     # (B, C, T) channels-first
    params = init_params(kp, C, STRIDE)

    out = jax.block_until_ready(encoder_block(x, params, stride=STRIDE))
    to = (T - 1) // STRIDE + 1
    assert out.shape == (B, 2 * C, to), (out.shape, (B, 2 * C, to))

    # The kernels consume bf16-rounded inputs/weights/activations (biases f32),
    # so the reference mirrors those roundings; remaining error is accumulation
    # order + rare 1-ulp bf16 rounding flips on intermediates.
    ref = jax.block_until_ready(encoder_block_ref(x, params, stride=STRIDE))
    err = float(jnp.max(jnp.abs(out - ref)))
    if err > 1e-2:
        raise AssertionError(f"Pallas EncoderBlock mismatch vs reference: max abs err = {err}")

    print("KERNEL_OK")
</pallas_src>

<mosaic_0001>
module attributes {stable_mosaic.version = 11 : i64} {
  func.func @_residual_unit_kernel(%arg0: i32, %arg1: i32, %arg2: memref<1x32x128xbf16, #tpu.memory_space<vmem>>, %arg3: memref<1x32x128xbf16, #tpu.memory_space<vmem>>, %arg4: memref<32x224xbf16, #tpu.memory_space<vmem>>, %arg5: memref<32x1xf32, #tpu.memory_space<vmem>>, %arg6: memref<32x32xbf16, #tpu.memory_space<vmem>>, %arg7: memref<32x1xf32, #tpu.memory_space<vmem>>, %arg8: memref<1x32x128xbf16, #tpu.memory_space<vmem>>) attributes {dimension_semantics = [#tpu.dimension_semantics<parallel>, #tpu.dimension_semantics<arbitrary>], iteration_bounds = array<i64: 2, 4>, scalar_prefetch = 0 : i64, scratch_operands = 0 : i64, tpu.core_type = #tpu.core_type<tc>, window_params = [{transform_indices = @transform_0, window_bounds = array<i64: 1, 32, 128>}, {transform_indices = @transform_1, window_bounds = array<i64: 1, 32, 128>}, {pipeline_mode = #tpu.pipeline_mode<synchronous>, transform_indices = @transform_2, window_bounds = array<i64: 32, 224>}, {pipeline_mode = #tpu.pipeline_mode<synchronous>, transform_indices = @transform_3, window_bounds = array<i64: 32, 1>}, {pipeline_mode = #tpu.pipeline_mode<synchronous>, transform_indices = @transform_4, window_bounds = array<i64: 32, 32>}, {pipeline_mode = #tpu.pipeline_mode<synchronous>, transform_indices = @transform_5, window_bounds = array<i64: 32, 1>}, {transform_indices = @transform_6, window_bounds = array<i64: 1, 32, 128>}]} {
    %c0 = arith.constant 0 : index
    %c0_0 = arith.constant 0 : index
    %c0_1 = arith.constant 0 : index
    %0 = vector.load %arg2[%c0, %c0_0, %c0_1] : memref<1x32x128xbf16, #tpu.memory_space<vmem>>, vector<1x32x128xbf16>
    %1 = vector.shape_cast %0 : vector<1x32x128xbf16> to vector<32x128xbf16>
    %c0_2 = arith.constant 0 : index
    %c0_3 = arith.constant 0 : index
    %c0_4 = arith.constant 0 : index
    %2 = vector.load %arg3[%c0_2, %c0_3, %c0_4] : memref<1x32x128xbf16, #tpu.memory_space<vmem>>, vector<1x32x128xbf16>
    %3 = vector.shape_cast %2 : vector<1x32x128xbf16> to vector<32x128xbf16>
    %4 = tpu.concatenate %1, %3 in 1 : vector<32x128xbf16>, vector<32x128xbf16> -> vector<32x256xbf16>
    %5 = vector.extract_strided_slice %4 {offsets = [0, 0], sizes = [32, 128], strides = [1, 1]} : vector<32x256xbf16> to vector<32x128xbf16>
    %6 = vector.extract_strided_slice %4 {offsets = [0, 1], sizes = [32, 128], strides = [1, 1]} : vector<32x256xbf16> to vector<32x128xbf16>
    %7 = vector.extract_strided_slice %4 {offsets = [0, 2], sizes = [32, 128], strides = [1, 1]} : vector<32x256xbf16> to vector<32x128xbf16>
    %8 = vector.extract_strided_slice %4 {offsets = [0, 3], sizes = [32, 128], strides = [1, 1]} : vector<32x256xbf16> to vector<32x128xbf16>
    %9 = vector.extract_strided_slice %4 {offsets = [0, 4], sizes = [32, 128], strides = [1, 1]} : vector<32x256xbf16> to vector<32x128xbf16>
    %10 = vector.extract_strided_slice %4 {offsets = [0, 5], sizes = [32, 128], strides = [1, 1]} : vector<32x256xbf16> to vector<32x128xbf16>
    %11 = vector.extract_strided_slice %4 {offsets = [0, 6], sizes = [32, 128], strides = [1, 1]} : vector<32x256xbf16> to vector<32x128xbf16>
    %12 = tpu.concatenate %5, %6, %7, %8, %9, %10, %11 in 0 : vector<32x128xbf16>, vector<32x128xbf16>, vector<32x128xbf16>, vector<32x128xbf16>, vector<32x128xbf16>, vector<32x128xbf16>, vector<32x128xbf16> -> vector<224x128xbf16>
    %c0_5 = arith.constant 0 : index
    %c0_6 = arith.constant 0 : index
    %13 = vector.load %arg4[%c0_5, %c0_6] : memref<32x224xbf16, #tpu.memory_space<vmem>>, vector<32x224xbf16>
    %cst = arith.constant dense<0.000000e+00> : vector<32x128xf32>
    %14 = tpu.matmul %13, %12, %cst {dimension_numbers = #tpu.dot_dimension_numbers<[1], [0], [0], [1], [0, 0, 1, 1], [], []>} : vector<32x224xbf16>, vector<224x128xbf16>, vector<32x128xf32> -> vector<32x128xf32>
    %c0_7 = arith.constant 0 : index
    %c0_8 = arith.constant 0 : index
    %15 = vector.load %arg5[%c0_7, %c0_8] : memref<32x1xf32, #tpu.memory_space<vmem>>, vector<32x1xf32>
    %16 = vector.broadcast %15 : vector<32x1xf32> to vector<32x128xf32>
    %17 = arith.addf %14, %16 : vector<32x128xf32>
    %cst_9 = arith.constant 0.000000e+00 : f32
    %18 = vector.broadcast %cst_9 : f32 to vector<32x128xf32>
    %19 = arith.cmpf ogt, %17, %18 : vector<32x128xf32>
    %cst_10 = arith.constant 0.000000e+00 : f32
    %20 = vector.broadcast %cst_10 : f32 to vector<32x128xf32>
    %21 = arith.minimumf %17, %20 : vector<32x128xf32>
    %22 = math.exp %21 : vector<32x128xf32>
    %cst_11 = arith.constant 1.000000e+00 : f32
    %23 = vector.broadcast %cst_11 : f32 to vector<32x128xf32>
    %24 = arith.subf %22, %23 : vector<32x128xf32>
    %25 = arith.select %19, %17, %24 : vector<32x128xi1>, vector<32x128xf32>
    %c0_12 = arith.constant 0 : index
    %c0_13 = arith.constant 0 : index
    %26 = vector.load %arg6[%c0_12, %c0_13] : memref<32x32xbf16, #tpu.memory_space<vmem>>, vector<32x32xbf16>
    %27 = arith.truncf %25 : vector<32x128xf32> to vector<32x128xbf16>
    %cst_14 = arith.constant dense<0.000000e+00> : vector<32x128xf32>
    %28 = tpu.matmul %26, %27, %cst_14 {dimension_numbers = #tpu.dot_dimension_numbers<[1], [0], [0], [1], [0, 0, 1, 1], [], []>} : vector<32x32xbf16>, vector<32x128xbf16>, vector<32x128xf32> -> vector<32x128xf32>
    %c0_15 = arith.constant 0 : index
    %c0_16 = arith.constant 0 : index
    %29 = vector.load %arg7[%c0_15, %c0_16] : memref<32x1xf32, #tpu.memory_space<vmem>>, vector<32x1xf32>
    %30 = vector.broadcast %29 : vector<32x1xf32> to vector<32x128xf32>
    %31 = arith.addf %28, %30 : vector<32x128xf32>
    %32 = vector.extract_strided_slice %4 {offsets = [0, 6], sizes = [32, 128], strides = [1, 1]} : vector<32x256xbf16> to vector<32x128xbf16>
    %33 = arith.extf %32 : vector<32x128xbf16> to vector<32x128xf32>
    %34 = arith.addf %33, %31 : vector<32x128xf32>
    %cst_17 = arith.constant 0.000000e+00 : f32
    %35 = vector.broadcast %cst_17 : f32 to vector<32x128xf32>
    %36 = arith.cmpf ogt, %34, %35 : vector<32x128xf32>
    %cst_18 = arith.constant 0.000000e+00 : f32
    %37 = vector.broadcast %cst_18 : f32 to vector<32x128xf32>
    %38 = arith.minimumf %34, %37 : vector<32x128xf32>
    %39 = math.exp %38 : vector<32x128xf32>
    %cst_19 = arith.constant 1.000000e+00 : f32
    %40 = vector.broadcast %cst_19 : f32 to vector<32x128xf32>
    %41 = arith.subf %39, %40 : vector<32x128xf32>
    %42 = arith.select %36, %34, %41 : vector<32x128xi1>, vector<32x128xf32>
    %43 = arith.truncf %42 : vector<32x128xf32> to vector<32x128xbf16>
    %c0_20 = arith.constant 0 : index
    %c0_21 = arith.constant 0 : index
    %c0_22 = arith.constant 0 : index
    %44 = vector.load %arg8[%c0_20, %c0_21, %c0_22] : memref<1x32x128xbf16, #tpu.memory_space<vmem>>, vector<1x32x128xbf16>
    %45 = vector.shape_cast %44 : vector<1x32x128xbf16> to vector<32x128xbf16>
    %46 = vector.shape_cast %43 : vector<32x128xbf16> to vector<1x32x128xbf16>
    tpu.vector_store %arg8[%c0_20, %c0_21, %c0_22], %46 {strides = array<i32>} : memref<1x32x128xbf16, #tpu.memory_space<vmem>>, vector<1x32x128xbf16>,
    return
  }
  func.func @transform_0(%arg0: i32, %arg1: i32) -> (i32, i32, i32) {
    %c0_i32 = arith.constant 0 : i32
    %c0_i32_0 = arith.constant 0 : i32
    return %arg0, %c0_i32, %arg1 : i32, i32, i32
  }
  func.func @transform_1(%arg0: i32, %arg1: i32) -> (i32, i32, i32) {
    %c1_i32 = arith.constant 1 : i32
    %0 = arith.addi %arg1, %c1_i32 : i32
    %c0_i32 = arith.constant 0 : i32
    %c0_i32_0 = arith.constant 0 : i32
    return %arg0, %c0_i32, %0 : i32, i32, i32
  }
  func.func @transform_2(%arg0: i32, %arg1: i32) -> (i32, i32) {
    %c0_i32 = arith.constant 0 : i32
    %c0_i32_0 = arith.constant 0 : i32
    %c0_i32_1 = arith.constant 0 : i32
    return %c0_i32, %c0_i32_0 : i32, i32
  }
  func.func @transform_3(%arg0: i32, %arg1: i32) -> (i32, i32) {
    %c0_i32 = arith.constant 0 : i32
    %c0_i32_0 = arith.constant 0 : i32
    %c0_i32_1 = arith.constant 0 : i32
    return %c0_i32, %c0_i32_0 : i32, i32
  }
  func.func @transform_4(%arg0: i32, %arg1: i32) -> (i32, i32) {
    %c0_i32 = arith.constant 0 : i32
    %c0_i32_0 = arith.constant 0 : i32
    %c0_i32_1 = arith.constant 0 : i32
    return %c0_i32, %c0_i32_0 : i32, i32
  }
  func.func @transform_5(%arg0: i32, %arg1: i32) -> (i32, i32) {
    %c0_i32 = arith.constant 0 : i32
    %c0_i32_0 = arith.constant 0 : i32
    %c0_i32_1 = arith.constant 0 : i32
    return %c0_i32, %c0_i32_0 : i32, i32
  }
  func.func @transform_6(%arg0: i32, %arg1: i32) -> (i32, i32, i32) {
    %c0_i32 = arith.constant 0 : i32
    %c0_i32_0 = arith.constant 0 : i32
    return %arg0, %c0_i32, %arg1 : i32, i32, i32
  }
}

module attributes {stable_mosaic.version = 11 : i64} {
  func.func @_residual_unit_kernel(%arg0: i32, %arg1: i32, %arg2: memref<1x32x128xbf16, #tpu.memory_space<vmem>>, %arg3: memref<1x32x128xbf16, #tpu.memory_space<vmem>>, %arg4: memref<32x224xbf16, #tpu.memory_space<vmem>>, %arg5: memref<32x1xf32, #tpu.memory_space<vmem>>, %arg6: memref<32x32xbf16, #tpu.memory_space<vmem>>, %arg7: memref<32x1xf32, #tpu.memory_space<vmem>>, %arg8: memref<1x32x128xbf16, #tpu.memory_space<vmem>>) attributes {dimension_semantics = [#tpu.dimension_semantics<parallel>, #tpu.dimension_semantics<arbitrary>], iteration_bounds = array<i64: 2, 4>, scalar_prefetch = 0 : i64, scratch_operands = 0 : i64, tpu.core_type = #tpu.core_type<tc>, window_params = [{transform_indices = @transform_0, window_bounds = array<i64: 1, 32, 128>}, {transform_indices = @transform_1, window_bounds = array<i64: 1, 32, 128>}, {pipeline_mode = #tpu.pipeline_mode<synchronous>, transform_indices = @transform_2, window_bounds = array<i64: 32, 224>}, {pipeline_mode = #tpu.pipeline_mode<synchronous>, transform_indices = @transform_3, window_bounds = array<i64: 32, 1>}, {pipeline_mode = #tpu.pipeline_mode<synchronous>, transform_indices = @transform_4, window_bounds = array<i64: 32, 32>}, {pipeline_mode = #tpu.pipeline_mode<synchronous>, transform_indices = @transform_5, window_bounds = array<i64: 32, 1>}, {transform_indices = @transform_6, window_bounds = array<i64: 1, 32, 128>}]} {
    %c0 = arith.constant 0 : index
    %c0_0 = arith.constant 0 : index
    %c0_1 = arith.constant 0 : index
    %0 = vector.load %arg2[%c0, %c0_0, %c0_1] : memref<1x32x128xbf16, #tpu.memory_space<vmem>>, vector<1x32x128xbf16>
    %1 = vector.shape_cast %0 : vector<1x32x128xbf16> to vector<32x128xbf16>
    %c0_2 = arith.constant 0 : index
    %c0_3 = arith.constant 0 : index
    %c0_4 = arith.constant 0 : index
    %2 = vector.load %arg3[%c0_2, %c0_3, %c0_4] : memref<1x32x128xbf16, #tpu.memory_space<vmem>>, vector<1x32x128xbf16>
    %3 = vector.shape_cast %2 : vector<1x32x128xbf16> to vector<32x128xbf16>
    %4 = tpu.concatenate %1, %3 in 1 : vector<32x128xbf16>, vector<32x128xbf16> -> vector<32x256xbf16>
    %5 = vector.extract_strided_slice %4 {offsets = [0, 0], sizes = [32, 128], strides = [1, 1]} : vector<32x256xbf16> to vector<32x128xbf16>
    %6 = vector.extract_strided_slice %4 {offsets = [0, 3], sizes = [32, 128], strides = [1, 1]} : vector<32x256xbf16> to vector<32x128xbf16>
    %7 = vector.extract_strided_slice %4 {offsets = [0, 6], sizes = [32, 128], strides = [1, 1]} : vector<32x256xbf16> to vector<32x128xbf16>
    %8 = vector.extract_strided_slice %4 {offsets = [0, 9], sizes = [32, 128], strides = [1, 1]} : vector<32x256xbf16> to vector<32x128xbf16>
    %9 = vector.extract_strided_slice %4 {offsets = [0, 12], sizes = [32, 128], strides = [1, 1]} : vector<32x256xbf16> to vector<32x128xbf16>
    %10 = vector.extract_strided_slice %4 {offsets = [0, 15], sizes = [32, 128], strides = [1, 1]} : vector<32x256xbf16> to vector<32x128xbf16>
    %11 = vector.extract_strided_slice %4 {offsets = [0, 18], sizes = [32, 128], strides = [1, 1]} : vector<32x256xbf16> to vector<32x128xbf16>
    %12 = tpu.concatenate %5, %6, %7, %8, %9, %10, %11 in 0 : vector<32x128xbf16>, vector<32x128xbf16>, vector<32x128xbf16>, vector<32x128xbf16>, vector<32x128xbf16>, vector<32x128xbf16>, vector<32x128xbf16> -> vector<224x128xbf16>
    %c0_5 = arith.constant 0 : index
    %c0_6 = arith.constant 0 : index
    %13 = vector.load %arg4[%c0_5, %c0_6] : memref<32x224xbf16, #tpu.memory_space<vmem>>, vector<32x224xbf16>
    %cst = arith.constant dense<0.000000e+00> : vector<32x128xf32>
    %14 = tpu.matmul %13, %12, %cst {dimension_numbers = #tpu.dot_dimension_numbers<[1], [0], [0], [1], [0, 0, 1, 1], [], []>} : vector<32x224xbf16>, vector<224x128xbf16>, vector<32x128xf32> -> vector<32x128xf32>
    %c0_7 = arith.constant 0 : index
    %c0_8 = arith.constant 0 : index
    %15 = vector.load %arg5[%c0_7, %c0_8] : memref<32x1xf32, #tpu.memory_space<vmem>>, vector<32x1xf32>
    %16 = vector.broadcast %15 : vector<32x1xf32> to vector<32x128xf32>
    %17 = arith.addf %14, %16 : vector<32x128xf32>
    %cst_9 = arith.constant 0.000000e+00 : f32
    %18 = vector.broadcast %cst_9 : f32 to vector<32x128xf32>
    %19 = arith.cmpf ogt, %17, %18 : vector<32x128xf32>
    %cst_10 = arith.constant 0.000000e+00 : f32
    %20 = vector.broadcast %cst_10 : f32 to vector<32x128xf32>
    %21 = arith.minimumf %17, %20 : vector<32x128xf32>
    %22 = math.exp %21 : vector<32x128xf32>
    %cst_11 = arith.constant 1.000000e+00 : f32
    %23 = vector.broadcast %cst_11 : f32 to vector<32x128xf32>
    %24 = arith.subf %22, %23 : vector<32x128xf32>
    %25 = arith.select %19, %17, %24 : vector<32x128xi1>, vector<32x128xf32>
    %c0_12 = arith.constant 0 : index
    %c0_13 = arith.constant 0 : index
    %26 = vector.load %arg6[%c0_12, %c0_13] : memref<32x32xbf16, #tpu.memory_space<vmem>>, vector<32x32xbf16>
    %27 = arith.truncf %25 : vector<32x128xf32> to vector<32x128xbf16>
    %cst_14 = arith.constant dense<0.000000e+00> : vector<32x128xf32>
    %28 = tpu.matmul %26, %27, %cst_14 {dimension_numbers = #tpu.dot_dimension_numbers<[1], [0], [0], [1], [0, 0, 1, 1], [], []>} : vector<32x32xbf16>, vector<32x128xbf16>, vector<32x128xf32> -> vector<32x128xf32>
    %c0_15 = arith.constant 0 : index
    %c0_16 = arith.constant 0 : index
    %29 = vector.load %arg7[%c0_15, %c0_16] : memref<32x1xf32, #tpu.memory_space<vmem>>, vector<32x1xf32>
    %30 = vector.broadcast %29 : vector<32x1xf32> to vector<32x128xf32>
    %31 = arith.addf %28, %30 : vector<32x128xf32>
    %32 = vector.extract_strided_slice %4 {offsets = [0, 18], sizes = [32, 128], strides = [1, 1]} : vector<32x256xbf16> to vector<32x128xbf16>
    %33 = arith.extf %32 : vector<32x128xbf16> to vector<32x128xf32>
    %34 = arith.addf %33, %31 : vector<32x128xf32>
    %cst_17 = arith.constant 0.000000e+00 : f32
    %35 = vector.broadcast %cst_17 : f32 to vector<32x128xf32>
    %36 = arith.cmpf ogt, %34, %35 : vector<32x128xf32>
    %cst_18 = arith.constant 0.000000e+00 : f32
    %37 = vector.broadcast %cst_18 : f32 to vector<32x128xf32>
    %38 = arith.minimumf %34, %37 : vector<32x128xf32>
    %39 = math.exp %38 : vector<32x128xf32>
    %cst_19 = arith.constant 1.000000e+00 : f32
    %40 = vector.broadcast %cst_19 : f32 to vector<32x128xf32>
    %41 = arith.subf %39, %40 : vector<32x128xf32>
    %42 = arith.select %36, %34, %41 : vector<32x128xi1>, vector<32x128xf32>
    %43 = arith.truncf %42 : vector<32x128xf32> to vector<32x128xbf16>
    %c0_20 = arith.constant 0 : index
    %c0_21 = arith.constant 0 : index
    %c0_22 = arith.constant 0 : index
    %44 = vector.load %arg8[%c0_20, %c0_21, %c0_22] : memref<1x32x128xbf16, #tpu.memory_space<vmem>>, vector<1x32x128xbf16>
    %45 = vector.shape_cast %44 : vector<1x32x128xbf16> to vector<32x128xbf16>
    %46 = vector.shape_cast %43 : vector<32x128xbf16> to vector<1x32x128xbf16>
    tpu.vector_store %arg8[%c0_20, %c0_21, %c0_22], %46 {strides = array<i32>} : memref<1x32x128xbf16, #tpu.memory_space<vmem>>, vector<1x32x128xbf16>,
    return
  }
  func.func @transform_0(%arg0: i32, %arg1: i32) -> (i32, i32, i32) {
    %c0_i32 = arith.constant 0 : i32
    %c0_i32_0 = arith.constant 0 : i32
    return %arg0, %c0_i32, %arg1 : i32, i32, i32
  }
  func.func @transform_1(%arg0: i32, %arg1: i32) -> (i32, i32, i32) {
    %c1_i32 = arith.constant 1 : i32
    %0 = arith.addi %arg1, %c1_i32 : i32
    %c0_i32 = arith.constant 0 : i32
    %c0_i32_0 = arith.constant 0 : i32
    return %arg0, %c0_i32, %0 : i32, i32, i32
  }
  func.func @transform_2(%arg0: i32, %arg1: i32) -> (i32, i32) {
    %c0_i32 = arith.constant 0 : i32
    %c0_i32_0 = arith.constant 0 : i32
    %c0_i32_1 = arith.constant 0 : i32
    return %c0_i32, %c0_i32_0 : i32, i32
  }
  func.func @transform_3(%arg0: i32, %arg1: i32) -> (i32, i32) {
    %c0_i32 = arith.constant 0 : i32
    %c0_i32_0 = arith.constant 0 : i32
    %c0_i32_1 = arith.constant 0 : i32
    return %c0_i32, %c0_i32_0 : i32, i32
  }
  func.func @transform_4(%arg0: i32, %arg1: i32) -> (i32, i32) {
    %c0_i32 = arith.constant 0 : i32
    %c0_i32_0 = arith.constant 0 : i32
    %c0_i32_1 = arith.constant 0 : i32
    return %c0_i32, %c0_i32_0 : i32, i32
  }
  func.func @transform_5(%arg0: i32, %arg1: i32) -> (i32, i32) {
    %c0_i32 = arith.constant 0 : i32
    %c0_i32_0 = arith.constant 0 : i32
    %c0_i32_1 = arith.constant 0 : i32
    return %c0_i32, %c0_i32_0 : i32, i32
  }
  func.func @transform_6(%arg0: i32, %arg1: i32) -> (i32, i32, i32) {
    %c0_i32 = arith.constant 0 : i32
    %c0_i32_0 = arith.constant 0 : i32
    return %arg0, %c0_i32, %arg1 : i32, i32, i32
  }
}

module attributes {stable_mosaic.version = 11 : i64} {
  func.func @_residual_unit_kernel(%arg0: i32, %arg1: i32, %arg2: memref<1x32x128xbf16, #tpu.memory_space<vmem>>, %arg3: memref<1x32x128xbf16, #tpu.memory_space<vmem>>, %arg4: memref<32x224xbf16, #tpu.memory_space<vmem>>, %arg5: memref<32x1xf32, #tpu.memory_space<vmem>>, %arg6: memref<32x32xbf16, #tpu.memory_space<vmem>>, %arg7: memref<32x1xf32, #tpu.memory_space<vmem>>, %arg8: memref<1x32x128xbf16, #tpu.memory_space<vmem>>) attributes {dimension_semantics = [#tpu.dimension_semantics<parallel>, #tpu.dimension_semantics<arbitrary>], iteration_bounds = array<i64: 2, 4>, scalar_prefetch = 0 : i64, scratch_operands = 0 : i64, tpu.core_type = #tpu.core_type<tc>, window_params = [{transform_indices = @transform_0, window_bounds = array<i64: 1, 32, 128>}, {transform_indices = @transform_1, window_bounds = array<i64: 1, 32, 128>}, {pipeline_mode = #tpu.pipeline_mode<synchronous>, transform_indices = @transform_2, window_bounds = array<i64: 32, 224>}, {pipeline_mode = #tpu.pipeline_mode<synchronous>, transform_indices = @transform_3, window_bounds = array<i64: 32, 1>}, {pipeline_mode = #tpu.pipeline_mode<synchronous>, transform_indices = @transform_4, window_bounds = array<i64: 32, 32>}, {pipeline_mode = #tpu.pipeline_mode<synchronous>, transform_indices = @transform_5, window_bounds = array<i64: 32, 1>}, {transform_indices = @transform_6, window_bounds = array<i64: 1, 32, 128>}]} {
    %c0 = arith.constant 0 : index
    %c0_0 = arith.constant 0 : index
    %c0_1 = arith.constant 0 : index
    %0 = vector.load %arg2[%c0, %c0_0, %c0_1] : memref<1x32x128xbf16, #tpu.memory_space<vmem>>, vector<1x32x128xbf16>
    %1 = vector.shape_cast %0 : vector<1x32x128xbf16> to vector<32x128xbf16>
    %c0_2 = arith.constant 0 : index
    %c0_3 = arith.constant 0 : index
    %c0_4 = arith.constant 0 : index
    %2 = vector.load %arg3[%c0_2, %c0_3, %c0_4] : memref<1x32x128xbf16, #tpu.memory_space<vmem>>, vector<1x32x128xbf16>
    %3 = vector.shape_cast %2 : vector<1x32x128xbf16> to vector<32x128xbf16>
    %4 = tpu.concatenate %1, %3 in 1 : vector<32x128xbf16>, vector<32x128xbf16> -> vector<32x256xbf16>
    %5 = vector.extract_strided_slice %4 {offsets = [0, 0], sizes = [32, 128], strides = [1, 1]} : vector<32x256xbf16> to vector<32x128xbf16>
    %6 = vector.extract_strided_slice %4 {offsets = [0, 9], sizes = [32, 128], strides = [1, 1]} : vector<32x256xbf16> to vector<32x128xbf16>
    %7 = vector.extract_strided_slice %4 {offsets = [0, 18], sizes = [32, 128], strides = [1, 1]} : vector<32x256xbf16> to vector<32x128xbf16>
    %8 = vector.extract_strided_slice %4 {offsets = [0, 27], sizes = [32, 128], strides = [1, 1]} : vector<32x256xbf16> to vector<32x128xbf16>
    %9 = vector.extract_strided_slice %4 {offsets = [0, 36], sizes = [32, 128], strides = [1, 1]} : vector<32x256xbf16> to vector<32x128xbf16>
    %10 = vector.extract_strided_slice %4 {offsets = [0, 45], sizes = [32, 128], strides = [1, 1]} : vector<32x256xbf16> to vector<32x128xbf16>
    %11 = vector.extract_strided_slice %4 {offsets = [0, 54], sizes = [32, 128], strides = [1, 1]} : vector<32x256xbf16> to vector<32x128xbf16>
    %12 = tpu.concatenate %5, %6, %7, %8, %9, %10, %11 in 0 : vector<32x128xbf16>, vector<32x128xbf16>, vector<32x128xbf16>, vector<32x128xbf16>, vector<32x128xbf16>, vector<32x128xbf16>, vector<32x128xbf16> -> vector<224x128xbf16>
    %c0_5 = arith.constant 0 : index
    %c0_6 = arith.constant 0 : index
    %13 = vector.load %arg4[%c0_5, %c0_6] : memref<32x224xbf16, #tpu.memory_space<vmem>>, vector<32x224xbf16>
    %cst = arith.constant dense<0.000000e+00> : vector<32x128xf32>
    %14 = tpu.matmul %13, %12, %cst {dimension_numbers = #tpu.dot_dimension_numbers<[1], [0], [0], [1], [0, 0, 1, 1], [], []>} : vector<32x224xbf16>, vector<224x128xbf16>, vector<32x128xf32> -> vector<32x128xf32>
    %c0_7 = arith.constant 0 : index
    %c0_8 = arith.constant 0 : index
    %15 = vector.load %arg5[%c0_7, %c0_8] : memref<32x1xf32, #tpu.memory_space<vmem>>, vector<32x1xf32>
    %16 = vector.broadcast %15 : vector<32x1xf32> to vector<32x128xf32>
    %17 = arith.addf %14, %16 : vector<32x128xf32>
    %cst_9 = arith.constant 0.000000e+00 : f32
    %18 = vector.broadcast %cst_9 : f32 to vector<32x128xf32>
    %19 = arith.cmpf ogt, %17, %18 : vector<32x128xf32>
    %cst_10 = arith.constant 0.000000e+00 : f32
    %20 = vector.broadcast %cst_10 : f32 to vector<32x128xf32>
    %21 = arith.minimumf %17, %20 : vector<32x128xf32>
    %22 = math.exp %21 : vector<32x128xf32>
    %cst_11 = arith.constant 1.000000e+00 : f32
    %23 = vector.broadcast %cst_11 : f32 to vector<32x128xf32>
    %24 = arith.subf %22, %23 : vector<32x128xf32>
    %25 = arith.select %19, %17, %24 : vector<32x128xi1>, vector<32x128xf32>
    %c0_12 = arith.constant 0 : index
    %c0_13 = arith.constant 0 : index
    %26 = vector.load %arg6[%c0_12, %c0_13] : memref<32x32xbf16, #tpu.memory_space<vmem>>, vector<32x32xbf16>
    %27 = arith.truncf %25 : vector<32x128xf32> to vector<32x128xbf16>
    %cst_14 = arith.constant dense<0.000000e+00> : vector<32x128xf32>
    %28 = tpu.matmul %26, %27, %cst_14 {dimension_numbers = #tpu.dot_dimension_numbers<[1], [0], [0], [1], [0, 0, 1, 1], [], []>} : vector<32x32xbf16>, vector<32x128xbf16>, vector<32x128xf32> -> vector<32x128xf32>
    %c0_15 = arith.constant 0 : index
    %c0_16 = arith.constant 0 : index
    %29 = vector.load %arg7[%c0_15, %c0_16] : memref<32x1xf32, #tpu.memory_space<vmem>>, vector<32x1xf32>
    %30 = vector.broadcast %29 : vector<32x1xf32> to vector<32x128xf32>
    %31 = arith.addf %28, %30 : vector<32x128xf32>
    %32 = vector.extract_strided_slice %4 {offsets = [0, 54], sizes = [32, 128], strides = [1, 1]} : vector<32x256xbf16> to vector<32x128xbf16>
    %33 = arith.extf %32 : vector<32x128xbf16> to vector<32x128xf32>
    %34 = arith.addf %33, %31 : vector<32x128xf32>
    %cst_17 = arith.constant 0.000000e+00 : f32
    %35 = vector.broadcast %cst_17 : f32 to vector<32x128xf32>
    %36 = arith.cmpf ogt, %34, %35 : vector<32x128xf32>
    %cst_18 = arith.constant 0.000000e+00 : f32
    %37 = vector.broadcast %cst_18 : f32 to vector<32x128xf32>
    %38 = arith.minimumf %34, %37 : vector<32x128xf32>
    %39 = math.exp %38 : vector<32x128xf32>
    %cst_19 = arith.constant 1.000000e+00 : f32
    %40 = vector.broadcast %cst_19 : f32 to vector<32x128xf32>
    %41 = arith.subf %39, %40 : vector<32x128xf32>
    %42 = arith.select %36, %34, %41 : vector<32x128xi1>, vector<32x128xf32>
    %43 = arith.truncf %42 : vector<32x128xf32> to vector<32x128xbf16>
    %c0_20 = arith.constant 0 : index
    %c0_21 = arith.constant 0 : index
    %c0_22 = arith.constant 0 : index
    %44 = vector.load %arg8[%c0_20, %c0_21, %c0_22] : memref<1x32x128xbf16, #tpu.memory_space<vmem>>, vector<1x32x128xbf16>
    %45 = vector.shape_cast %44 : vector<1x32x128xbf16> to vector<32x128xbf16>
    %46 = vector.shape_cast %43 : vector<32x128xbf16> to vector<1x32x128xbf16>
    tpu.vector_store %arg8[%c0_20, %c0_21, %c0_22], %46 {strides = array<i32>} : memref<1x32x128xbf16, #tpu.memory_space<vmem>>, vector<1x32x128xbf16>,
    return
  }
  func.func @transform_0(%arg0: i32, %arg1: i32) -> (i32, i32, i32) {
    %c0_i32 = arith.constant 0 : i32
    %c0_i32_0 = arith.constant 0 : i32
    return %arg0, %c0_i32, %arg1 : i32, i32, i32
  }
  func.func @transform_1(%arg0: i32, %arg1: i32) -> (i32, i32, i32) {
    %c1_i32 = arith.constant 1 : i32
    %0 = arith.addi %arg1, %c1_i32 : i32
    %c0_i32 = arith.constant 0 : i32
    %c0_i32_0 = arith.constant 0 : i32
    return %arg0, %c0_i32, %0 : i32, i32, i32
  }
  func.func @transform_2(%arg0: i32, %arg1: i32) -> (i32, i32) {
    %c0_i32 = arith.constant 0 : i32
    %c0_i32_0 = arith.constant 0 : i32
    %c0_i32_1 = arith.constant 0 : i32
    return %c0_i32, %c0_i32_0 : i32, i32
  }
  func.func @transform_3(%arg0: i32, %arg1: i32) -> (i32, i32) {
    %c0_i32 = arith.constant 0 : i32
    %c0_i32_0 = arith.constant 0 : i32
    %c0_i32_1 = arith.constant 0 : i32
    return %c0_i32, %c0_i32_0 : i32, i32
  }
  func.func @transform_4(%arg0: i32, %arg1: i32) -> (i32, i32) {
    %c0_i32 = arith.constant 0 : i32
    %c0_i32_0 = arith.constant 0 : i32
    %c0_i32_1 = arith.constant 0 : i32
    return %c0_i32, %c0_i32_0 : i32, i32
  }
  func.func @transform_5(%arg0: i32, %arg1: i32) -> (i32, i32) {
    %c0_i32 = arith.constant 0 : i32
    %c0_i32_0 = arith.constant 0 : i32
    %c0_i32_1 = arith.constant 0 : i32
    return %c0_i32, %c0_i32_0 : i32, i32
  }
  func.func @transform_6(%arg0: i32, %arg1: i32) -> (i32, i32, i32) {
    %c0_i32 = arith.constant 0 : i32
    %c0_i32_0 = arith.constant 0 : i32
    return %arg0, %c0_i32, %arg1 : i32, i32, i32
  }
}

module attributes {stable_mosaic.version = 11 : i64} {
  func.func @_downsample_conv_kernel(%arg0: i32, %arg1: i32, %arg2: memref<1x64x128xbf16, #tpu.memory_space<vmem>>, %arg3: memref<1x64x128xbf16, #tpu.memory_space<vmem>>, %arg4: memref<64x128xbf16, #tpu.memory_space<vmem>>, %arg5: memref<64x1xf32, #tpu.memory_space<vmem>>, %arg6: memref<1x64x128xf32, #tpu.memory_space<vmem>>) attributes {dimension_semantics = [#tpu.dimension_semantics<parallel>, #tpu.dimension_semantics<arbitrary>], iteration_bounds = array<i64: 2, 2>, scalar_prefetch = 0 : i64, scratch_operands = 0 : i64, tpu.core_type = #tpu.core_type<tc>, window_params = [{transform_indices = @transform_0, window_bounds = array<i64: 1, 64, 128>}, {transform_indices = @transform_1, window_bounds = array<i64: 1, 64, 128>}, {pipeline_mode = #tpu.pipeline_mode<synchronous>, transform_indices = @transform_2, window_bounds = array<i64: 64, 128>}, {pipeline_mode = #tpu.pipeline_mode<synchronous>, transform_indices = @transform_3, window_bounds = array<i64: 64, 1>}, {transform_indices = @transform_4, window_bounds = array<i64: 1, 64, 128>}]} {
    %c0 = arith.constant 0 : index
    %c0_0 = arith.constant 0 : index
    %c0_1 = arith.constant 0 : index
    %0 = vector.load %arg2[%c0, %c0_0, %c0_1] : memref<1x64x128xbf16, #tpu.memory_space<vmem>>, vector<1x64x128xbf16>
    %1 = vector.shape_cast %0 : vector<1x64x128xbf16> to vector<64x128xbf16>
    %c0_2 = arith.constant 0 : index
    %c0_3 = arith.constant 0 : index
    %c0_4 = arith.constant 0 : index
    %2 = vector.load %arg3[%c0_2, %c0_3, %c0_4] : memref<1x64x128xbf16, #tpu.memory_space<vmem>>, vector<1x64x128xbf16>
    %3 = vector.shape_cast %2 : vector<1x64x128xbf16> to vector<64x128xbf16>
    %4 = tpu.concatenate %1, %3 in 1 : vector<64x128xbf16>, vector<64x128xbf16> -> vector<64x256xbf16>
    %5 = vector.extract_strided_slice %4 {offsets = [0, 0], sizes = [32, 128], strides = [1, 1]} : vector<64x256xbf16> to vector<32x128xbf16>
    %6 = vector.extract_strided_slice %4 {offsets = [32, 0], sizes = [32, 128], strides = [1, 1]} : vector<64x256xbf16> to vector<32x128xbf16>
    %7 = vector.extract_strided_slice %4 {offsets = [0, 1], sizes = [32, 128], strides = [1, 1]} : vector<64x256xbf16> to vector<32x128xbf16>
    %8 = vector.extract_strided_slice %4 {offsets = [32, 1], sizes = [32, 128], strides = [1, 1]} : vector<64x256xbf16> to vector<32x128xbf16>
    %9 = tpu.concatenate %5, %6, %7, %8 in 0 : vector<32x128xbf16>, vector<32x128xbf16>, vector<32x128xbf16>, vector<32x128xbf16> -> vector<128x128xbf16>
    %c0_5 = arith.constant 0 : index
    %c0_6 = arith.constant 0 : index
    %10 = vector.load %arg4[%c0_5, %c0_6] : memref<64x128xbf16, #tpu.memory_space<vmem>>, vector<64x128xbf16>
    %cst = arith.constant dense<0.000000e+00> : vector<64x128xf32>
    %11 = tpu.matmul %10, %9, %cst {dimension_numbers = #tpu.dot_dimension_numbers<[1], [0], [0], [1], [0, 0, 1, 1], [], []>} : vector<64x128xbf16>, vector<128x128xbf16>, vector<64x128xf32> -> vector<64x128xf32>
    %c0_7 = arith.constant 0 : index
    %c0_8 = arith.constant 0 : index
    %12 = vector.load %arg5[%c0_7, %c0_8] : memref<64x1xf32, #tpu.memory_space<vmem>>, vector<64x1xf32>
    %13 = vector.broadcast %12 : vector<64x1xf32> to vector<64x128xf32>
    %14 = arith.addf %11, %13 : vector<64x128xf32>
    %c0_9 = arith.constant 0 : index
    %c0_10 = arith.constant 0 : index
    %c0_11 = arith.constant 0 : index
    %15 = vector.load %arg6[%c0_9, %c0_10, %c0_11] : memref<1x64x128xf32, #tpu.memory_space<vmem>>, vector<1x64x128xf32>
    %16 = vector.shape_cast %15 : vector<1x64x128xf32> to vector<64x128xf32>
    %17 = vector.shape_cast %14 : vector<64x128xf32> to vector<1x64x128xf32>
    tpu.vector_store %arg6[%c0_9, %c0_10, %c0_11], %17 {strides = array<i32>} : memref<1x64x128xf32, #tpu.memory_space<vmem>>, vector<1x64x128xf32>,
    return
  }
  func.func @transform_0(%arg0: i32, %arg1: i32) -> (i32, i32, i32) {
    %c0_i32 = arith.constant 0 : i32
    %c0_i32_0 = arith.constant 0 : i32
    return %arg0, %c0_i32, %arg1 : i32, i32, i32
  }
  func.func @transform_1(%arg0: i32, %arg1: i32) -> (i32, i32, i32) {
    %c1_i32 = arith.constant 1 : i32
    %0 = arith.addi %arg1, %c1_i32 : i32
    %c0_i32 = arith.constant 0 : i32
    %c0_i32_0 = arith.constant 0 : i32
    return %arg0, %c0_i32, %0 : i32, i32, i32
  }
  func.func @transform_2(%arg0: i32, %arg1: i32) -> (i32, i32) {
    %c0_i32 = arith.constant 0 : i32
    %c0_i32_0 = arith.constant 0 : i32
    %c0_i32_1 = arith.constant 0 : i32
    return %c0_i32, %c0_i32_0 : i32, i32
  }
  func.func @transform_3(%arg0: i32, %arg1: i32) -> (i32, i32) {
    %c0_i32 = arith.constant 0 : i32
    %c0_i32_0 = arith.constant 0 : i32
    %c0_i32_1 = arith.constant 0 : i32
    return %c0_i32, %c0_i32_0 : i32, i32
  }
  func.func @transform_4(%arg0: i32, %arg1: i32) -> (i32, i32, i32) {
    %c0_i32 = arith.constant 0 : i32
    %c0_i32_0 = arith.constant 0 : i32
    return %arg0, %c0_i32, %arg1 : i32, i32, i32
  }
}

</mosaic_0001>

<llo_original>
// kernel: encoder_block.4
$region0: #{encoder_block.4}
  #allocation0 [shape = 'u32[]', space=smem, size = 0x4, offset = 0x4, fixed_abs, tag = 'smem constant byte address 0x4 - core index']
  #allocation1 [shape = 'u32[72,128]{1,0:T(1,128)}', space=vmem, size = 0x9000, scoped, tag = 'internal scratch']
  %s0 = inlined_call_operand.vmem [shape: bf16[2,32,640], index: 0, kind: input, shape index: {}, may-alias: {0,1}]
  %s1 = inlined_call_operand.vmem [shape: bf16[2,32,640], index: 1, kind: input, shape index: {}, may-alias: {0,1}]
  %s2 = inlined_call_operand.vmem [shape: bf16[32,224], index: 2, kind: input, shape index: {}]
  %s3 = inlined_call_operand.vmem [shape: f32[32,1], index: 3, kind: input, shape index: {}]
  %s4 = inlined_call_operand.vmem [shape: bf16[32,32], index: 4, kind: input, shape index: {}]
  %s5 = inlined_call_operand.vmem [shape: f32[32,1], index: 5, kind: input, shape index: {}]
  %s6 = inlined_call_operand.vmem [shape: bf16[2,32,512], index: 6, kind: output, shape index: {}]
  %s7 = sld [smem:[#allocation0]]
  $region176: #{encoder_block.4} parent=0
    _
  %s9 = ssub.s32 1, %s7
  %s10 = scalar_select 0, %s9, %s7
  $region1: #{encoder_block.4} parent=0
    #allocation2 [shape = 'u8[16384]{0}', space=vmem, size = 0x4000, scoped, tag = 'input window, operand 0']
    #allocation3 [shape = 'u8[16384]{0}', space=vmem, size = 0x4000, scoped, tag = 'input window, operand 1']
    #allocation4 [shape = 'u8[16384]{0}', space=vmem, size = 0x4000, scoped, tag = 'output window, operand 0']
    loop: start=0, step=1, limit=10
    $region2: #{encoder_block.4} parent=1 // loop_pre_header
      _
    $region3: #{encoder_block.4} parent=1 // loop_header
      %s12 = sphi 0, %s16
      %p13 = scmp.ge.s32.totalorder %s12, 10
      %s19 = sphi 0, %s31
      %s20 = sphi 0, %s27
      %s21 = sphi 0, %s19
      %s22 = sphi 0, %s20
      %s23 = sphi 0, %s21
      %s24 = sphi 0, %s22
      %s36 = sphi 0, %s38
      %s39 = sphi 0, %s36
      %s40 = sphi 0, %s39
      %s56 = sphi 0, %s40
      %s66 = sphi 0, %s68
      %s69 = sphi 0, %s66
      %s70 = sphi 0, %s69
      %s86 = sphi 0, %s70
      %s90 = sphi 0, %s90
      %s92 = sphi 0, %s90
      %s93 = sphi 0, %s92
      %s107 = sphi 0, %s93
      %s111 = sphi 0, %s111
      %s113 = sphi 0, %s111
      %s114 = sphi 0, %s113
      %s128 = sphi 0, %s114
      %s132 = sphi 0, %s132
      %s134 = sphi 0, %s132
      %s135 = sphi 0, %s134
      %s149 = sphi 0, %s135
      %s153 = sphi 0, %s153
      %s155 = sphi 0, %s153
      %s156 = sphi 0, %s155
      %s170 = sphi 0, %s156
      %s178 = sphi 0, %s180
      %s181 = sphi 0, %s178
      %s182 = sphi 0, %s181
      %s198 = sphi 0, %s182
    $region4: #{encoder_block.4} parent=1 // loop_header_branch
      %15 = sbr.rel (%p13) target = $region8
    $region5: #{encoder_block.4} parent=1 // loop_body
      %s17 = ssub.s32 %s12, 1
      %s18 = ssub.s32 %s12, 2
      %s25 = sadd.s32 1, %s20
      %p26 = scmp.ge.s32.totalorder %s25, 4
      %s27 = scalar_select %p26, 0, %s25
      %s28 = sadd.s32 1, %s19
      %s29 = scalar_select %p26, %s28, %s19
      %p30 = scmp.ge.s32.totalorder %s29, 2
      %s31 = scalar_select %p30, 0, %s29
      %s32 = ssub.s32 %s19, %s31
      %s33 = ssub.s32 %s20, %s27
      %s34 = sor.u32 %s32, %s33
      %p35 = scmp.eq.s32.totalorder %s34, 0
      %s37 = sadd.s32 %s36, 1
      %s38 = scalar_select %p35, %s36, %s37
      %p41 = pneg %p35
      %p42 = scmp.eq.s32.totalorder %s12, 7
      %p43 = por %p41, %p42
      %p44 = scmp.ne.s32.totalorder %s36, %s39
      %p45 = scmp.eq.s32.totalorder %s12, 0
      %p46 = por %p44, %p45
      %p47 = scmp.ne.s32.totalorder %s36, %s39
      %p48 = scmp.eq.s32.totalorder %s17, 7
      %p49 = por %p47, %p48
      %p50 = scmp.ne.s32.totalorder %s39, %s40
      %p51 = scmp.eq.s32.totalorder %s17, 0
      %p52 = por %p50, %p51
      %p53 = scmp.ne.s32.totalorder %s39, %s40
      %p54 = scmp.eq.s32.totalorder %s18, 7
      %p55 = por %p53, %p54
      %p57 = scmp.ne.s32.totalorder %s40, %s56
      %p58 = scmp.eq.s32.totalorder %s18, 0
      %p59 = por %p57, %p58
      %s60 = sadd.s32 %s20, 1
      %s61 = sadd.s32 %s27, 1
      %s62 = ssub.s32 %s19, %s31
      %s63 = ssub.s32 %s60, %s61
      %s64 = sor.u32 %s62, %s63
      %p65 = scmp.eq.s32.totalorder %s64, 0
      %s67 = sadd.s32 %s66, 1
      %s68 = scalar_select %p65, %s66, %s67
      %p71 = pneg %p65
      %p72 = scmp.eq.s32.totalorder %s12, 7
      %p73 = por %p71, %p72
      %p74 = scmp.ne.s32.totalorder %s66, %s69
      %p75 = scmp.eq.s32.totalorder %s12, 0
      %p76 = por %p74, %p75
      %p77 = scmp.ne.s32.totalorder %s66, %s69
      %p78 = scmp.eq.s32.totalorder %s17, 7
      %p79 = por %p77, %p78
      %p80 = scmp.ne.s32.totalorder %s69, %s70
      %p81 = scmp.eq.s32.totalorder %s17, 0
      %p82 = por %p80, %p81
      %p83 = scmp.ne.s32.totalorder %s69, %s70
      %p84 = scmp.eq.s32.totalorder %s18, 7
      %p85 = por %p83, %p84
      %p87 = scmp.ne.s32.totalorder %s70, %s86
      %p88 = scmp.eq.s32.totalorder %s18, 0
      %p89 = por %p87, %p88
      %s91 = sadd.s32 %s90, 1
      %p94 = scmp.eq.s32.totalorder %s12, 7
      %p95 = scmp.ne.s32.totalorder %s90, %s92
      %p96 = scmp.eq.s32.totalorder %s12, 0
      %p97 = por %p95, %p96
      %p98 = scmp.ne.s32.totalorder %s90, %s92
      %p99 = scmp.eq.s32.totalorder %s17, 7
      %p100 = por %p98, %p99
      %p101 = scmp.ne.s32.totalorder %s92, %s93
      %p102 = scmp.eq.s32.totalorder %s17, 0
      %p103 = por %p101, %p102
      %p104 = scmp.ne.s32.totalorder %s92, %s93
      %p105 = scmp.eq.s32.totalorder %s18, 7
      %p106 = por %p104, %p105
      %p108 = scmp.ne.s32.totalorder %s93, %s107
      %p109 = scmp.eq.s32.totalorder %s18, 0
      %p110 = por %p108, %p109
      %s112 = sadd.s32 %s111, 1
      %p115 = scmp.eq.s32.totalorder %s12, 7
      %p116 = scmp.ne.s32.totalorder %s111, %s113
      %p117 = scmp.eq.s32.totalorder %s12, 0
      %p118 = por %p116, %p117
      %p119 = scmp.ne.s32.totalorder %s111, %s113
      %p120 = scmp.eq.s32.totalorder %s17, 7
      %p121 = por %p119, %p120
      %p122 = scmp.ne.s32.totalorder %s113, %s114
      %p123 = scmp.eq.s32.totalorder %s17, 0
      %p124 = por %p122, %p123
      %p125 = scmp.ne.s32.totalorder %s113, %s114
      %p126 = scmp.eq.s32.totalorder %s18, 7
      %p127 = por %p125, %p126
      %p129 = scmp.ne.s32.totalorder %s114, %s128
      %p130 = scmp.eq.s32.totalorder %s18, 0
      %p131 = por %p129, %p130
      %s133 = sadd.s32 %s132, 1
      %p136 = scmp.eq.s32.totalorder %s12, 7
      %p137 = scmp.ne.s32.totalorder %s132, %s134
      %p138 = scmp.eq.s32.totalorder %s12, 0
      %p139 = por %p137, %p138
      %p140 = scmp.ne.s32.totalorder %s132, %s134
      %p141 = scmp.eq.s32.totalorder %s17, 7
      %p142 = por %p140, %p141
      %p143 = scmp.ne.s32.totalorder %s134, %s135
      %p144 = scmp.eq.s32.totalorder %s17, 0
      %p145 = por %p143, %p144
      %p146 = scmp.ne.s32.totalorder %s134, %s135
      %p147 = scmp.eq.s32.totalorder %s18, 7
      %p148 = por %p146, %p147
      %p150 = scmp.ne.s32.totalorder %s135, %s149
      %p151 = scmp.eq.s32.totalorder %s18, 0
      %p152 = por %p150, %p151
      %s154 = sadd.s32 %s153, 1
      %p157 = scmp.eq.s32.totalorder %s12, 7
      %p158 = scmp.ne.s32.totalorder %s153, %s155
      %p159 = scmp.eq.s32.totalorder %s12, 0
      %p160 = por %p158, %p159
      %p161 = scmp.ne.s32.totalorder %s153, %s155
      %p162 = scmp.eq.s32.totalorder %s17, 7
      %p163 = por %p161, %p162
      %p164 = scmp.ne.s32.totalorder %s155, %s156
      %p165 = scmp.eq.s32.totalorder %s17, 0
      %p166 = por %p164, %p165
      %p167 = scmp.ne.s32.totalorder %s155, %s156
      %p168 = scmp.eq.s32.totalorder %s18, 7
      %p169 = por %p167, %p168
      %p171 = scmp.ne.s32.totalorder %s156, %s170
      %p172 = scmp.eq.s32.totalorder %s18, 0
      %p173 = por %p171, %p172
      %s174 = ssub.s32 %s19, %s31
      %s175 = ssub.s32 %s20, %s27
      %s176 = sor.u32 %s174, %s175
      %p177 = scmp.eq.s32.totalorder %s176, 0
      %s179 = sadd.s32 %s178, 1
      %s180 = scalar_select %p177, %s178, %s179
      %p183 = pneg %p177
      %p184 = scmp.eq.s32.totalorder %s12, 7
      %p185 = por %p183, %p184
      %p186 = scmp.ne.s32.totalorder %s178, %s181
      %p187 = scmp.eq.s32.totalorder %s12, 0
      %p188 = por %p186, %p187
      %p189 = scmp.ne.s32.totalorder %s178, %s181
      %p190 = scmp.eq.s32.totalorder %s17, 7
      %p191 = por %p189, %p190
      %p192 = scmp.ne.s32.totalorder %s181, %s182
      %p193 = scmp.eq.s32.totalorder %s17, 0
      %p194 = por %p192, %p193
      %p195 = scmp.ne.s32.totalorder %s181, %s182
      %p196 = scmp.eq.s32.totalorder %s18, 7
      %p197 = por %p195, %p196
      %p199 = scmp.ne.s32.totalorder %s182, %s198
      %p200 = scmp.eq.s32.totalorder %s18, 0
      %p201 = por %p199, %p200
      %p202 = scmp.le.s32.totalorder 1, %s12
      %p203 = scmp.lt.s32.totalorder %s12, 9
      %p204 = pnand %p202, %p203
      %p205 = pneg %p204
      // Predicated region
      $region9: #{encoder_block.4} parent=5 // pred_check
        _
      $region10: #{encoder_block.4} parent=5 // pred_check_branch
        %207 = sbr.rel (%p204) target = $region12
      $region11: #{encoder_block.4} parent=5 // pred_region
        %s208 = ssub.s32 %s12, 1
        // Predicated region
        $region13: #{encoder_block.4} parent=11 // pred_check
          %p209 = pneg %p103
        $region14: #{encoder_block.4} parent=11 // pred_check_branch
          %211 = sbr.rel (%p209) target = $region16
        $region15: #{encoder_block.4} parent=11 // pred_region
          _
        $region16: #{encoder_block.4} parent=11 // pred_fallthru
          _
        // Predicated region
        $region17: #{encoder_block.4} parent=11 // pred_check
          %p212 = pneg %p124
        $region18: #{encoder_block.4} parent=11 // pred_check_branch
          %214 = sbr.rel (%p212) target = $region20
        $region19: #{encoder_block.4} parent=11 // pred_region
          _
        $region20: #{encoder_block.4} parent=11 // pred_fallthru
          _
        // Predicated region
        $region21: #{encoder_block.4} parent=11 // pred_check
          %p215 = pneg %p145
        $region22: #{encoder_block.4} parent=11 // pred_check_branch
          %217 = sbr.rel (%p215) target = $region24
        $region23: #{encoder_block.4} parent=11 // pred_region
          _
        $region24: #{encoder_block.4} parent=11 // pred_fallthru
          _
        // Predicated region
        $region25: #{encoder_block.4} parent=11 // pred_check
          %p218 = pneg %p166
        $region26: #{encoder_block.4} parent=11 // pred_check_branch
          %220 = sbr.rel (%p218) target = $region28
        $region27: #{encoder_block.4} parent=11 // pred_region
          _
        $region28: #{encoder_block.4} parent=11 // pred_fallthru
          _
      $region12: #{encoder_block.4} parent=5 // pred_fallthru
        _
      %p221 = scmp.lt.s32.totalorder %s12, 8
      // Predicated region
      $region29: #{encoder_block.4} parent=5 // pred_check
        %p222 = pneg %p221
      $region30: #{encoder_block.4} parent=5 // pred_check_branch
        %224 = sbr.rel (%p222) target = $region32
      $region31: #{encoder_block.4} parent=5 // pred_region
        // Predicated region
        $region33: #{encoder_block.4} parent=31 // pred_check
          %p225 = pneg %p46
        $region34: #{encoder_block.4} parent=31 // pred_check_branch
          %227 = sbr.rel (%p225) target = $region36
        $region35: #{encoder_block.4} parent=31 // pred_region
          %s228 = sand.u32 %s36, 1
          %s229 = sand.u32 %s36, 1
          %s230 = smul.addr %s229, 16
          %s231 = scalar_lea.vmem [#allocation2], %s230
          %s232 = smul.addr %s19, 20
          %s233 = sadd.s32 %s20, %s232
          %s234 = smul.addr %s233, 4
          %s235 = scalar_lea.vmem %s0, %s234
          // Predicated region
          $region37: #{encoder_block.4} parent=35 // pred_check
            _
          $region38: #{encoder_block.4} parent=35 // pred_check_branch
            %237 = sbr.rel (0) target = $region40
          $region39: #{encoder_block.4} parent=35 // pred_region
            // Predicated region
            $region41: #{encoder_block.4} parent=39 // pred_check
              _
            $region42: #{encoder_block.4} parent=39 // pred_check_branch
              %239 = sbr.rel target = $region44
            $region43: #{encoder_block.4} parent=39 // pred_region
              // Predicated region
              $region56: #{encoder_block.4} parent=43 // pred_check
                _
              $region57: #{encoder_block.4} parent=43 // pred_check_branch
                %261 = sbr.rel (0) target = $region59
              $region58: #{encoder_block.4} parent=43 // pred_region
                loop: start=0, step=1, limit=1
                $region60: #{encoder_block.4} parent=58 // loop_pre_header
                  _
                $region61: #{encoder_block.4} parent=58 // loop_header
                  %s263 = sphi 0, %s267
                  %p264 = scmp.ge.s32.totalorder %s263, 1
                  %s268 = sphi %s235, %s235
                  %s269 = sphi %s231, %s231
                $region62: #{encoder_block.4} parent=58 // loop_header_branch
                  %266 = sbr.rel (%p264) target = $region66
                $region63: #{encoder_block.4} parent=58 // loop_body
                  _
                $region64: #{encoder_block.4} parent=58 // loop_footer
                  %s267 = sadd.s32 1, %s263
                $region65: #{encoder_block.4} parent=58 // loop_footer_branch
                  %262 = sbr.rel target = $region61
                $region66: #{encoder_block.4} parent=58 // loop_exit
                  _
                %s271 = ssub.s32 16, 1
                loop: start=0, step=1, limit=1
                $region67: #{encoder_block.4} parent=58 // loop_pre_header
                  _
                $region68: #{encoder_block.4} parent=58 // loop_header
                  %s273 = sphi 0, %s277
                  %p274 = scmp.ge.s32.totalorder %s273, 1
                  %s278 = sphi %s235, %s235
                  %s279 = sphi %s231, %s231
                $region69: #{encoder_block.4} parent=58 // loop_header_branch
                  %276 = sbr.rel (%p274) target = $region73
                $region70: #{encoder_block.4} parent=58 // loop_body
                  %v280 = vld [vmem:[%s278] sm:%s271]
                  %281 = vst [vmem:[%s279] sm:%s271] %v280
                  %v282 = vld [vmem:[%s278 + $0x14] sm:%s271]
                  %283 = vst [vmem:[%s279 + $0x4] sm:%s271] %v282
                  %v284 = vld [vmem:[%s278 + $0x28] sm:%s271]
                  %285 = vst [vmem:[%s279 + $0x8] sm:%s271] %v284
                  %v286 = vld [vmem:[%s278 + $0x3c] sm:%s271]
                  %287 = vst [vmem:[%s279 + $0xc] sm:%s271] %v286
                $region71: #{encoder_block.4} parent=58 // loop_footer
                  %s277 = sadd.s32 1, %s273
                $region72: #{encoder_block.4} parent=58 // loop_footer_branch
                  %272 = sbr.rel target = $region68
                $region73: #{encoder_block.4} parent=58 // loop_exit
                  _
              $region59: #{encoder_block.4} parent=43 // pred_fallthru
                _
            $region44: #{encoder_block.4} parent=39 // pred_fallthru
              _
            // Predicated region
            $region45: #{encoder_block.4} parent=39 // pred_check
              _
            $region46: #{encoder_block.4} parent=39 // pred_check_branch
              %241 = sbr.rel (0) target = $region48
            $region47: #{encoder_block.4} parent=39 // pred_region
              %s243 = ssub.s32 16, 1
              loop: start=0, step=1, limit=1
              $region49: #{encoder_block.4} parent=47 // loop_pre_header
                _
              $region50: #{encoder_block.4} parent=47 // loop_header
                %s245 = sphi 0, %s249
                %p246 = scmp.ge.s32.totalorder %s245, 1
                %s250 = sphi %s235, %s235
                %s251 = sphi %s231, %s231
              $region51: #{encoder_block.4} parent=47 // loop_header_branch
                %248 = sbr.rel (%p246) target = $region55
              $region52: #{encoder_block.4} parent=47 // loop_body
                %v252 = vld [vmem:[%s250] sm:%s243]
                %253 = vst [vmem:[%s251] sm:%s243] %v252
                %v254 = vld [vmem:[%s250 + $0x14] sm:%s243]
                %255 = vst [vmem:[%s251 + $0x4] sm:%s243] %v254
                %v256 = vld [vmem:[%s250 + $0x28] sm:%s243]
                %257 = vst [vmem:[%s251 + $0x8] sm:%s243] %v256
                %v258 = vld [vmem:[%s250 + $0x3c] sm:%s243]
                %259 = vst [vmem:[%s251 + $0xc] sm:%s243] %v258
              $region53: #{encoder_block.4} parent=47 // loop_footer
                %s249 = sadd.s32 1, %s245
              $region54: #{encoder_block.4} parent=47 // loop_footer_branch
                %244 = sbr.rel target = $region50
              $region55: #{encoder_block.4} parent=47 // loop_exit
                _
            $region48: #{encoder_block.4} parent=39 // pred_fallthru
              _
          $region40: #{encoder_block.4} parent=35 // pred_fallthru
            _
          %288 = vnop
        $region36: #{encoder_block.4} parent=31 // pred_fallthru
          _
        // Predicated region
        $region74: #{encoder_block.4} parent=31 // pred_check
          %p289 = pneg %p76
        $region75: #{encoder_block.4} parent=31 // pred_check_branch
          %291 = sbr.rel (%p289) target = $region77
        $region76: #{encoder_block.4} parent=31 // pred_region
          %s292 = sand.u32 %s66, 1
          %s293 = sand.u32 %s66, 1
          %s294 = smul.addr %s293, 16
          %s295 = scalar_lea.vmem [#allocation3], %s294
          %s296 = sadd.s32 %s20, 1
          %s297 = smul.addr %s19, 20
          %s298 = sadd.s32 %s296, %s297
          %s299 = smul.addr %s298, 4
          %s300 = scalar_lea.vmem %s1, %s299
          // Predicated region
          $region78: #{encoder_block.4} parent=76 // pred_check
            _
          $region79: #{encoder_block.4} parent=76 // pred_check_branch
            %302 = sbr.rel (0) target = $region81
          $region80: #{encoder_block.4} parent=76 // pred_region
            // Predicated region
            $region82: #{encoder_block.4} parent=80 // pred_check
              _
            $region83: #{encoder_block.4} parent=80 // pred_check_branch
              %304 = sbr.rel target = $region85
            $region84: #{encoder_block.4} parent=80 // pred_region
              // Predicated region
              $region97: #{encoder_block.4} parent=84 // pred_check
                _
              $region98: #{encoder_block.4} parent=84 // pred_check_branch
                %326 = sbr.rel (0) target = $region100
              $region99: #{encoder_block.4} parent=84 // pred_region
                loop: start=0, step=1, limit=1
                $region101: #{encoder_block.4} parent=99 // loop_pre_header
                  _
                $region102: #{encoder_block.4} parent=99 // loop_header
                  %s328 = sphi 0, %s332
                  %p329 = scmp.ge.s32.totalorder %s328, 1
                  %s333 = sphi %s300, %s300
                  %s334 = sphi %s295, %s295
                $region103: #{encoder_block.4} parent=99 // loop_header_branch
                  %331 = sbr.rel (%p329) target = $region107
                $region104: #{encoder_block.4} parent=99 // loop_body
                  _
                $region105: #{encoder_block.4} parent=99 // loop_footer
                  %s332 = sadd.s32 1, %s328
                $region106: #{encoder_block.4} parent=99 // loop_footer_branch
                  %327 = sbr.rel target = $region102
                $region107: #{encoder_block.4} parent=99 // loop_exit
                  _
                %s336 = ssub.s32 16, 1
                loop: start=0, step=1, limit=1
                $region108: #{encoder_block.4} parent=99 // loop_pre_header
                  _
                $region109: #{encoder_block.4} parent=99 // loop_header
                  %s338 = sphi 0, %s342
                  %p339 = scmp.ge.s32.totalorder %s338, 1
                  %s343 = sphi %s300, %s300
                  %s344 = sphi %s295, %s295
                $region110: #{encoder_block.4} parent=99 // loop_header_branch
                  %341 = sbr.rel (%p339) target = $region114
                $region111: #{encoder_block.4} parent=99 // loop_body
                  %v345 = vld [vmem:[%s343] sm:%s336]
                  %346 = vst [vmem:[%s344] sm:%s336] %v345
                  %v347 = vld [vmem:[%s343 + $0x14] sm:%s336]
                  %348 = vst [vmem:[%s344 + $0x4] sm:%s336] %v347
                  %v349 = vld [vmem:[%s343 + $0x28] sm:%s336]
                  %350 = vst [vmem:[%s344 + $0x8] sm:%s336] %v349
                  %v351 = vld [vmem:[%s343 + $0x3c] sm:%s336]
                  %352 = vst [vmem:[%s344 + $0xc] sm:%s336] %v351
                $region112: #{encoder_block.4} parent=99 // loop_footer
                  %s342 = sadd.s32 1, %s338
                $region113: #{encoder_block.4} parent=99 // loop_footer_branch
                  %337 = sbr.rel target = $region109
                $region114: #{encoder_block.4} parent=99 // loop_exit
                  _
              $region100: #{encoder_block.4} parent=84 // pred_fallthru
                _
            $region85: #{encoder_block.4} parent=80 // pred_fallthru
              _
            // Predicated region
            $region86: #{encoder_block.4} parent=80 // pred_check
              _
            $region87: #{encoder_block.4} parent=80 // pred_check_branch
              %306 = sbr.rel (0) target = $region89
            $region88: #{encoder_block.4} parent=80 // pred_region
              %s308 = ssub.s32 16, 1
              loop: start=0, step=1, limit=1
              $region90: #{encoder_block.4} parent=88 // loop_pre_header
                _
              $region91: #{encoder_block.4} parent=88 // loop_header
                %s310 = sphi 0, %s314
                %p311 = scmp.ge.s32.totalorder %s310, 1
                %s315 = sphi %s300, %s300
                %s316 = sphi %s295, %s295
              $region92: #{encoder_block.4} parent=88 // loop_header_branch
                %313 = sbr.rel (%p311) target = $region96
              $region93: #{encoder_block.4} parent=88 // loop_body
                %v317 = vld [vmem:[%s315] sm:%s308]
                %318 = vst [vmem:[%s316] sm:%s308] %v317
                %v319 = vld [vmem:[%s315 + $0x14] sm:%s308]
                %320 = vst [vmem:[%s316 + $0x4] sm:%s308] %v319
                %v321 = vld [vmem:[%s315 + $0x28] sm:%s308]
                %322 = vst [vmem:[%s316 + $0x8] sm:%s308] %v321
                %v323 = vld [vmem:[%s315 + $0x3c] sm:%s308]
                %324 = vst [vmem:[%s316 + $0xc] sm:%s308] %v323
              $region94: #{encoder_block.4} parent=88 // loop_footer
                %s314 = sadd.s32 1, %s310
              $region95: #{encoder_block.4} parent=88 // loop_footer_branch
                %309 = sbr.rel target = $region91
              $region96: #{encoder_block.4} parent=88 // loop_exit
                _
            $region89: #{encoder_block.4} parent=80 // pred_fallthru
              _
          $region81: #{encoder_block.4} parent=76 // pred_fallthru
            _
          %353 = vnop
        $region77: #{encoder_block.4} parent=31 // pred_fallthru
          _
      $region32: #{encoder_block.4} parent=5 // pred_fallthru
        _
      %p354 = scmp.le.s32.totalorder 1, %s12
      %p355 = scmp.lt.s32.totalorder %s12, 9
      %p356 = pnand %p354, %p355
      %p357 = pneg %p356
      // Predicated region
      $region115: #{encoder_block.4} parent=5 // pred_check
        _
      $region116: #{encoder_block.4} parent=5 // pred_check_branch
        %359 = sbr.rel (%p356) target = $region118
      $region117: #{encoder_block.4} parent=5 // pred_region
        %s360 = ssub.s32 %s12, 1
        %s361 = sand.u32 %s39, 1
        %s362 = sand.u32 %s39, 1
        %s363 = smul.addr %s362, 16
        %s364 = scalar_lea.vmem [#allocation2], %s363
        // Predicated region
        $region119: #{encoder_block.4} parent=117 // pred_check
          %p365 = pneg %p52
        $region120: #{encoder_block.4} parent=117 // pred_check_branch
          %367 = sbr.rel (%p365) target = $region122
        $region121: #{encoder_block.4} parent=117 // pred_region
          _
        $region122: #{encoder_block.4} parent=117 // pred_fallthru
          _
        %s368 = sand.u32 %s69, 1
        %s369 = sand.u32 %s69, 1
        %s370 = smul.addr %s369, 16
        %s371 = scalar_lea.vmem [#allocation3], %s370
        // Predicated region
        $region123: #{encoder_block.4} parent=117 // pred_check
          %p372 = pneg %p82
        $region124: #{encoder_block.4} parent=117 // pred_check_branch
          %374 = sbr.rel (%p372) target = $region126
        $region125: #{encoder_block.4} parent=117 // pred_region
          _
        $region126: #{encoder_block.4} parent=117 // pred_fallthru
          _
        %s375 = sand.u32 %s39, 1
        %s376 = sand.u32 %s39, 1
        %s377 = smul.addr %s376, 16
        %s378 = scalar_lea.vmem [#allocation2], %s377
        %p379 = pneg %p52
        %p380 = pneg %p49
        %s381 = sand.u32 %s69, 1
        %s382 = sand.u32 %s69, 1
        %s383 = smul.addr %s382, 16
        %s384 = scalar_lea.vmem [#allocation3], %s383
        %p385 = pneg %p82
        %p386 = pneg %p79
        %p387 = pneg %p103
        %p388 = pneg %p100
        %p389 = pneg %p124
        %p390 = pneg %p121
        %p391 = pneg %p145
        %p392 = pneg %p142
        %p393 = pneg %p166
        %p394 = pneg %p163
        %p395 = pneg %p194
        %p396 = pneg %p191
        %s397 = sand.u32 %s181, 1
        %s398 = sand.u32 %s181, 1
        %s399 = smul.addr %s398, 16
        %s400 = scalar_lea.vmem [#allocation4], %s399
        %s401 = sadd.s32 %s22, 1
        %v403 = vld [vmem:[%s364] sm:$0xf]
        %v404 = vld [vmem:[%s364 + $0x4] sm:$0xf]
        %v405 = vld [vmem:[%s364 + $0x8] sm:$0xf]
        %v406 = vld [vmem:[%s364 + $0xc] sm:$0xf]
        %v407 = vld [vmem:[%s371] sm:$0xf]
        %v408 = vld [vmem:[%s371 + $0x4] sm:$0xf]
        %v409 = vld [vmem:[%s371 + $0x8] sm:$0xf]
        %v410 = vld [vmem:[%s371 + $0xc] sm:$0xf]
        %v415 = vunpack.c.l.b16 %v403
        %v416 = vunpack.c.l.b16 %v404
        %v417 = vunpack.c.l.b16 %v405
        %v418 = vunpack.c.l.b16 %v406
        %v419 = vpack.c.b16 %v416, %v415
        %v420 = vpack.c.b16 %v418, %v417
        %v427 = vunpack.c.l.b16 %v407
        %v428 = vunpack.c.l.b16 %v408
        %v429 = vunpack.c.l.b16 %v409
        %v430 = vunpack.c.l.b16 %v410
        %v431 = vpack.c.b16 %v428, %v427
        %v432 = vpack.c.b16 %v430, %v429
        %435 = vrot.lane.b32.xlu0 %v419, 127
        %v436 = vpop.permute.xlu0 %435
        %437 = vrot.lane.b32.xlu0 %v431, 127
        %v438 = vpop.permute.xlu0 %437
        %439 = vrot.lane.b32.xlu0 %v420, 127
        %v440 = vpop.permute.xlu0 %439
        %441 = vrot.lane.b32.xlu0 %v432, 127
        %v442 = vpop.permute.xlu0 %441
        %vm443 = vcmask 1039360
        %v444 = vsel %vm443, %v436, %v438
        %v445 = vsel %vm443, %v440, %v442
        %448 = vrot.lane.b32.xlu0 %v419, 126
        %v449 = vpop.permute.xlu0 %448
        %450 = vrot.lane.b32.xlu0 %v431, 126
        %v451 = vpop.permute.xlu0 %450
        %452 = vrot.lane.b32.xlu0 %v420, 126
        %v453 = vpop.permute.xlu0 %452
        %454 = vrot.lane.b32.xlu0 %v432, 126
        %v455 = vpop.permute.xlu0 %454
        %vm456 = vcmask 1031168
        %v457 = vsel %vm456, %v449, %v451
        %v458 = vsel %vm456, %v453, %v455
        %461 = vrot.lane.b32.xlu0 %v419, 125
        %v462 = vpop.permute.xlu0 %461
        %463 = vrot.lane.b32.xlu0 %v431, 125
        %v464 = vpop.permute.xlu0 %463
        %465 = vrot.lane.b32.xlu0 %v420, 125
        %v466 = vpop.permute.xlu0 %465
        %467 = vrot.lane.b32.xlu0 %v432, 125
        %v468 = vpop.permute.xlu0 %467
        %vm469 = vcmask 1022976
        %v470 = vsel %vm469, %v462, %v464
        %v471 = vsel %vm469, %v466, %v468
        %474 = vrot.lane.b32.xlu0 %v419, 124
        %v475 = vpop.permute.xlu0 %474
        %476 = vrot.lane.b32.xlu0 %v431, 124
        %v477 = vpop.permute.xlu0 %476
        %478 = vrot.lane.b32.xlu0 %v420, 124
        %v479 = vpop.permute.xlu0 %478
        %480 = vrot.lane.b32.xlu0 %v432, 124
        %v481 = vpop.permute.xlu0 %480
        %vm482 = vcmask 1014784
        %v483 = vsel %vm482, %v475, %v477
        %v484 = vsel %vm482, %v479, %v481
        %487 = vrot.lane.b32.xlu0 %v419, 123
        %v488 = vpop.permute.xlu0 %487
        %489 = vrot.lane.b32.xlu0 %v431, 123
        %v490 = vpop.permute.xlu0 %489
        %491 = vrot.lane.b32.xlu0 %v420, 123
        %v492 = vpop.permute.xlu0 %491
        %493 = vrot.lane.b32.xlu0 %v432, 123
        %v494 = vpop.permute.xlu0 %493
        %vm495 = vcmask 1006592
        %v496 = vsel %vm495, %v488, %v490
        %v497 = vsel %vm495, %v492, %v494
        %500 = vrot.lane.b32.xlu0 %v419, 122
        %v501 = vpop.permute.xlu0 %500
        %502 = vrot.lane.b32.xlu0 %v431, 122
        %v503 = vpop.permute.xlu0 %502
        %504 = vrot.lane.b32.xlu0 %v420, 122
        %v505 = vpop.permute.xlu0 %504
        %506 = vrot.lane.b32.xlu0 %v432, 122
        %v507 = vpop.permute.xlu0 %506
        %vm508 = vcmask 998400
        %v509 = vsel %vm508, %v501, %v503
        %v510 = vsel %vm508, %v505, %v507
        %v513 = vld [vmem:[%s2] sm:$0xff]
        %v514 = vld [vmem:[%s2 + $0x8] sm:$0xff]
        %v515 = vld [vmem:[%s2 + $0x10] sm:$0xff]
        %v516 = vld [vmem:[%s2 + $0x18] sm:$0xff]
        %v517 = vld [vmem:[%s3] sm:$0xff]
        %v518 = vld [vmem:[%s3 + $0x8] sm:$0xff]
        %v519 = vld [vmem:[%s3 + $0x10] sm:$0xff]
        %v520 = vld [vmem:[%s3 + $0x18] sm:$0xff]
        %522 = vset.pattern.permute.xlu0 0
        %523 = vperm.xlu0 %522, %v517
        %v524 = vpop.permute.xlu0 %523
        %527 = vset.pattern.permute.xlu0 0
        %528 = vperm.xlu0 %527, %v518
        %v529 = vpop.permute.xlu0 %528
        %532 = vset.pattern.permute.xlu0 0
        %533 = vperm.xlu0 %532, %v519
        %v534 = vpop.permute.xlu0 %533
        %537 = vset.pattern.permute.xlu0 0
        %538 = vperm.xlu0 %537, %v520
        %v539 = vpop.permute.xlu0 %538
        %v545 = vunpack.c.l.b16 %v513
        %v546 = vunpack.c.h.b16 %v513
        %v547 = vunpack.c.l.b16 %v514
        %v548 = vunpack.c.h.b16 %v514
        %v549 = vunpack.c.l.b16 %v515
        %v550 = vunpack.c.h.b16 %v515
        %v551 = vunpack.c.l.b16 %v516
        %v552 = vunpack.c.h.b16 %v516
        %v553 = vpack.c.b16 %v547, %v545
        %v554 = vpack.c.b16 %v548, %v546
        %v555 = vpack.c.b16 %v551, %v549
        %v556 = vpack.c.b16 %v552, %v550
        %vm559 = vcmask 785408
        %v561 = vsel %vm559, %v554, 0
        %v564 = vsel %vm559, %v556, 0
        %566 = vmatpush.bf16.msra.mxu0 %v471
        %567 = vmatpush.bf16.msra.mxu0 %v470
        %568 = vmatpush.bf16.msra.mxu0 %v458
        %569 = vmatpush.bf16.msra.mxu0 %v457
        %570 = vmatpush.bf16.msra.mxu0 %v445
        %571 = vmatpush.bf16.msra.mxu0 %v444
        %572 = vmatpush.bf16.msra.mxu0 %v420
        %573 = vmatpush.bf16.msra.mxu0 %v419
        %574 = vmatmul.bf16.gmra.mxu0 %v553
        %v575 = vpop.f32.mrf.mxu0
        %v576 = vadd.f32 %v524, %v575
        %v577 = vpop.f32.mrf.mxu0
        %v578 = vadd.f32 %v529, %v577
        %579 = vmatmul.bf16.gmra.mxu0 %v555
        %v580 = vpop.f32.mrf.mxu0
        %v581 = vadd.f32 %v534, %v580
        %v582 = vpop.f32.mrf.mxu0
        %v583 = vadd.f32 %v539, %v582
        %584 = vdwg.mxu0
        %585 = vmatpush.bf16.msra.mxu0 0
        %586 = vmatpush.bf16.msra.mxu0 0
        %587 = vmatpush.bf16.msra.mxu0 %v510
        %588 = vmatpush.bf16.msra.mxu0 %v509
        %589 = vmatpush.bf16.msra.mxu0 %v497
        %590 = vmatpush.bf16.msra.mxu0 %v496
        %591 = vmatpush.bf16.msra.mxu0 %v484
        %592 = vmatpush.bf16.msra.mxu0 %v483
        %593 = vmatmul.bf16.gmra.mxu0 %v561
        %v594 = vpop.f32.mrf.mxu0
        %v595 = vadd.f32 %v576, %v594
        %v596 = vpop.f32.mrf.mxu0
        %v597 = vadd.f32 %v578, %v596
        %598 = vmatmul.bf16.gmra.mxu0 %v564
        %v599 = vpop.f32.mrf.mxu0
        %v600 = vadd.f32 %v581, %v599
        %v601 = vpop.f32.mrf.mxu0
        %v602 = vadd.f32 %v583, %v601
        %603 = vdwg.mxu0
        %vm604 = vcmp.gt.f32.partialorder %v595, 0.0
        %vm605 = vcmp.gt.f32.partialorder %v597, 0.0
        %vm606 = vcmp.gt.f32.partialorder %v600, 0.0
        %vm607 = vcmp.gt.f32.partialorder %v602, 0.0
        %v608 = vmin.f32 %v595, 0.0
        %v609 = vmin.f32 %v597, 0.0
        %v610 = vmin.f32 %v600, 0.0
        %v611 = vmin.f32 %v602, 0.0
        %v612 = vmul.f32 %v608, 1.442695
        %v613 = vpow.pop %v612
        %v614 = vmul.f32 %v609, 1.442695
        %v615 = vpow.pop %v614
        %v616 = vmul.f32 %v610, 1.442695
        %v617 = vpow.pop %v616
        %v618 = vmul.f32 %v611, 1.442695
        %v619 = vpow.pop %v618
        %v620 = vsub.f32 %v613, 1.0
        %v621 = vsub.f32 %v615, 1.0
        %v622 = vsub.f32 %v617, 1.0
        %v623 = vsub.f32 %v619, 1.0
        %v624 = vsel %vm604, %v595, %v620
        %v625 = vsel %vm605, %v597, %v621
        %v626 = vsel %vm606, %v600, %v622
        %v627 = vsel %vm607, %v602, %v623
        %v628 = vld [vmem:[%s4] sm:$0xf]
        %v629 = vld [vmem:[%s4 + $0x4] sm:$0xf]
        %v630 = vld [vmem:[%s4 + $0x8] sm:$0xf]
        %v631 = vld [vmem:[%s4 + $0xc] sm:$0xf]
        %v632 = vpack.c.bf16 %v625, %v624
        %v633 = vpack.c.bf16 %v627, %v626
        %v634 = vld [vmem:[%s5] sm:$0xff]
        %v635 = vld [vmem:[%s5 + $0x8] sm:$0xff]
        %v636 = vld [vmem:[%s5 + $0x10] sm:$0xff]
        %v637 = vld [vmem:[%s5 + $0x18] sm:$0xff]
        %639 = vset.pattern.permute.xlu0 0
        %640 = vperm.xlu0 %639, %v634
        %v641 = vpop.permute.xlu0 %640
        %644 = vset.pattern.permute.xlu0 0
        %645 = vperm.xlu0 %644, %v635
        %v646 = vpop.permute.xlu0 %645
        %649 = vset.pattern.permute.xlu0 0
        %650 = vperm.xlu0 %649, %v636
        %v651 = vpop.permute.xlu0 %650
        %654 = vset.pattern.permute.xlu0 0
        %655 = vperm.xlu0 %654, %v637
        %v656 = vpop.permute.xlu0 %655
        %v662 = vunpack.c.l.b16 %v628
        %v663 = vunpack.c.l.b16 %v629
        %v664 = vunpack.c.l.b16 %v630
        %v665 = vunpack.c.l.b16 %v631
        %v666 = vpack.c.b16 %v663, %v662
        %v667 = vpack.c.b16 %v665, %v664
        %vm668 = vcmask 261120
        %v670 = vsel %vm668, %v666, 0
        %v673 = vsel %vm668, %v667, 0
        %675 = vmatpush.bf16.msra.mxu0 0
        %676 = vmatpush.bf16.msra.mxu0 0
        %677 = vmatpush.bf16.msra.mxu0 0
        %678 = vmatpush.bf16.msra.mxu0 0
        %679 = vmatpush.bf16.msra.mxu0 0
        %680 = vmatpush.bf16.msra.mxu0 0
        %681 = vmatpush.bf16.msra.mxu0 %v633
        %682 = vmatpush.bf16.msra.mxu0 %v632
        %683 = vmatmul.bf16.gmra.mxu0 %v670
        %v684 = vpop.f32.mrf.mxu0
        %v685 = vadd.f32 %v641, %v684
        %v686 = vpop.f32.mrf.mxu0
        %v687 = vadd.f32 %v646, %v686
        %688 = vmatmul.bf16.gmra.mxu0 %v673
        %v689 = vpop.f32.mrf.mxu0
        %v690 = vadd.f32 %v651, %v689
        %v691 = vpop.f32.mrf.mxu0
        %v692 = vadd.f32 %v656, %v691
        %693 = vdwg.mxu0
        %v694 = vunpack.c.l.bf16 %v419
        %v695 = vunpack.c.l.bf16 %v431
        %v696 = vunpack.c.h.bf16 %v419
        %v697 = vunpack.c.h.bf16 %v431
        %v698 = vunpack.c.l.bf16 %v420
        %v699 = vunpack.c.l.bf16 %v432
        %v700 = vunpack.c.h.bf16 %v420
        %v701 = vunpack.c.h.bf16 %v432
        %706 = vrot.lane.b32.xlu0 %v685, 6
        %v707 = vpop.permute.xlu0 %706
        %708 = vrot.lane.b32.xlu0 %v687, 6
        %v709 = vpop.permute.xlu0 %708
        %710 = vrot.lane.b32.xlu0 %v690, 6
        %v711 = vpop.permute.xlu0 %710
        %712 = vrot.lane.b32.xlu0 %v692, 6
        %v713 = vpop.permute.xlu0 %712
        %v718 = vadd.f32 %v694, %v707
        %v719 = vadd.f32 %v695, %v707
        %v720 = vadd.f32 %v696, %v709
        %v721 = vadd.f32 %v697, %v709
        %v722 = vadd.f32 %v698, %v711
        %v723 = vadd.f32 %v699, %v711
        %v724 = vadd.f32 %v700, %v713
        %v725 = vadd.f32 %v701, %v713
        %vm726 = vcmp.gt.f32.partialorder %v718, 0.0
        %vm727 = vcmp.gt.f32.partialorder %v719, 0.0
        %vm728 = vcmp.gt.f32.partialorder %v720, 0.0
        %vm729 = vcmp.gt.f32.partialorder %v721, 0.0
        %vm730 = vcmp.gt.f32.partialorder %v722, 0.0
        %vm731 = vcmp.gt.f32.partialorder %v723, 0.0
        %vm732 = vcmp.gt.f32.partialorder %v724, 0.0
        %vm733 = vcmp.gt.f32.partialorder %v725, 0.0
        %v734 = vmin.f32 %v718, 0.0
        %v735 = vmin.f32 %v719, 0.0
        %v736 = vmin.f32 %v720, 0.0
        %v737 = vmin.f32 %v721, 0.0
        %v738 = vmin.f32 %v722, 0.0
        %v739 = vmin.f32 %v723, 0.0
        %v740 = vmin.f32 %v724, 0.0
        %v741 = vmin.f32 %v725, 0.0
        %v742 = vmul.f32 %v734, 1.442695
        %v743 = vpow.pop %v742
        %v744 = vmul.f32 %v735, 1.442695
        %v745 = vpow.pop %v744
        %v746 = vmul.f32 %v736, 1.442695
        %v747 = vpow.pop %v746
        %v748 = vmul.f32 %v737, 1.442695
        %v749 = vpow.pop %v748
        %v750 = vmul.f32 %v738, 1.442695
        %v751 = vpow.pop %v750
        %v752 = vmul.f32 %v739, 1.442695
        %v753 = vpow.pop %v752
        %v754 = vmul.f32 %v740, 1.442695
        %v755 = vpow.pop %v754
        %v756 = vmul.f32 %v741, 1.442695
        %v757 = vpow.pop %v756
        %v758 = vsub.f32 %v743, 1.0
        %v759 = vsub.f32 %v745, 1.0
        %v760 = vsub.f32 %v747, 1.0
        %v761 = vsub.f32 %v749, 1.0
        %v762 = vsub.f32 %v751, 1.0
        %v763 = vsub.f32 %v753, 1.0
        %v764 = vsub.f32 %v755, 1.0
        %v765 = vsub.f32 %v757, 1.0
        %v766 = vsel %vm726, %v718, %v758
        %v767 = vsel %vm727, %v719, %v759
        %v768 = vsel %vm728, %v720, %v760
        %v769 = vsel %vm729, %v721, %v761
        %v770 = vsel %vm730, %v722, %v762
        %v771 = vsel %vm731, %v723, %v763
        %v772 = vsel %vm732, %v724, %v764
        %v773 = vsel %vm733, %v725, %v765
        %v774 = vpack.c.bf16 %v767, %v766
        %v775 = vpack.c.bf16 %v769, %v768
        %v776 = vpack.c.bf16 %v771, %v770
        %v777 = vpack.c.bf16 %v773, %v772
        %782 = vrot.lane.b32.xlu0 %v774, 122
        %v783 = vpop.permute.xlu0 %782
        %784 = vrot.lane.b32.xlu0 %v775, 122
        %v785 = vpop.permute.xlu0 %784
        %786 = vrot.lane.b32.xlu0 %v776, 122
        %v787 = vpop.permute.xlu0 %786
        %788 = vrot.lane.b32.xlu0 %v777, 122
        %v789 = vpop.permute.xlu0 %788
        %v790 = vrot.slane %v783, 4
        %v791 = vrot.slane %v785, 4
        %v792 = vrot.slane %v787, 4
        %v793 = vrot.slane %v789, 4
        %v794 = vsel %vm508, %v783, %v790
        %v795 = vsel %vm508, %v785, %v791
        %v796 = vsel %vm508, %v787, %v792
        %v797 = vsel %vm508, %v789, %v793
        %802 = vst [vmem:[%s400] sm:$0xf] %v794
        %803 = vst [vmem:[%s400 + $0x4] sm:$0xf] %v795
        %804 = vst [vmem:[%s400 + $0x8] sm:$0xf] %v796
        %805 = vst [vmem:[%s400 + $0xc] sm:$0xf] %v797
        %s806 = sand.u32 %s181, 1
        %s807 = sand.u32 %s181, 1
        %s808 = smul.addr %s807, 16
        %s809 = scalar_lea.vmem [#allocation4], %s808
        // Predicated region
        $region127: #{encoder_block.4} parent=117 // pred_check
          %p810 = pneg %p191
        $region128: #{encoder_block.4} parent=117 // pred_check_branch
          %812 = sbr.rel (%p810) target = $region130
        $region129: #{encoder_block.4} parent=117 // pred_region
          %s813 = smul.addr %s21, 16
          %s814 = sadd.s32 %s22, %s813
          %s815 = smul.addr %s814, 4
          %s816 = scalar_lea.vmem %s6, %s815
          // Predicated region
          $region131: #{encoder_block.4} parent=129 // pred_check
            _
          $region132: #{encoder_block.4} parent=129 // pred_check_branch
            %818 = sbr.rel (0) target = $region134
          $region133: #{encoder_block.4} parent=129 // pred_region
            // Predicated region
            $region135: #{encoder_block.4} parent=133 // pred_check
              _
            $region136: #{encoder_block.4} parent=133 // pred_check_branch
              %820 = sbr.rel target = $region138
            $region137: #{encoder_block.4} parent=133 // pred_region
              // Predicated region
              $region150: #{encoder_block.4} parent=137 // pred_check
                _
              $region151: #{encoder_block.4} parent=137 // pred_check_branch
                %842 = sbr.rel (0) target = $region153
              $region152: #{encoder_block.4} parent=137 // pred_region
                loop: start=0, step=1, limit=1
                $region154: #{encoder_block.4} parent=152 // loop_pre_header
                  _
                $region155: #{encoder_block.4} parent=152 // loop_header
                  %s844 = sphi 0, %s848
                  %p845 = scmp.ge.s32.totalorder %s844, 1
                  %s849 = sphi %s809, %s809
                  %s850 = sphi %s816, %s816
                $region156: #{encoder_block.4} parent=152 // loop_header_branch
                  %847 = sbr.rel (%p845) target = $region160
                $region157: #{encoder_block.4} parent=152 // loop_body
                  _
                $region158: #{encoder_block.4} parent=152 // loop_footer
                  %s848 = sadd.s32 1, %s844
                $region159: #{encoder_block.4} parent=152 // loop_footer_branch
                  %843 = sbr.rel target = $region155
                $region160: #{encoder_block.4} parent=152 // loop_exit
                  _
                %s852 = ssub.s32 16, 1
                loop: start=0, step=1, limit=1
                $region161: #{encoder_block.4} parent=152 // loop_pre_header
                  _
                $region162: #{encoder_block.4} parent=152 // loop_header
                  %s854 = sphi 0, %s858
                  %p855 = scmp.ge.s32.totalorder %s854, 1
                  %s859 = sphi %s809, %s809
                  %s860 = sphi %s816, %s816
                $region163: #{encoder_block.4} parent=152 // loop_header_branch
                  %857 = sbr.rel (%p855) target = $region167
                $region164: #{encoder_block.4} parent=152 // loop_body
                  %v861 = vld [vmem:[%s859] sm:%s852]
                  %862 = vst [vmem:[%s860] sm:%s852] %v861
                  %v863 = vld [vmem:[%s859 + $0x4] sm:%s852]
                  %864 = vst [vmem:[%s860 + $0x10] sm:%s852] %v863
                  %v865 = vld [vmem:[%s859 + $0x8] sm:%s852]
                  %866 = vst [vmem:[%s860 + $0x20] sm:%s852] %v865
                  %v867 = vld [vmem:[%s859 + $0xc] sm:%s852]
                  %868 = vst [vmem:[%s860 + $0x30] sm:%s852] %v867
                $region165: #{encoder_block.4} parent=152 // loop_footer
                  %s858 = sadd.s32 1, %s854
                $region166: #{encoder_block.4} parent=152 // loop_footer_branch
                  %853 = sbr.rel target = $region162
                $region167: #{encoder_block.4} parent=152 // loop_exit
                  _
              $region153: #{encoder_block.4} parent=137 // pred_fallthru
                _
            $region138: #{encoder_block.4} parent=133 // pred_fallthru
              _
            // Predicated region
            $region139: #{encoder_block.4} parent=133 // pred_check
              _
            $region140: #{encoder_block.4} parent=133 // pred_check_branch
              %822 = sbr.rel (0) target = $region142
            $region141: #{encoder_block.4} parent=133 // pred_region
              %s824 = ssub.s32 16, 1
              loop: start=0, step=1, limit=1
              $region143: #{encoder_block.4} parent=141 // loop_pre_header
                _
              $region144: #{encoder_block.4} parent=141 // loop_header
                %s826 = sphi 0, %s830
                %p827 = scmp.ge.s32.totalorder %s826, 1
                %s831 = sphi %s809, %s809
                %s832 = sphi %s816, %s816
              $region145: #{encoder_block.4} parent=141 // loop_header_branch
                %829 = sbr.rel (%p827) target = $region149
              $region146: #{encoder_block.4} parent=141 // loop_body
                %v833 = vld [vmem:[%s831] sm:%s824]
                %834 = vst [vmem:[%s832] sm:%s824] %v833
                %v835 = vld [vmem:[%s831 + $0x4] sm:%s824]
                %836 = vst [vmem:[%s832 + $0x10] sm:%s824] %v835
                %v837 = vld [vmem:[%s831 + $0x8] sm:%s824]
                %838 = vst [vmem:[%s832 + $0x20] sm:%s824] %v837
                %v839 = vld [vmem:[%s831 + $0xc] sm:%s824]
                %840 = vst [vmem:[%s832 + $0x30] sm:%s824] %v839
              $region147: #{encoder_block.4} parent=141 // loop_footer
                %s830 = sadd.s32 1, %s826
              $region148: #{encoder_block.4} parent=141 // loop_footer_branch
                %825 = sbr.rel target = $region144
              $region149: #{encoder_block.4} parent=141 // loop_exit
                _
            $region142: #{encoder_block.4} parent=133 // pred_fallthru
              _
          $region134: #{encoder_block.4} parent=129 // pred_fallthru
            _
          %869 = vnop
        $region130: #{encoder_block.4} parent=117 // pred_fallthru
          _
      $region118: #{encoder_block.4} parent=5 // pred_fallthru
        _
      %p870 = scmp.le.s32.totalorder 2, %s12
      // Predicated region
      $region168: #{encoder_block.4} parent=5 // pred_check
        %p871 = pneg %p870
      $region169: #{encoder_block.4} parent=5 // pred_check_branch
        %873 = sbr.rel (%p871) target = $region171
      $region170: #{encoder_block.4} parent=5 // pred_region
        %s874 = ssub.s32 %s12, 2
        // Predicated region
        $region172: #{encoder_block.4} parent=170 // pred_check
          %p875 = pneg %p197
        $region173: #{encoder_block.4} parent=170 // pred_check_branch
          %877 = sbr.rel (%p875) target = $region175
        $region174: #{encoder_block.4} parent=170 // pred_region
          %s878 = sand.u32 %s182, 1
          %s879 = sand.u32 %s182, 1
          %s880 = smul.addr %s879, 16
          %s881 = scalar_lea.vmem [#allocation4], %s880
        $region175: #{encoder_block.4} parent=170 // pred_fallthru
          _
      $region171: #{encoder_block.4} parent=5 // pred_fallthru
        _
    $region6: #{encoder_block.4} parent=1 // loop_footer
      %s16 = sadd.s32 1, %s12
    $region7: #{encoder_block.4} parent=1 // loop_footer_branch
      %11 = sbr.rel target = $region3
    $region8: #{encoder_block.4} parent=1 // loop_exit
      _

// kernel: encoder_block.6
$region0: #{encoder_block.6}
  #allocation0 [shape = 'u32[]', space=smem, size = 0x4, offset = 0x4, fixed_abs, tag = 'smem constant byte address 0x4 - core index']
  #allocation1 [shape = 'u32[72,128]{1,0:T(1,128)}', space=vmem, size = 0x9000, scoped, tag = 'internal scratch']
  %s0 = inlined_call_operand.vmem [shape: bf16[2,32,640], index: 0, kind: input, shape index: {}, may-alias: {0,1}]
  %s1 = inlined_call_operand.vmem [shape: bf16[2,32,640], index: 1, kind: input, shape index: {}, may-alias: {0,1}]
  %s2 = inlined_call_operand.vmem [shape: bf16[32,224], index: 2, kind: input, shape index: {}]
  %s3 = inlined_call_operand.vmem [shape: f32[32,1], index: 3, kind: input, shape index: {}]
  %s4 = inlined_call_operand.vmem [shape: bf16[32,32], index: 4, kind: input, shape index: {}]
  %s5 = inlined_call_operand.vmem [shape: f32[32,1], index: 5, kind: input, shape index: {}]
  %s6 = inlined_call_operand.vmem [shape: bf16[2,32,512], index: 6, kind: output, shape index: {}]
  %s7 = sld [smem:[#allocation0]]
  $region176: #{encoder_block.6} parent=0
    _
  %s9 = ssub.s32 1, %s7
  %s10 = scalar_select 0, %s9, %s7
  $region1: #{encoder_block.6} parent=0
    #allocation2 [shape = 'u8[16384]{0}', space=vmem, size = 0x4000, scoped, tag = 'input window, operand 0']
    #allocation3 [shape = 'u8[16384]{0}', space=vmem, size = 0x4000, scoped, tag = 'input window, operand 1']
    #allocation4 [shape = 'u8[16384]{0}', space=vmem, size = 0x4000, scoped, tag = 'output window, operand 0']
    loop: start=0, step=1, limit=10
    $region2: #{encoder_block.6} parent=1 // loop_pre_header
      _
    $region3: #{encoder_block.6} parent=1 // loop_header
      %s12 = sphi 0, %s16
      %p13 = scmp.ge.s32.totalorder %s12, 10
      %s19 = sphi 0, %s31
      %s20 = sphi 0, %s27
      %s21 = sphi 0, %s19
      %s22 = sphi 0, %s20
      %s23 = sphi 0, %s21
      %s24 = sphi 0, %s22
      %s36 = sphi 0, %s38
      %s39 = sphi 0, %s36
      %s40 = sphi 0, %s39
      %s56 = sphi 0, %s40
      %s66 = sphi 0, %s68
      %s69 = sphi 0, %s66
      %s70 = sphi 0, %s69
      %s86 = sphi 0, %s70
      %s90 = sphi 0, %s90
      %s92 = sphi 0, %s90
      %s93 = sphi 0, %s92
      %s107 = sphi 0, %s93
      %s111 = sphi 0, %s111
      %s113 = sphi 0, %s111
      %s114 = sphi 0, %s113
      %s128 = sphi 0, %s114
      %s132 = sphi 0, %s132
      %s134 = sphi 0, %s132
      %s135 = sphi 0, %s134
      %s149 = sphi 0, %s135
      %s153 = sphi 0, %s153
      %s155 = sphi 0, %s153
      %s156 = sphi 0, %s155
      %s170 = sphi 0, %s156
      %s178 = sphi 0, %s180
      %s181 = sphi 0, %s178
      %s182 = sphi 0, %s181
      %s198 = sphi 0, %s182
    $region4: #{encoder_block.6} parent=1 // loop_header_branch
      %15 = sbr.rel (%p13) target = $region8
    $region5: #{encoder_block.6} parent=1 // loop_body
      %s17 = ssub.s32 %s12, 1
      %s18 = ssub.s32 %s12, 2
      %s25 = sadd.s32 1, %s20
      %p26 = scmp.ge.s32.totalorder %s25, 4
      %s27 = scalar_select %p26, 0, %s25
      %s28 = sadd.s32 1, %s19
      %s29 = scalar_select %p26, %s28, %s19
      %p30 = scmp.ge.s32.totalorder %s29, 2
      %s31 = scalar_select %p30, 0, %s29
      %s32 = ssub.s32 %s19, %s31
      %s33 = ssub.s32 %s20, %s27
      %s34 = sor.u32 %s32, %s33
      %p35 = scmp.eq.s32.totalorder %s34, 0
      %s37 = sadd.s32 %s36, 1
      %s38 = scalar_select %p35, %s36, %s37
      %p41 = pneg %p35
      %p42 = scmp.eq.s32.totalorder %s12, 7
      %p43 = por %p41, %p42
      %p44 = scmp.ne.s32.totalorder %s36, %s39
      %p45 = scmp.eq.s32.totalorder %s12, 0
      %p46 = por %p44, %p45
      %p47 = scmp.ne.s32.totalorder %s36, %s39
      %p48 = scmp.eq.s32.totalorder %s17, 7
      %p49 = por %p47, %p48
      %p50 = scmp.ne.s32.totalorder %s39, %s40
      %p51 = scmp.eq.s32.totalorder %s17, 0
      %p52 = por %p50, %p51
      %p53 = scmp.ne.s32.totalorder %s39, %s40
      %p54 = scmp.eq.s32.totalorder %s18, 7
      %p55 = por %p53, %p54
      %p57 = scmp.ne.s32.totalorder %s40, %s56
      %p58 = scmp.eq.s32.totalorder %s18, 0
      %p59 = por %p57, %p58
      %s60 = sadd.s32 %s20, 1
      %s61 = sadd.s32 %s27, 1
      %s62 = ssub.s32 %s19, %s31
      %s63 = ssub.s32 %s60, %s61
      %s64 = sor.u32 %s62, %s63
      %p65 = scmp.eq.s32.totalorder %s64, 0
      %s67 = sadd.s32 %s66, 1
      %s68 = scalar_select %p65, %s66, %s67
      %p71 = pneg %p65
      %p72 = scmp.eq.s32.totalorder %s12, 7
      %p73 = por %p71, %p72
      %p74 = scmp.ne.s32.totalorder %s66, %s69
      %p75 = scmp.eq.s32.totalorder %s12, 0
      %p76 = por %p74, %p75
      %p77 = scmp.ne.s32.totalorder %s66, %s69
      %p78 = scmp.eq.s32.totalorder %s17, 7
      %p79 = por %p77, %p78
      %p80 = scmp.ne.s32.totalorder %s69, %s70
      %p81 = scmp.eq.s32.totalorder %s17, 0
      %p82 = por %p80, %p81
      %p83 = scmp.ne.s32.totalorder %s69, %s70
      %p84 = scmp.eq.s32.totalorder %s18, 7
      %p85 = por %p83, %p84
      %p87 = scmp.ne.s32.totalorder %s70, %s86
      %p88 = scmp.eq.s32.totalorder %s18, 0
      %p89 = por %p87, %p88
      %s91 = sadd.s32 %s90, 1
      %p94 = scmp.eq.s32.totalorder %s12, 7
      %p95 = scmp.ne.s32.totalorder %s90, %s92
      %p96 = scmp.eq.s32.totalorder %s12, 0
      %p97 = por %p95, %p96
      %p98 = scmp.ne.s32.totalorder %s90, %s92
      %p99 = scmp.eq.s32.totalorder %s17, 7
      %p100 = por %p98, %p99
      %p101 = scmp.ne.s32.totalorder %s92, %s93
      %p102 = scmp.eq.s32.totalorder %s17, 0
      %p103 = por %p101, %p102
      %p104 = scmp.ne.s32.totalorder %s92, %s93
      %p105 = scmp.eq.s32.totalorder %s18, 7
      %p106 = por %p104, %p105
      %p108 = scmp.ne.s32.totalorder %s93, %s107
      %p109 = scmp.eq.s32.totalorder %s18, 0
      %p110 = por %p108, %p109
      %s112 = sadd.s32 %s111, 1
      %p115 = scmp.eq.s32.totalorder %s12, 7
      %p116 = scmp.ne.s32.totalorder %s111, %s113
      %p117 = scmp.eq.s32.totalorder %s12, 0
      %p118 = por %p116, %p117
      %p119 = scmp.ne.s32.totalorder %s111, %s113
      %p120 = scmp.eq.s32.totalorder %s17, 7
      %p121 = por %p119, %p120
      %p122 = scmp.ne.s32.totalorder %s113, %s114
      %p123 = scmp.eq.s32.totalorder %s17, 0
      %p124 = por %p122, %p123
      %p125 = scmp.ne.s32.totalorder %s113, %s114
      %p126 = scmp.eq.s32.totalorder %s18, 7
      %p127 = por %p125, %p126
      %p129 = scmp.ne.s32.totalorder %s114, %s128
      %p130 = scmp.eq.s32.totalorder %s18, 0
      %p131 = por %p129, %p130
      %s133 = sadd.s32 %s132, 1
      %p136 = scmp.eq.s32.totalorder %s12, 7
      %p137 = scmp.ne.s32.totalorder %s132, %s134
      %p138 = scmp.eq.s32.totalorder %s12, 0
      %p139 = por %p137, %p138
      %p140 = scmp.ne.s32.totalorder %s132, %s134
      %p141 = scmp.eq.s32.totalorder %s17, 7
      %p142 = por %p140, %p141
      %p143 = scmp.ne.s32.totalorder %s134, %s135
      %p144 = scmp.eq.s32.totalorder %s17, 0
      %p145 = por %p143, %p144
      %p146 = scmp.ne.s32.totalorder %s134, %s135
      %p147 = scmp.eq.s32.totalorder %s18, 7
      %p148 = por %p146, %p147
      %p150 = scmp.ne.s32.totalorder %s135, %s149
      %p151 = scmp.eq.s32.totalorder %s18, 0
      %p152 = por %p150, %p151
      %s154 = sadd.s32 %s153, 1
      %p157 = scmp.eq.s32.totalorder %s12, 7
      %p158 = scmp.ne.s32.totalorder %s153, %s155
      %p159 = scmp.eq.s32.totalorder %s12, 0
      %p160 = por %p158, %p159
      %p161 = scmp.ne.s32.totalorder %s153, %s155
      %p162 = scmp.eq.s32.totalorder %s17, 7
      %p163 = por %p161, %p162
      %p164 = scmp.ne.s32.totalorder %s155, %s156
      %p165 = scmp.eq.s32.totalorder %s17, 0
      %p166 = por %p164, %p165
      %p167 = scmp.ne.s32.totalorder %s155, %s156
      %p168 = scmp.eq.s32.totalorder %s18, 7
      %p169 = por %p167, %p168
      %p171 = scmp.ne.s32.totalorder %s156, %s170
      %p172 = scmp.eq.s32.totalorder %s18, 0
      %p173 = por %p171, %p172
      %s174 = ssub.s32 %s19, %s31
      %s175 = ssub.s32 %s20, %s27
      %s176 = sor.u32 %s174, %s175
      %p177 = scmp.eq.s32.totalorder %s176, 0
      %s179 = sadd.s32 %s178, 1
      %s180 = scalar_select %p177, %s178, %s179
      %p183 = pneg %p177
      %p184 = scmp.eq.s32.totalorder %s12, 7
      %p185 = por %p183, %p184
      %p186 = scmp.ne.s32.totalorder %s178, %s181
      %p187 = scmp.eq.s32.totalorder %s12, 0
      %p188 = por %p186, %p187
      %p189 = scmp.ne.s32.totalorder %s178, %s181
      %p190 = scmp.eq.s32.totalorder %s17, 7
      %p191 = por %p189, %p190
      %p192 = scmp.ne.s32.totalorder %s181, %s182
      %p193 = scmp.eq.s32.totalorder %s17, 0
      %p194 = por %p192, %p193
      %p195 = scmp.ne.s32.totalorder %s181, %s182
      %p196 = scmp.eq.s32.totalorder %s18, 7
      %p197 = por %p195, %p196
      %p199 = scmp.ne.s32.totalorder %s182, %s198
      %p200 = scmp.eq.s32.totalorder %s18, 0
      %p201 = por %p199, %p200
      %p202 = scmp.le.s32.totalorder 1, %s12
      %p203 = scmp.lt.s32.totalorder %s12, 9
      %p204 = pnand %p202, %p203
      %p205 = pneg %p204
      // Predicated region
      $region9: #{encoder_block.6} parent=5 // pred_check
        _
      $region10: #{encoder_block.6} parent=5 // pred_check_branch
        %207 = sbr.rel (%p204) target = $region12
      $region11: #{encoder_block.6} parent=5 // pred_region
        %s208 = ssub.s32 %s12, 1
        // Predicated region
        $region13: #{encoder_block.6} parent=11 // pred_check
          %p209 = pneg %p103
        $region14: #{encoder_block.6} parent=11 // pred_check_branch
          %211 = sbr.rel (%p209) target = $region16
        $region15: #{encoder_block.6} parent=11 // pred_region
          _
        $region16: #{encoder_block.6} parent=11 // pred_fallthru
          _
        // Predicated region
        $region17: #{encoder_block.6} parent=11 // pred_check
          %p212 = pneg %p124
        $region18: #{encoder_block.6} parent=11 // pred_check_branch
          %214 = sbr.rel (%p212) target = $region20
        $region19: #{encoder_block.6} parent=11 // pred_region
          _
        $region20: #{encoder_block.6} parent=11 // pred_fallthru
          _
        // Predicated region
        $region21: #{encoder_block.6} parent=11 // pred_check
          %p215 = pneg %p145
        $region22: #{encoder_block.6} parent=11 // pred_check_branch
          %217 = sbr.rel (%p215) target = $region24
        $region23: #{encoder_block.6} parent=11 // pred_region
          _
        $region24: #{encoder_block.6} parent=11 // pred_fallthru
          _
        // Predicated region
        $region25: #{encoder_block.6} parent=11 // pred_check
          %p218 = pneg %p166
        $region26: #{encoder_block.6} parent=11 // pred_check_branch
          %220 = sbr.rel (%p218) target = $region28
        $region27: #{encoder_block.6} parent=11 // pred_region
          _
        $region28: #{encoder_block.6} parent=11 // pred_fallthru
          _
      $region12: #{encoder_block.6} parent=5 // pred_fallthru
        _
      %p221 = scmp.lt.s32.totalorder %s12, 8
      // Predicated region
      $region29: #{encoder_block.6} parent=5 // pred_check
        %p222 = pneg %p221
      $region30: #{encoder_block.6} parent=5 // pred_check_branch
        %224 = sbr.rel (%p222) target = $region32
      $region31: #{encoder_block.6} parent=5 // pred_region
        // Predicated region
        $region33: #{encoder_block.6} parent=31 // pred_check
          %p225 = pneg %p46
        $region34: #{encoder_block.6} parent=31 // pred_check_branch
          %227 = sbr.rel (%p225) target = $region36
        $region35: #{encoder_block.6} parent=31 // pred_region
          %s228 = sand.u32 %s36, 1
          %s229 = sand.u32 %s36, 1
          %s230 = smul.addr %s229, 16
          %s231 = scalar_lea.vmem [#allocation2], %s230
          %s232 = smul.addr %s19, 20
          %s233 = sadd.s32 %s20, %s232
          %s234 = smul.addr %s233, 4
          %s235 = scalar_lea.vmem %s0, %s234
          // Predicated region
          $region37: #{encoder_block.6} parent=35 // pred_check
            _
          $region38: #{encoder_block.6} parent=35 // pred_check_branch
            %237 = sbr.rel (0) target = $region40
          $region39: #{encoder_block.6} parent=35 // pred_region
            // Predicated region
            $region41: #{encoder_block.6} parent=39 // pred_check
              _
            $region42: #{encoder_block.6} parent=39 // pred_check_branch
              %239 = sbr.rel target = $region44
            $region43: #{encoder_block.6} parent=39 // pred_region
              // Predicated region
              $region56: #{encoder_block.6} parent=43 // pred_check
                _
              $region57: #{encoder_block.6} parent=43 // pred_check_branch
                %261 = sbr.rel (0) target = $region59
              $region58: #{encoder_block.6} parent=43 // pred_region
                loop: start=0, step=1, limit=1
                $region60: #{encoder_block.6} parent=58 // loop_pre_header
                  _
                $region61: #{encoder_block.6} parent=58 // loop_header
                  %s263 = sphi 0, %s267
                  %p264 = scmp.ge.s32.totalorder %s263, 1
                  %s268 = sphi %s235, %s235
                  %s269 = sphi %s231, %s231
                $region62: #{encoder_block.6} parent=58 // loop_header_branch
                  %266 = sbr.rel (%p264) target = $region66
                $region63: #{encoder_block.6} parent=58 // loop_body
                  _
                $region64: #{encoder_block.6} parent=58 // loop_footer
                  %s267 = sadd.s32 1, %s263
                $region65: #{encoder_block.6} parent=58 // loop_footer_branch
                  %262 = sbr.rel target = $region61
                $region66: #{encoder_block.6} parent=58 // loop_exit
                  _
                %s271 = ssub.s32 16, 1
                loop: start=0, step=1, limit=1
                $region67: #{encoder_block.6} parent=58 // loop_pre_header
                  _
                $region68: #{encoder_block.6} parent=58 // loop_header
                  %s273 = sphi 0, %s277
                  %p274 = scmp.ge.s32.totalorder %s273, 1
                  %s278 = sphi %s235, %s235
                  %s279 = sphi %s231, %s231
                $region69: #{encoder_block.6} parent=58 // loop_header_branch
                  %276 = sbr.rel (%p274) target = $region73
                $region70: #{encoder_block.6} parent=58 // loop_body
                  %v280 = vld [vmem:[%s278] sm:%s271]
                  %281 = vst [vmem:[%s279] sm:%s271] %v280
                  %v282 = vld [vmem:[%s278 + $0x14] sm:%s271]
                  %283 = vst [vmem:[%s279 + $0x4] sm:%s271] %v282
                  %v284 = vld [vmem:[%s278 + $0x28] sm:%s271]
                  %285 = vst [vmem:[%s279 + $0x8] sm:%s271] %v284
                  %v286 = vld [vmem:[%s278 + $0x3c] sm:%s271]
                  %287 = vst [vmem:[%s279 + $0xc] sm:%s271] %v286
                $region71: #{encoder_block.6} parent=58 // loop_footer
                  %s277 = sadd.s32 1, %s273
                $region72: #{encoder_block.6} parent=58 // loop_footer_branch
                  %272 = sbr.rel target = $region68
                $region73: #{encoder_block.6} parent=58 // loop_exit
                  _
              $region59: #{encoder_block.6} parent=43 // pred_fallthru
                _
            $region44: #{encoder_block.6} parent=39 // pred_fallthru
              _
            // Predicated region
            $region45: #{encoder_block.6} parent=39 // pred_check
              _
            $region46: #{encoder_block.6} parent=39 // pred_check_branch
              %241 = sbr.rel (0) target = $region48
            $region47: #{encoder_block.6} parent=39 // pred_region
              %s243 = ssub.s32 16, 1
              loop: start=0, step=1, limit=1
              $region49: #{encoder_block.6} parent=47 // loop_pre_header
                _
              $region50: #{encoder_block.6} parent=47 // loop_header
                %s245 = sphi 0, %s249
                %p246 = scmp.ge.s32.totalorder %s245, 1
                %s250 = sphi %s235, %s235
                %s251 = sphi %s231, %s231
              $region51: #{encoder_block.6} parent=47 // loop_header_branch
                %248 = sbr.rel (%p246) target = $region55
              $region52: #{encoder_block.6} parent=47 // loop_body
                %v252 = vld [vmem:[%s250] sm:%s243]
                %253 = vst [vmem:[%s251] sm:%s243] %v252
                %v254 = vld [vmem:[%s250 + $0x14] sm:%s243]
                %255 = vst [vmem:[%s251 + $0x4] sm:%s243] %v254
                %v256 = vld [vmem:[%s250 + $0x28] sm:%s243]
                %257 = vst [vmem:[%s251 + $0x8] sm:%s243] %v256
                %v258 = vld [vmem:[%s250 + $0x3c] sm:%s243]
                %259 = vst [vmem:[%s251 + $0xc] sm:%s243] %v258
              $region53: #{encoder_block.6} parent=47 // loop_footer
                %s249 = sadd.s32 1, %s245
              $region54: #{encoder_block.6} parent=47 // loop_footer_branch
                %244 = sbr.rel target = $region50
              $region55: #{encoder_block.6} parent=47 // loop_exit
                _
            $region48: #{encoder_block.6} parent=39 // pred_fallthru
              _
          $region40: #{encoder_block.6} parent=35 // pred_fallthru
            _
          %288 = vnop
        $region36: #{encoder_block.6} parent=31 // pred_fallthru
          _
        // Predicated region
        $region74: #{encoder_block.6} parent=31 // pred_check
          %p289 = pneg %p76
        $region75: #{encoder_block.6} parent=31 // pred_check_branch
          %291 = sbr.rel (%p289) target = $region77
        $region76: #{encoder_block.6} parent=31 // pred_region
          %s292 = sand.u32 %s66, 1
          %s293 = sand.u32 %s66, 1
          %s294 = smul.addr %s293, 16
          %s295 = scalar_lea.vmem [#allocation3], %s294
          %s296 = sadd.s32 %s20, 1
          %s297 = smul.addr %s19, 20
          %s298 = sadd.s32 %s296, %s297
          %s299 = smul.addr %s298, 4
          %s300 = scalar_lea.vmem %s1, %s299
          // Predicated region
          $region78: #{encoder_block.6} parent=76 // pred_check
            _
          $region79: #{encoder_block.6} parent=76 // pred_check_branch
            %302 = sbr.rel (0) target = $region81
          $region80: #{encoder_block.6} parent=76 // pred_region
            // Predicated region
            $region82: #{encoder_block.6} parent=80 // pred_check
              _
            $region83: #{encoder_block.6} parent=80 // pred_check_branch
              %304 = sbr.rel target = $region85
            $region84: #{encoder_block.6} parent=80 // pred_region
              // Predicated region
              $region97: #{encoder_block.6} parent=84 // pred_check
                _
              $region98: #{encoder_block.6} parent=84 // pred_check_branch
                %326 = sbr.rel (0) target = $region100
              $region99: #{encoder_block.6} parent=84 // pred_region
                loop: start=0, step=1, limit=1
                $region101: #{encoder_block.6} parent=99 // loop_pre_header
                  _
                $region102: #{encoder_block.6} parent=99 // loop_header
                  %s328 = sphi 0, %s332
                  %p329 = scmp.ge.s32.totalorder %s328, 1
                  %s333 = sphi %s300, %s300
                  %s334 = sphi %s295, %s295
                $region103: #{encoder_block.6} parent=99 // loop_header_branch
                  %331 = sbr.rel (%p329) target = $region107
                $region104: #{encoder_block.6} parent=99 // loop_body
                  _
                $region105: #{encoder_block.6} parent=99 // loop_footer
                  %s332 = sadd.s32 1, %s328
                $region106: #{encoder_block.6} parent=99 // loop_footer_branch
                  %327 = sbr.rel target = $region102
                $region107: #{encoder_block.6} parent=99 // loop_exit
                  _
                %s336 = ssub.s32 16, 1
                loop: start=0, step=1, limit=1
                $region108: #{encoder_block.6} parent=99 // loop_pre_header
                  _
                $region109: #{encoder_block.6} parent=99 // loop_header
                  %s338 = sphi 0, %s342
                  %p339 = scmp.ge.s32.totalorder %s338, 1
                  %s343 = sphi %s300, %s300
                  %s344 = sphi %s295, %s295
                $region110: #{encoder_block.6} parent=99 // loop_header_branch
                  %341 = sbr.rel (%p339) target = $region114
                $region111: #{encoder_block.6} parent=99 // loop_body
                  %v345 = vld [vmem:[%s343] sm:%s336]
                  %346 = vst [vmem:[%s344] sm:%s336] %v345
                  %v347 = vld [vmem:[%s343 + $0x14] sm:%s336]
                  %348 = vst [vmem:[%s344 + $0x4] sm:%s336] %v347
                  %v349 = vld [vmem:[%s343 + $0x28] sm:%s336]
                  %350 = vst [vmem:[%s344 + $0x8] sm:%s336] %v349
                  %v351 = vld [vmem:[%s343 + $0x3c] sm:%s336]
                  %352 = vst [vmem:[%s344 + $0xc] sm:%s336] %v351
                $region112: #{encoder_block.6} parent=99 // loop_footer
                  %s342 = sadd.s32 1, %s338
                $region113: #{encoder_block.6} parent=99 // loop_footer_branch
                  %337 = sbr.rel target = $region109
                $region114: #{encoder_block.6} parent=99 // loop_exit
                  _
              $region100: #{encoder_block.6} parent=84 // pred_fallthru
                _
            $region85: #{encoder_block.6} parent=80 // pred_fallthru
              _
            // Predicated region
            $region86: #{encoder_block.6} parent=80 // pred_check
              _
            $region87: #{encoder_block.6} parent=80 // pred_check_branch
              %306 = sbr.rel (0) target = $region89
            $region88: #{encoder_block.6} parent=80 // pred_region
              %s308 = ssub.s32 16, 1
              loop: start=0, step=1, limit=1
              $region90: #{encoder_block.6} parent=88 // loop_pre_header
                _
              $region91: #{encoder_block.6} parent=88 // loop_header
                %s310 = sphi 0, %s314
                %p311 = scmp.ge.s32.totalorder %s310, 1
                %s315 = sphi %s300, %s300
                %s316 = sphi %s295, %s295
              $region92: #{encoder_block.6} parent=88 // loop_header_branch
                %313 = sbr.rel (%p311) target = $region96
              $region93: #{encoder_block.6} parent=88 // loop_body
                %v317 = vld [vmem:[%s315] sm:%s308]
                %318 = vst [vmem:[%s316] sm:%s308] %v317
                %v319 = vld [vmem:[%s315 + $0x14] sm:%s308]
                %320 = vst [vmem:[%s316 + $0x4] sm:%s308] %v319
                %v321 = vld [vmem:[%s315 + $0x28] sm:%s308]
                %322 = vst [vmem:[%s316 + $0x8] sm:%s308] %v321
                %v323 = vld [vmem:[%s315 + $0x3c] sm:%s308]
                %324 = vst [vmem:[%s316 + $0xc] sm:%s308] %v323
              $region94: #{encoder_block.6} parent=88 // loop_footer
                %s314 = sadd.s32 1, %s310
              $region95: #{encoder_block.6} parent=88 // loop_footer_branch
                %309 = sbr.rel target = $region91
              $region96: #{encoder_block.6} parent=88 // loop_exit
                _
            $region89: #{encoder_block.6} parent=80 // pred_fallthru
              _
          $region81: #{encoder_block.6} parent=76 // pred_fallthru
            _
          %353 = vnop
        $region77: #{encoder_block.6} parent=31 // pred_fallthru
          _
      $region32: #{encoder_block.6} parent=5 // pred_fallthru
        _
      %p354 = scmp.le.s32.totalorder 1, %s12
      %p355 = scmp.lt.s32.totalorder %s12, 9
      %p356 = pnand %p354, %p355
      %p357 = pneg %p356
      // Predicated region
      $region115: #{encoder_block.6} parent=5 // pred_check
        _
      $region116: #{encoder_block.6} parent=5 // pred_check_branch
        %359 = sbr.rel (%p356) target = $region118
      $region117: #{encoder_block.6} parent=5 // pred_region
        %s360 = ssub.s32 %s12, 1
        %s361 = sand.u32 %s39, 1
        %s362 = sand.u32 %s39, 1
        %s363 = smul.addr %s362, 16
        %s364 = scalar_lea.vmem [#allocation2], %s363
        // Predicated region
        $region119: #{encoder_block.6} parent=117 // pred_check
          %p365 = pneg %p52
        $region120: #{encoder_block.6} parent=117 // pred_check_branch
          %367 = sbr.rel (%p365) target = $region122
        $region121: #{encoder_block.6} parent=117 // pred_region
          _
        $region122: #{encoder_block.6} parent=117 // pred_fallthru
          _
        %s368 = sand.u32 %s69, 1
        %s369 = sand.u32 %s69, 1
        %s370 = smul.addr %s369, 16
        %s371 = scalar_lea.vmem [#allocation3], %s370
        // Predicated region
        $region123: #{encoder_block.6} parent=117 // pred_check
          %p372 = pneg %p82
        $region124: #{encoder_block.6} parent=117 // pred_check_branch
          %374 = sbr.rel (%p372) target = $region126
        $region125: #{encoder_block.6} parent=117 // pred_region
          _
        $region126: #{encoder_block.6} parent=117 // pred_fallthru
          _
        %s375 = sand.u32 %s39, 1
        %s376 = sand.u32 %s39, 1
        %s377 = smul.addr %s376, 16
        %s378 = scalar_lea.vmem [#allocation2], %s377
        %p379 = pneg %p52
        %p380 = pneg %p49
        %s381 = sand.u32 %s69, 1
        %s382 = sand.u32 %s69, 1
        %s383 = smul.addr %s382, 16
        %s384 = scalar_lea.vmem [#allocation3], %s383
        %p385 = pneg %p82
        %p386 = pneg %p79
        %p387 = pneg %p103
        %p388 = pneg %p100
        %p389 = pneg %p124
        %p390 = pneg %p121
        %p391 = pneg %p145
        %p392 = pneg %p142
        %p393 = pneg %p166
        %p394 = pneg %p163
        %p395 = pneg %p194
        %p396 = pneg %p191
        %s397 = sand.u32 %s181, 1
        %s398 = sand.u32 %s181, 1
        %s399 = smul.addr %s398, 16
        %s400 = scalar_lea.vmem [#allocation4], %s399
        %s401 = sadd.s32 %s22, 1
        %v403 = vld [vmem:[%s364] sm:$0xf]
        %v404 = vld [vmem:[%s364 + $0x4] sm:$0xf]
        %v405 = vld [vmem:[%s364 + $0x8] sm:$0xf]
        %v406 = vld [vmem:[%s364 + $0xc] sm:$0xf]
        %v407 = vld [vmem:[%s371] sm:$0xf]
        %v408 = vld [vmem:[%s371 + $0x4] sm:$0xf]
        %v409 = vld [vmem:[%s371 + $0x8] sm:$0xf]
        %v410 = vld [vmem:[%s371 + $0xc] sm:$0xf]
        %v415 = vunpack.c.l.b16 %v403
        %v416 = vunpack.c.l.b16 %v404
        %v417 = vunpack.c.l.b16 %v405
        %v418 = vunpack.c.l.b16 %v406
        %v419 = vpack.c.b16 %v416, %v415
        %v420 = vpack.c.b16 %v418, %v417
        %v427 = vunpack.c.l.b16 %v407
        %v428 = vunpack.c.l.b16 %v408
        %v429 = vunpack.c.l.b16 %v409
        %v430 = vunpack.c.l.b16 %v410
        %v431 = vpack.c.b16 %v428, %v427
        %v432 = vpack.c.b16 %v430, %v429
        %435 = vrot.lane.b32.xlu0 %v419, 119
        %v436 = vpop.permute.xlu0 %435
        %437 = vrot.lane.b32.xlu0 %v431, 119
        %v438 = vpop.permute.xlu0 %437
        %439 = vrot.lane.b32.xlu0 %v420, 119
        %v440 = vpop.permute.xlu0 %439
        %441 = vrot.lane.b32.xlu0 %v432, 119
        %v442 = vpop.permute.xlu0 %441
        %vm443 = vcmask 973824
        %v444 = vsel %vm443, %v436, %v438
        %v445 = vsel %vm443, %v440, %v442
        %448 = vrot.lane.b32.xlu0 %v419, 110
        %v449 = vpop.permute.xlu0 %448
        %450 = vrot.lane.b32.xlu0 %v431, 110
        %v451 = vpop.permute.xlu0 %450
        %452 = vrot.lane.b32.xlu0 %v420, 110
        %v453 = vpop.permute.xlu0 %452
        %454 = vrot.lane.b32.xlu0 %v432, 110
        %v455 = vpop.permute.xlu0 %454
        %vm456 = vcmask 900096
        %v457 = vsel %vm456, %v449, %v451
        %v458 = vsel %vm456, %v453, %v455
        %461 = vrot.lane.b32.xlu0 %v419, 101
        %v462 = vpop.permute.xlu0 %461
        %463 = vrot.lane.b32.xlu0 %v431, 101
        %v464 = vpop.permute.xlu0 %463
        %465 = vrot.lane.b32.xlu0 %v420, 101
        %v466 = vpop.permute.xlu0 %465
        %467 = vrot.lane.b32.xlu0 %v432, 101
        %v468 = vpop.permute.xlu0 %467
        %vm469 = vcmask 826368
        %v470 = vsel %vm469, %v462, %v464
        %v471 = vsel %vm469, %v466, %v468
        %474 = vrot.lane.b32.xlu0 %v419, 92
        %v475 = vpop.permute.xlu0 %474
        %476 = vrot.lane.b32.xlu0 %v431, 92
        %v477 = vpop.permute.xlu0 %476
        %478 = vrot.lane.b32.xlu0 %v420, 92
        %v479 = vpop.permute.xlu0 %478
        %480 = vrot.lane.b32.xlu0 %v432, 92
        %v481 = vpop.permute.xlu0 %480
        %vm482 = vcmask 752640
        %v483 = vsel %vm482, %v475, %v477
        %v484 = vsel %vm482, %v479, %v481
        %487 = vrot.lane.b32.xlu0 %v419, 83
        %v488 = vpop.permute.xlu0 %487
        %489 = vrot.lane.b32.xlu0 %v431, 83
        %v490 = vpop.permute.xlu0 %489
        %491 = vrot.lane.b32.xlu0 %v420, 83
        %v492 = vpop.permute.xlu0 %491
        %493 = vrot.lane.b32.xlu0 %v432, 83
        %v494 = vpop.permute.xlu0 %493
        %vm495 = vcmask 678912
        %v496 = vsel %vm495, %v488, %v490
        %v497 = vsel %vm495, %v492, %v494
        %500 = vrot.lane.b32.xlu0 %v419, 74
        %v501 = vpop.permute.xlu0 %500
        %502 = vrot.lane.b32.xlu0 %v431, 74
        %v503 = vpop.permute.xlu0 %502
        %504 = vrot.lane.b32.xlu0 %v420, 74
        %v505 = vpop.permute.xlu0 %504
        %506 = vrot.lane.b32.xlu0 %v432, 74
        %v507 = vpop.permute.xlu0 %506
        %vm508 = vcmask 605184
        %v509 = vsel %vm508, %v501, %v503
        %v510 = vsel %vm508, %v505, %v507
        %v513 = vld [vmem:[%s2] sm:$0xff]
        %v514 = vld [vmem:[%s2 + $0x8] sm:$0xff]
        %v515 = vld [vmem:[%s2 + $0x10] sm:$0xff]
        %v516 = vld [vmem:[%s2 + $0x18] sm:$0xff]
        %v517 = vld [vmem:[%s3] sm:$0xff]
        %v518 = vld [vmem:[%s3 + $0x8] sm:$0xff]
        %v519 = vld [vmem:[%s3 + $0x10] sm:$0xff]
        %v520 = vld [vmem:[%s3 + $0x18] sm:$0xff]
        %522 = vset.pattern.permute.xlu0 0
        %523 = vperm.xlu0 %522, %v517
        %v524 = vpop.permute.xlu0 %523
        %527 = vset.pattern.permute.xlu0 0
        %528 = vperm.xlu0 %527, %v518
        %v529 = vpop.permute.xlu0 %528
        %532 = vset.pattern.permute.xlu0 0
        %533 = vperm.xlu0 %532, %v519
        %v534 = vpop.permute.xlu0 %533
        %537 = vset.pattern.permute.xlu0 0
        %538 = vperm.xlu0 %537, %v520
        %v539 = vpop.permute.xlu0 %538
        %v545 = vunpack.c.l.b16 %v513
        %v546 = vunpack.c.h.b16 %v513
        %v547 = vunpack.c.l.b16 %v514
        %v548 = vunpack.c.h.b16 %v514
        %v549 = vunpack.c.l.b16 %v515
        %v550 = vunpack.c.h.b16 %v515
        %v551 = vunpack.c.l.b16 %v516
        %v552 = vunpack.c.h.b16 %v516
        %v553 = vpack.c.b16 %v547, %v545
        %v554 = vpack.c.b16 %v548, %v546
        %v555 = vpack.c.b16 %v551, %v549
        %v556 = vpack.c.b16 %v552, %v550
        %vm559 = vcmask 785408
        %v561 = vsel %vm559, %v554, 0
        %v564 = vsel %vm559, %v556, 0
        %566 = vmatpush.bf16.msra.mxu0 %v471
        %567 = vmatpush.bf16.msra.mxu0 %v470
        %568 = vmatpush.bf16.msra.mxu0 %v458
        %569 = vmatpush.bf16.msra.mxu0 %v457
        %570 = vmatpush.bf16.msra.mxu0 %v445
        %571 = vmatpush.bf16.msra.mxu0 %v444
        %572 = vmatpush.bf16.msra.mxu0 %v420
        %573 = vmatpush.bf16.msra.mxu0 %v419
        %574 = vmatmul.bf16.gmra.mxu0 %v553
        %v575 = vpop.f32.mrf.mxu0
        %v576 = vadd.f32 %v524, %v575
        %v577 = vpop.f32.mrf.mxu0
        %v578 = vadd.f32 %v529, %v577
        %579 = vmatmul.bf16.gmra.mxu0 %v555
        %v580 = vpop.f32.mrf.mxu0
        %v581 = vadd.f32 %v534, %v580
        %v582 = vpop.f32.mrf.mxu0
        %v583 = vadd.f32 %v539, %v582
        %584 = vdwg.mxu0
        %585 = vmatpush.bf16.msra.mxu0 0
        %586 = vmatpush.bf16.msra.mxu0 0
        %587 = vmatpush.bf16.msra.mxu0 %v510
        %588 = vmatpush.bf16.msra.mxu0 %v509
        %589 = vmatpush.bf16.msra.mxu0 %v497
        %590 = vmatpush.bf16.msra.mxu0 %v496
        %591 = vmatpush.bf16.msra.mxu0 %v484
        %592 = vmatpush.bf16.msra.mxu0 %v483
        %593 = vmatmul.bf16.gmra.mxu0 %v561
        %v594 = vpop.f32.mrf.mxu0
        %v595 = vadd.f32 %v576, %v594
        %v596 = vpop.f32.mrf.mxu0
        %v597 = vadd.f32 %v578, %v596
        %598 = vmatmul.bf16.gmra.mxu0 %v564
        %v599 = vpop.f32.mrf.mxu0
        %v600 = vadd.f32 %v581, %v599
        %v601 = vpop.f32.mrf.mxu0
        %v602 = vadd.f32 %v583, %v601
        %603 = vdwg.mxu0
        %vm604 = vcmp.gt.f32.partialorder %v595, 0.0
        %vm605 = vcmp.gt.f32.partialorder %v597, 0.0
        %vm606 = vcmp.gt.f32.partialorder %v600, 0.0
        %vm607 = vcmp.gt.f32.partialorder %v602, 0.0
        %v608 = vmin.f32 %v595, 0.0
        %v609 = vmin.f32 %v597, 0.0
        %v610 = vmin.f32 %v600, 0.0
        %v611 = vmin.f32 %v602, 0.0
        %v612 = vmul.f32 %v608, 1.442695
        %v613 = vpow.pop %v612
        %v614 = vmul.f32 %v609, 1.442695
        %v615 = vpow.pop %v614
        %v616 = vmul.f32 %v610, 1.442695
        %v617 = vpow.pop %v616
        %v618 = vmul.f32 %v611, 1.442695
        %v619 = vpow.pop %v618
        %v620 = vsub.f32 %v613, 1.0
        %v621 = vsub.f32 %v615, 1.0
        %v622 = vsub.f32 %v617, 1.0
        %v623 = vsub.f32 %v619, 1.0
        %v624 = vsel %vm604, %v595, %v620
        %v625 = vsel %vm605, %v597, %v621
        %v626 = vsel %vm606, %v600, %v622
        %v627 = vsel %vm607, %v602, %v623
        %v628 = vld [vmem:[%s4] sm:$0xf]
        %v629 = vld [vmem:[%s4 + $0x4] sm:$0xf]
        %v630 = vld [vmem:[%s4 + $0x8] sm:$0xf]
        %v631 = vld [vmem:[%s4 + $0xc] sm:$0xf]
        %v632 = vpack.c.bf16 %v625, %v624
        %v633 = vpack.c.bf16 %v627, %v626
        %v634 = vld [vmem:[%s5] sm:$0xff]
        %v635 = vld [vmem:[%s5 + $0x8] sm:$0xff]
        %v636 = vld [vmem:[%s5 + $0x10] sm:$0xff]
        %v637 = vld [vmem:[%s5 + $0x18] sm:$0xff]
        %639 = vset.pattern.permute.xlu0 0
        %640 = vperm.xlu0 %639, %v634
        %v641 = vpop.permute.xlu0 %640
        %644 = vset.pattern.permute.xlu0 0
        %645 = vperm.xlu0 %644, %v635
        %v646 = vpop.permute.xlu0 %645
        %649 = vset.pattern.permute.xlu0 0
        %650 = vperm.xlu0 %649, %v636
        %v651 = vpop.permute.xlu0 %650
        %654 = vset.pattern.permute.xlu0 0
        %655 = vperm.xlu0 %654, %v637
        %v656 = vpop.permute.xlu0 %655
        %v662 = vunpack.c.l.b16 %v628
        %v663 = vunpack.c.l.b16 %v629
        %v664 = vunpack.c.l.b16 %v630
        %v665 = vunpack.c.l.b16 %v631
        %v666 = vpack.c.b16 %v663, %v662
        %v667 = vpack.c.b16 %v665, %v664
        %vm668 = vcmask 261120
        %v670 = vsel %vm668, %v666, 0
        %v673 = vsel %vm668, %v667, 0
        %675 = vmatpush.bf16.msra.mxu0 0
        %676 = vmatpush.bf16.msra.mxu0 0
        %677 = vmatpush.bf16.msra.mxu0 0
        %678 = vmatpush.bf16.msra.mxu0 0
        %679 = vmatpush.bf16.msra.mxu0 0
        %680 = vmatpush.bf16.msra.mxu0 0
        %681 = vmatpush.bf16.msra.mxu0 %v633
        %682 = vmatpush.bf16.msra.mxu0 %v632
        %683 = vmatmul.bf16.gmra.mxu0 %v670
        %v684 = vpop.f32.mrf.mxu0
        %v685 = vadd.f32 %v641, %v684
        %v686 = vpop.f32.mrf.mxu0
        %v687 = vadd.f32 %v646, %v686
        %688 = vmatmul.bf16.gmra.mxu0 %v673
        %v689 = vpop.f32.mrf.mxu0
        %v690 = vadd.f32 %v651, %v689
        %v691 = vpop.f32.mrf.mxu0
        %v692 = vadd.f32 %v656, %v691
        %693 = vdwg.mxu0
        %v694 = vunpack.c.l.bf16 %v419
        %v695 = vunpack.c.l.bf16 %v431
        %v696 = vunpack.c.h.bf16 %v419
        %v697 = vunpack.c.h.bf16 %v431
        %v698 = vunpack.c.l.bf16 %v420
        %v699 = vunpack.c.l.bf16 %v432
        %v700 = vunpack.c.h.bf16 %v420
        %v701 = vunpack.c.h.bf16 %v432
        %706 = vrot.lane.b32.xlu0 %v685, 54
        %v707 = vpop.permute.xlu0 %706
        %708 = vrot.lane.b32.xlu0 %v687, 54
        %v709 = vpop.permute.xlu0 %708
        %710 = vrot.lane.b32.xlu0 %v690, 54
        %v711 = vpop.permute.xlu0 %710
        %712 = vrot.lane.b32.xlu0 %v692, 54
        %v713 = vpop.permute.xlu0 %712
        %v718 = vadd.f32 %v694, %v707
        %v719 = vadd.f32 %v695, %v707
        %v720 = vadd.f32 %v696, %v709
        %v721 = vadd.f32 %v697, %v709
        %v722 = vadd.f32 %v698, %v711
        %v723 = vadd.f32 %v699, %v711
        %v724 = vadd.f32 %v700, %v713
        %v725 = vadd.f32 %v701, %v713
        %vm726 = vcmp.gt.f32.partialorder %v718, 0.0
        %vm727 = vcmp.gt.f32.partialorder %v719, 0.0
        %vm728 = vcmp.gt.f32.partialorder %v720, 0.0
        %vm729 = vcmp.gt.f32.partialorder %v721, 0.0
        %vm730 = vcmp.gt.f32.partialorder %v722, 0.0
        %vm731 = vcmp.gt.f32.partialorder %v723, 0.0
        %vm732 = vcmp.gt.f32.partialorder %v724, 0.0
        %vm733 = vcmp.gt.f32.partialorder %v725, 0.0
        %v734 = vmin.f32 %v718, 0.0
        %v735 = vmin.f32 %v719, 0.0
        %v736 = vmin.f32 %v720, 0.0
        %v737 = vmin.f32 %v721, 0.0
        %v738 = vmin.f32 %v722, 0.0
        %v739 = vmin.f32 %v723, 0.0
        %v740 = vmin.f32 %v724, 0.0
        %v741 = vmin.f32 %v725, 0.0
        %v742 = vmul.f32 %v734, 1.442695
        %v743 = vpow.pop %v742
        %v744 = vmul.f32 %v735, 1.442695
        %v745 = vpow.pop %v744
        %v746 = vmul.f32 %v736, 1.442695
        %v747 = vpow.pop %v746
        %v748 = vmul.f32 %v737, 1.442695
        %v749 = vpow.pop %v748
        %v750 = vmul.f32 %v738, 1.442695
        %v751 = vpow.pop %v750
        %v752 = vmul.f32 %v739, 1.442695
        %v753 = vpow.pop %v752
        %v754 = vmul.f32 %v740, 1.442695
        %v755 = vpow.pop %v754
        %v756 = vmul.f32 %v741, 1.442695
        %v757 = vpow.pop %v756
        %v758 = vsub.f32 %v743, 1.0
        %v759 = vsub.f32 %v745, 1.0
        %v760 = vsub.f32 %v747, 1.0
        %v761 = vsub.f32 %v749, 1.0
        %v762 = vsub.f32 %v751, 1.0
        %v763 = vsub.f32 %v753, 1.0
        %v764 = vsub.f32 %v755, 1.0
        %v765 = vsub.f32 %v757, 1.0
        %v766 = vsel %vm726, %v718, %v758
        %v767 = vsel %vm727, %v719, %v759
        %v768 = vsel %vm728, %v720, %v760
        %v769 = vsel %vm729, %v721, %v761
        %v770 = vsel %vm730, %v722, %v762
        %v771 = vsel %vm731, %v723, %v763
        %v772 = vsel %vm732, %v724, %v764
        %v773 = vsel %vm733, %v725, %v765
        %v774 = vpack.c.bf16 %v767, %v766
        %v775 = vpack.c.bf16 %v769, %v768
        %v776 = vpack.c.bf16 %v771, %v770
        %v777 = vpack.c.bf16 %v773, %v772
        %782 = vrot.lane.b32.xlu0 %v774, 74
        %v783 = vpop.permute.xlu0 %782
        %784 = vrot.lane.b32.xlu0 %v775, 74
        %v785 = vpop.permute.xlu0 %784
        %786 = vrot.lane.b32.xlu0 %v776, 74
        %v787 = vpop.permute.xlu0 %786
        %788 = vrot.lane.b32.xlu0 %v777, 74
        %v789 = vpop.permute.xlu0 %788
        %v790 = vrot.slane %v783, 4
        %v791 = vrot.slane %v785, 4
        %v792 = vrot.slane %v787, 4
        %v793 = vrot.slane %v789, 4
        %v794 = vsel %vm508, %v783, %v790
        %v795 = vsel %vm508, %v785, %v791
        %v796 = vsel %vm508, %v787, %v792
        %v797 = vsel %vm508, %v789, %v793
        %802 = vst [vmem:[%s400] sm:$0xf] %v794
        %803 = vst [vmem:[%s400 + $0x4] sm:$0xf] %v795
        %804 = vst [vmem:[%s400 + $0x8] sm:$0xf] %v796
        %805 = vst [vmem:[%s400 + $0xc] sm:$0xf] %v797
        %s806 = sand.u32 %s181, 1
        %s807 = sand.u32 %s181, 1
        %s808 = smul.addr %s807, 16
        %s809 = scalar_lea.vmem [#allocation4], %s808
        // Predicated region
        $region127: #{encoder_block.6} parent=117 // pred_check
          %p810 = pneg %p191
        $region128: #{encoder_block.6} parent=117 // pred_check_branch
          %812 = sbr.rel (%p810) target = $region130
        $region129: #{encoder_block.6} parent=117 // pred_region
          %s813 = smul.addr %s21, 16
          %s814 = sadd.s32 %s22, %s813
          %s815 = smul.addr %s814, 4
          %s816 = scalar_lea.vmem %s6, %s815
          // Predicated region
          $region131: #{encoder_block.6} parent=129 // pred_check
            _
          $region132: #{encoder_block.6} parent=129 // pred_check_branch
            %818 = sbr.rel (0) target = $region134
          $region133: #{encoder_block.6} parent=129 // pred_region
            // Predicated region
            $region135: #{encoder_block.6} parent=133 // pred_check
              _
            $region136: #{encoder_block.6} parent=133 // pred_check_branch
              %820 = sbr.rel target = $region138
            $region137: #{encoder_block.6} parent=133 // pred_region
              // Predicated region
              $region150: #{encoder_block.6} parent=137 // pred_check
                _
              $region151: #{encoder_block.6} parent=137 // pred_check_branch
                %842 = sbr.rel (0) target = $region153
              $region152: #{encoder_block.6} parent=137 // pred_region
                loop: start=0, step=1, limit=1
                $region154: #{encoder_block.6} parent=152 // loop_pre_header
                  _
                $region155: #{encoder_block.6} parent=152 // loop_header
                  %s844 = sphi 0, %s848
                  %p845 = scmp.ge.s32.totalorder %s844, 1
                  %s849 = sphi %s809, %s809
                  %s850 = sphi %s816, %s816
                $region156: #{encoder_block.6} parent=152 // loop_header_branch
                  %847 = sbr.rel (%p845) target = $region160
                $region157: #{encoder_block.6} parent=152 // loop_body
                  _
                $region158: #{encoder_block.6} parent=152 // loop_footer
                  %s848 = sadd.s32 1, %s844
                $region159: #{encoder_block.6} parent=152 // loop_footer_branch
                  %843 = sbr.rel target = $region155
                $region160: #{encoder_block.6} parent=152 // loop_exit
                  _
                %s852 = ssub.s32 16, 1
                loop: start=0, step=1, limit=1
                $region161: #{encoder_block.6} parent=152 // loop_pre_header
                  _
                $region162: #{encoder_block.6} parent=152 // loop_header
                  %s854 = sphi 0, %s858
                  %p855 = scmp.ge.s32.totalorder %s854, 1
                  %s859 = sphi %s809, %s809
                  %s860 = sphi %s816, %s816
                $region163: #{encoder_block.6} parent=152 // loop_header_branch
                  %857 = sbr.rel (%p855) target = $region167
                $region164: #{encoder_block.6} parent=152 // loop_body
                  %v861 = vld [vmem:[%s859] sm:%s852]
                  %862 = vst [vmem:[%s860] sm:%s852] %v861
                  %v863 = vld [vmem:[%s859 + $0x4] sm:%s852]
                  %864 = vst [vmem:[%s860 + $0x10] sm:%s852] %v863
                  %v865 = vld [vmem:[%s859 + $0x8] sm:%s852]
                  %866 = vst [vmem:[%s860 + $0x20] sm:%s852] %v865
                  %v867 = vld [vmem:[%s859 + $0xc] sm:%s852]
                  %868 = vst [vmem:[%s860 + $0x30] sm:%s852] %v867
                $region165: #{encoder_block.6} parent=152 // loop_footer
                  %s858 = sadd.s32 1, %s854
                $region166: #{encoder_block.6} parent=152 // loop_footer_branch
                  %853 = sbr.rel target = $region162
                $region167: #{encoder_block.6} parent=152 // loop_exit
                  _
              $region153: #{encoder_block.6} parent=137 // pred_fallthru
                _
            $region138: #{encoder_block.6} parent=133 // pred_fallthru
              _
            // Predicated region
            $region139: #{encoder_block.6} parent=133 // pred_check
              _
            $region140: #{encoder_block.6} parent=133 // pred_check_branch
              %822 = sbr.rel (0) target = $region142
            $region141: #{encoder_block.6} parent=133 // pred_region
              %s824 = ssub.s32 16, 1
              loop: start=0, step=1, limit=1
              $region143: #{encoder_block.6} parent=141 // loop_pre_header
                _
              $region144: #{encoder_block.6} parent=141 // loop_header
                %s826 = sphi 0, %s830
                %p827 = scmp.ge.s32.totalorder %s826, 1
                %s831 = sphi %s809, %s809
                %s832 = sphi %s816, %s816
              $region145: #{encoder_block.6} parent=141 // loop_header_branch
                %829 = sbr.rel (%p827) target = $region149
              $region146: #{encoder_block.6} parent=141 // loop_body
                %v833 = vld [vmem:[%s831] sm:%s824]
                %834 = vst [vmem:[%s832] sm:%s824] %v833
                %v835 = vld [vmem:[%s831 + $0x4] sm:%s824]
                %836 = vst [vmem:[%s832 + $0x10] sm:%s824] %v835
                %v837 = vld [vmem:[%s831 + $0x8] sm:%s824]
                %838 = vst [vmem:[%s832 + $0x20] sm:%s824] %v837
                %v839 = vld [vmem:[%s831 + $0xc] sm:%s824]
                %840 = vst [vmem:[%s832 + $0x30] sm:%s824] %v839
              $region147: #{encoder_block.6} parent=141 // loop_footer
                %s830 = sadd.s32 1, %s826
              $region148: #{encoder_block.6} parent=141 // loop_footer_branch
                %825 = sbr.rel target = $region144
              $region149: #{encoder_block.6} parent=141 // loop_exit
                _
            $region142: #{encoder_block.6} parent=133 // pred_fallthru
              _
          $region134: #{encoder_block.6} parent=129 // pred_fallthru
            _
          %869 = vnop
        $region130: #{encoder_block.6} parent=117 // pred_fallthru
          _
      $region118: #{encoder_block.6} parent=5 // pred_fallthru
        _
      %p870 = scmp.le.s32.totalorder 2, %s12
      // Predicated region
      $region168: #{encoder_block.6} parent=5 // pred_check
        %p871 = pneg %p870
      $region169: #{encoder_block.6} parent=5 // pred_check_branch
        %873 = sbr.rel (%p871) target = $region171
      $region170: #{encoder_block.6} parent=5 // pred_region
        %s874 = ssub.s32 %s12, 2
        // Predicated region
        $region172: #{encoder_block.6} parent=170 // pred_check
          %p875 = pneg %p197
        $region173: #{encoder_block.6} parent=170 // pred_check_branch
          %877 = sbr.rel (%p875) target = $region175
        $region174: #{encoder_block.6} parent=170 // pred_region
          %s878 = sand.u32 %s182, 1
          %s879 = sand.u32 %s182, 1
          %s880 = smul.addr %s879, 16
          %s881 = scalar_lea.vmem [#allocation4], %s880
        $region175: #{encoder_block.6} parent=170 // pred_fallthru
          _
      $region171: #{encoder_block.6} parent=5 // pred_fallthru
        _
    $region6: #{encoder_block.6} parent=1 // loop_footer
      %s16 = sadd.s32 1, %s12
    $region7: #{encoder_block.6} parent=1 // loop_footer_branch
      %11 = sbr.rel target = $region3
    $region8: #{encoder_block.6} parent=1 // loop_exit
      _

// kernel: encoder_block.5
$region0: #{encoder_block.5}
  #allocation0 [shape = 'u32[]', space=smem, size = 0x4, offset = 0x4, fixed_abs, tag = 'smem constant byte address 0x4 - core index']
  #allocation1 [shape = 'u32[72,128]{1,0:T(1,128)}', space=vmem, size = 0x9000, scoped, tag = 'internal scratch']
  %s0 = inlined_call_operand.vmem [shape: bf16[2,32,640], index: 0, kind: input, shape index: {}, may-alias: {0,1}]
  %s1 = inlined_call_operand.vmem [shape: bf16[2,32,640], index: 1, kind: input, shape index: {}, may-alias: {0,1}]
  %s2 = inlined_call_operand.vmem [shape: bf16[32,224], index: 2, kind: input, shape index: {}]
  %s3 = inlined_call_operand.vmem [shape: f32[32,1], index: 3, kind: input, shape index: {}]
  %s4 = inlined_call_operand.vmem [shape: bf16[32,32], index: 4, kind: input, shape index: {}]
  %s5 = inlined_call_operand.vmem [shape: f32[32,1], index: 5, kind: input, shape index: {}]
  %s6 = inlined_call_operand.vmem [shape: bf16[2,32,512], index: 6, kind: output, shape index: {}]
  %s7 = sld [smem:[#allocation0]]
  $region176: #{encoder_block.5} parent=0
    _
  %s9 = ssub.s32 1, %s7
  %s10 = scalar_select 0, %s9, %s7
  $region1: #{encoder_block.5} parent=0
    #allocation2 [shape = 'u8[16384]{0}', space=vmem, size = 0x4000, scoped, tag = 'input window, operand 0']
    #allocation3 [shape = 'u8[16384]{0}', space=vmem, size = 0x4000, scoped, tag = 'input window, operand 1']
    #allocation4 [shape = 'u8[16384]{0}', space=vmem, size = 0x4000, scoped, tag = 'output window, operand 0']
    loop: start=0, step=1, limit=10
    $region2: #{encoder_block.5} parent=1 // loop_pre_header
      _
    $region3: #{encoder_block.5} parent=1 // loop_header
      %s12 = sphi 0, %s16
      %p13 = scmp.ge.s32.totalorder %s12, 10
      %s19 = sphi 0, %s31
      %s20 = sphi 0, %s27
      %s21 = sphi 0, %s19
      %s22 = sphi 0, %s20
      %s23 = sphi 0, %s21
      %s24 = sphi 0, %s22
      %s36 = sphi 0, %s38
      %s39 = sphi 0, %s36
      %s40 = sphi 0, %s39
      %s56 = sphi 0, %s40
      %s66 = sphi 0, %s68
      %s69 = sphi 0, %s66
      %s70 = sphi 0, %s69
      %s86 = sphi 0, %s70
      %s90 = sphi 0, %s90
      %s92 = sphi 0, %s90
      %s93 = sphi 0, %s92
      %s107 = sphi 0, %s93
      %s111 = sphi 0, %s111
      %s113 = sphi 0, %s111
      %s114 = sphi 0, %s113
      %s128 = sphi 0, %s114
      %s132 = sphi 0, %s132
      %s134 = sphi 0, %s132
      %s135 = sphi 0, %s134
      %s149 = sphi 0, %s135
      %s153 = sphi 0, %s153
      %s155 = sphi 0, %s153
      %s156 = sphi 0, %s155
      %s170 = sphi 0, %s156
      %s178 = sphi 0, %s180
      %s181 = sphi 0, %s178
      %s182 = sphi 0, %s181
      %s198 = sphi 0, %s182
    $region4: #{encoder_block.5} parent=1 // loop_header_branch
      %15 = sbr.rel (%p13) target = $region8
    $region5: #{encoder_block.5} parent=1 // loop_body
      %s17 = ssub.s32 %s12, 1
      %s18 = ssub.s32 %s12, 2
      %s25 = sadd.s32 1, %s20
      %p26 = scmp.ge.s32.totalorder %s25, 4
      %s27 = scalar_select %p26, 0, %s25
      %s28 = sadd.s32 1, %s19
      %s29 = scalar_select %p26, %s28, %s19
      %p30 = scmp.ge.s32.totalorder %s29, 2
      %s31 = scalar_select %p30, 0, %s29
      %s32 = ssub.s32 %s19, %s31
      %s33 = ssub.s32 %s20, %s27
      %s34 = sor.u32 %s32, %s33
      %p35 = scmp.eq.s32.totalorder %s34, 0
      %s37 = sadd.s32 %s36, 1
      %s38 = scalar_select %p35, %s36, %s37
      %p41 = pneg %p35
      %p42 = scmp.eq.s32.totalorder %s12, 7
      %p43 = por %p41, %p42
      %p44 = scmp.ne.s32.totalorder %s36, %s39
      %p45 = scmp.eq.s32.totalorder %s12, 0
      %p46 = por %p44, %p45
      %p47 = scmp.ne.s32.totalorder %s36, %s39
      %p48 = scmp.eq.s32.totalorder %s17, 7
      %p49 = por %p47, %p48
      %p50 = scmp.ne.s32.totalorder %s39, %s40
      %p51 = scmp.eq.s32.totalorder %s17, 0
      %p52 = por %p50, %p51
      %p53 = scmp.ne.s32.totalorder %s39, %s40
      %p54 = scmp.eq.s32.totalorder %s18, 7
      %p55 = por %p53, %p54
      %p57 = scmp.ne.s32.totalorder %s40, %s56
      %p58 = scmp.eq.s32.totalorder %s18, 0
      %p59 = por %p57, %p58
      %s60 = sadd.s32 %s20, 1
      %s61 = sadd.s32 %s27, 1
      %s62 = ssub.s32 %s19, %s31
      %s63 = ssub.s32 %s60, %s61
      %s64 = sor.u32 %s62, %s63
      %p65 = scmp.eq.s32.totalorder %s64, 0
      %s67 = sadd.s32 %s66, 1
      %s68 = scalar_select %p65, %s66, %s67
      %p71 = pneg %p65
      %p72 = scmp.eq.s32.totalorder %s12, 7
      %p73 = por %p71, %p72
      %p74 = scmp.ne.s32.totalorder %s66, %s69
      %p75 = scmp.eq.s32.totalorder %s12, 0
      %p76 = por %p74, %p75
      %p77 = scmp.ne.s32.totalorder %s66, %s69
      %p78 = scmp.eq.s32.totalorder %s17, 7
      %p79 = por %p77, %p78
      %p80 = scmp.ne.s32.totalorder %s69, %s70
      %p81 = scmp.eq.s32.totalorder %s17, 0
      %p82 = por %p80, %p81
      %p83 = scmp.ne.s32.totalorder %s69, %s70
      %p84 = scmp.eq.s32.totalorder %s18, 7
      %p85 = por %p83, %p84
      %p87 = scmp.ne.s32.totalorder %s70, %s86
      %p88 = scmp.eq.s32.totalorder %s18, 0
      %p89 = por %p87, %p88
      %s91 = sadd.s32 %s90, 1
      %p94 = scmp.eq.s32.totalorder %s12, 7
      %p95 = scmp.ne.s32.totalorder %s90, %s92
      %p96 = scmp.eq.s32.totalorder %s12, 0
      %p97 = por %p95, %p96
      %p98 = scmp.ne.s32.totalorder %s90, %s92
      %p99 = scmp.eq.s32.totalorder %s17, 7
      %p100 = por %p98, %p99
      %p101 = scmp.ne.s32.totalorder %s92, %s93
      %p102 = scmp.eq.s32.totalorder %s17, 0
      %p103 = por %p101, %p102
      %p104 = scmp.ne.s32.totalorder %s92, %s93
      %p105 = scmp.eq.s32.totalorder %s18, 7
      %p106 = por %p104, %p105
      %p108 = scmp.ne.s32.totalorder %s93, %s107
      %p109 = scmp.eq.s32.totalorder %s18, 0
      %p110 = por %p108, %p109
      %s112 = sadd.s32 %s111, 1
      %p115 = scmp.eq.s32.totalorder %s12, 7
      %p116 = scmp.ne.s32.totalorder %s111, %s113
      %p117 = scmp.eq.s32.totalorder %s12, 0
      %p118 = por %p116, %p117
      %p119 = scmp.ne.s32.totalorder %s111, %s113
      %p120 = scmp.eq.s32.totalorder %s17, 7
      %p121 = por %p119, %p120
      %p122 = scmp.ne.s32.totalorder %s113, %s114
      %p123 = scmp.eq.s32.totalorder %s17, 0
      %p124 = por %p122, %p123
      %p125 = scmp.ne.s32.totalorder %s113, %s114
      %p126 = scmp.eq.s32.totalorder %s18, 7
      %p127 = por %p125, %p126
      %p129 = scmp.ne.s32.totalorder %s114, %s128
      %p130 = scmp.eq.s32.totalorder %s18, 0
      %p131 = por %p129, %p130
      %s133 = sadd.s32 %s132, 1
      %p136 = scmp.eq.s32.totalorder %s12, 7
      %p137 = scmp.ne.s32.totalorder %s132, %s134
      %p138 = scmp.eq.s32.totalorder %s12, 0
      %p139 = por %p137, %p138
      %p140 = scmp.ne.s32.totalorder %s132, %s134
      %p141 = scmp.eq.s32.totalorder %s17, 7
      %p142 = por %p140, %p141
      %p143 = scmp.ne.s32.totalorder %s134, %s135
      %p144 = scmp.eq.s32.totalorder %s17, 0
      %p145 = por %p143, %p144
      %p146 = scmp.ne.s32.totalorder %s134, %s135
      %p147 = scmp.eq.s32.totalorder %s18, 7
      %p148 = por %p146, %p147
      %p150 = scmp.ne.s32.totalorder %s135, %s149
      %p151 = scmp.eq.s32.totalorder %s18, 0
      %p152 = por %p150, %p151
      %s154 = sadd.s32 %s153, 1
      %p157 = scmp.eq.s32.totalorder %s12, 7
      %p158 = scmp.ne.s32.totalorder %s153, %s155
      %p159 = scmp.eq.s32.totalorder %s12, 0
      %p160 = por %p158, %p159
      %p161 = scmp.ne.s32.totalorder %s153, %s155
      %p162 = scmp.eq.s32.totalorder %s17, 7
      %p163 = por %p161, %p162
      %p164 = scmp.ne.s32.totalorder %s155, %s156
      %p165 = scmp.eq.s32.totalorder %s17, 0
      %p166 = por %p164, %p165
      %p167 = scmp.ne.s32.totalorder %s155, %s156
      %p168 = scmp.eq.s32.totalorder %s18, 7
      %p169 = por %p167, %p168
      %p171 = scmp.ne.s32.totalorder %s156, %s170
      %p172 = scmp.eq.s32.totalorder %s18, 0
      %p173 = por %p171, %p172
      %s174 = ssub.s32 %s19, %s31
      %s175 = ssub.s32 %s20, %s27
      %s176 = sor.u32 %s174, %s175
      %p177 = scmp.eq.s32.totalorder %s176, 0
      %s179 = sadd.s32 %s178, 1
      %s180 = scalar_select %p177, %s178, %s179
      %p183 = pneg %p177
      %p184 = scmp.eq.s32.totalorder %s12, 7
      %p185 = por %p183, %p184
      %p186 = scmp.ne.s32.totalorder %s178, %s181
      %p187 = scmp.eq.s32.totalorder %s12, 0
      %p188 = por %p186, %p187
      %p189 = scmp.ne.s32.totalorder %s178, %s181
      %p190 = scmp.eq.s32.totalorder %s17, 7
      %p191 = por %p189, %p190
      %p192 = scmp.ne.s32.totalorder %s181, %s182
      %p193 = scmp.eq.s32.totalorder %s17, 0
      %p194 = por %p192, %p193
      %p195 = scmp.ne.s32.totalorder %s181, %s182
      %p196 = scmp.eq.s32.totalorder %s18, 7
      %p197 = por %p195, %p196
      %p199 = scmp.ne.s32.totalorder %s182, %s198
      %p200 = scmp.eq.s32.totalorder %s18, 0
      %p201 = por %p199, %p200
      %p202 = scmp.le.s32.totalorder 1, %s12
      %p203 = scmp.lt.s32.totalorder %s12, 9
      %p204 = pnand %p202, %p203
      %p205 = pneg %p204
      // Predicated region
      $region9: #{encoder_block.5} parent=5 // pred_check
        _
      $region10: #{encoder_block.5} parent=5 // pred_check_branch
        %207 = sbr.rel (%p204) target = $region12
      $region11: #{encoder_block.5} parent=5 // pred_region
        %s208 = ssub.s32 %s12, 1
        // Predicated region
        $region13: #{encoder_block.5} parent=11 // pred_check
          %p209 = pneg %p103
        $region14: #{encoder_block.5} parent=11 // pred_check_branch
          %211 = sbr.rel (%p209) target = $region16
        $region15: #{encoder_block.5} parent=11 // pred_region
          _
        $region16: #{encoder_block.5} parent=11 // pred_fallthru
          _
        // Predicated region
        $region17: #{encoder_block.5} parent=11 // pred_check
          %p212 = pneg %p124
        $region18: #{encoder_block.5} parent=11 // pred_check_branch
          %214 = sbr.rel (%p212) target = $region20
        $region19: #{encoder_block.5} parent=11 // pred_region
          _
        $region20: #{encoder_block.5} parent=11 // pred_fallthru
          _
        // Predicated region
        $region21: #{encoder_block.5} parent=11 // pred_check
          %p215 = pneg %p145
        $region22: #{encoder_block.5} parent=11 // pred_check_branch
          %217 = sbr.rel (%p215) target = $region24
        $region23: #{encoder_block.5} parent=11 // pred_region
          _
        $region24: #{encoder_block.5} parent=11 // pred_fallthru
          _
        // Predicated region
        $region25: #{encoder_block.5} parent=11 // pred_check
          %p218 = pneg %p166
        $region26: #{encoder_block.5} parent=11 // pred_check_branch
          %220 = sbr.rel (%p218) target = $region28
        $region27: #{encoder_block.5} parent=11 // pred_region
          _
        $region28: #{encoder_block.5} parent=11 // pred_fallthru
          _
      $region12: #{encoder_block.5} parent=5 // pred_fallthru
        _
      %p221 = scmp.lt.s32.totalorder %s12, 8
      // Predicated region
      $region29: #{encoder_block.5} parent=5 // pred_check
        %p222 = pneg %p221
      $region30: #{encoder_block.5} parent=5 // pred_check_branch
        %224 = sbr.rel (%p222) target = $region32
      $region31: #{encoder_block.5} parent=5 // pred_region
        // Predicated region
        $region33: #{encoder_block.5} parent=31 // pred_check
          %p225 = pneg %p46
        $region34: #{encoder_block.5} parent=31 // pred_check_branch
          %227 = sbr.rel (%p225) target = $region36
        $region35: #{encoder_block.5} parent=31 // pred_region
          %s228 = sand.u32 %s36, 1
          %s229 = sand.u32 %s36, 1
          %s230 = smul.addr %s229, 16
          %s231 = scalar_lea.vmem [#allocation2], %s230
          %s232 = smul.addr %s19, 20
          %s233 = sadd.s32 %s20, %s232
          %s234 = smul.addr %s233, 4
          %s235 = scalar_lea.vmem %s0, %s234
          // Predicated region
          $region37: #{encoder_block.5} parent=35 // pred_check
            _
          $region38: #{encoder_block.5} parent=35 // pred_check_branch
            %237 = sbr.rel (0) target = $region40
          $region39: #{encoder_block.5} parent=35 // pred_region
            // Predicated region
            $region41: #{encoder_block.5} parent=39 // pred_check
              _
            $region42: #{encoder_block.5} parent=39 // pred_check_branch
              %239 = sbr.rel target = $region44
            $region43: #{encoder_block.5} parent=39 // pred_region
              // Predicated region
              $region56: #{encoder_block.5} parent=43 // pred_check
                _
              $region57: #{encoder_block.5} parent=43 // pred_check_branch
                %261 = sbr.rel (0) target = $region59
              $region58: #{encoder_block.5} parent=43 // pred_region
                loop: start=0, step=1, limit=1
                $region60: #{encoder_block.5} parent=58 // loop_pre_header
                  _
                $region61: #{encoder_block.5} parent=58 // loop_header
                  %s263 = sphi 0, %s267
                  %p264 = scmp.ge.s32.totalorder %s263, 1
                  %s268 = sphi %s235, %s235
                  %s269 = sphi %s231, %s231
                $region62: #{encoder_block.5} parent=58 // loop_header_branch
                  %266 = sbr.rel (%p264) target = $region66
                $region63: #{encoder_block.5} parent=58 // loop_body
                  _
                $region64: #{encoder_block.5} parent=58 // loop_footer
                  %s267 = sadd.s32 1, %s263
                $region65: #{encoder_block.5} parent=58 // loop_footer_branch
                  %262 = sbr.rel target = $region61
                $region66: #{encoder_block.5} parent=58 // loop_exit
                  _
                %s271 = ssub.s32 16, 1
                loop: start=0, step=1, limit=1
                $region67: #{encoder_block.5} parent=58 // loop_pre_header
                  _
                $region68: #{encoder_block.5} parent=58 // loop_header
                  %s273 = sphi 0, %s277
                  %p274 = scmp.ge.s32.totalorder %s273, 1
                  %s278 = sphi %s235, %s235
                  %s279 = sphi %s231, %s231
                $region69: #{encoder_block.5} parent=58 // loop_header_branch
                  %276 = sbr.rel (%p274) target = $region73
                $region70: #{encoder_block.5} parent=58 // loop_body
                  %v280 = vld [vmem:[%s278] sm:%s271]
                  %281 = vst [vmem:[%s279] sm:%s271] %v280
                  %v282 = vld [vmem:[%s278 + $0x14] sm:%s271]
                  %283 = vst [vmem:[%s279 + $0x4] sm:%s271] %v282
                  %v284 = vld [vmem:[%s278 + $0x28] sm:%s271]
                  %285 = vst [vmem:[%s279 + $0x8] sm:%s271] %v284
                  %v286 = vld [vmem:[%s278 + $0x3c] sm:%s271]
                  %287 = vst [vmem:[%s279 + $0xc] sm:%s271] %v286
                $region71: #{encoder_block.5} parent=58 // loop_footer
                  %s277 = sadd.s32 1, %s273
                $region72: #{encoder_block.5} parent=58 // loop_footer_branch
                  %272 = sbr.rel target = $region68
                $region73: #{encoder_block.5} parent=58 // loop_exit
                  _
              $region59: #{encoder_block.5} parent=43 // pred_fallthru
                _
            $region44: #{encoder_block.5} parent=39 // pred_fallthru
              _
            // Predicated region
            $region45: #{encoder_block.5} parent=39 // pred_check
              _
            $region46: #{encoder_block.5} parent=39 // pred_check_branch
              %241 = sbr.rel (0) target = $region48
            $region47: #{encoder_block.5} parent=39 // pred_region
              %s243 = ssub.s32 16, 1
              loop: start=0, step=1, limit=1
              $region49: #{encoder_block.5} parent=47 // loop_pre_header
                _
              $region50: #{encoder_block.5} parent=47 // loop_header
                %s245 = sphi 0, %s249
                %p246 = scmp.ge.s32.totalorder %s245, 1
                %s250 = sphi %s235, %s235
                %s251 = sphi %s231, %s231
              $region51: #{encoder_block.5} parent=47 // loop_header_branch
                %248 = sbr.rel (%p246) target = $region55
              $region52: #{encoder_block.5} parent=47 // loop_body
                %v252 = vld [vmem:[%s250] sm:%s243]
                %253 = vst [vmem:[%s251] sm:%s243] %v252
                %v254 = vld [vmem:[%s250 + $0x14] sm:%s243]
                %255 = vst [vmem:[%s251 + $0x4] sm:%s243] %v254
                %v256 = vld [vmem:[%s250 + $0x28] sm:%s243]
                %257 = vst [vmem:[%s251 + $0x8] sm:%s243] %v256
                %v258 = vld [vmem:[%s250 + $0x3c] sm:%s243]
                %259 = vst [vmem:[%s251 + $0xc] sm:%s243] %v258
              $region53: #{encoder_block.5} parent=47 // loop_footer
                %s249 = sadd.s32 1, %s245
              $region54: #{encoder_block.5} parent=47 // loop_footer_branch
                %244 = sbr.rel target = $region50
              $region55: #{encoder_block.5} parent=47 // loop_exit
                _
            $region48: #{encoder_block.5} parent=39 // pred_fallthru
              _
          $region40: #{encoder_block.5} parent=35 // pred_fallthru
            _
          %288 = vnop
        $region36: #{encoder_block.5} parent=31 // pred_fallthru
          _
        // Predicated region
        $region74: #{encoder_block.5} parent=31 // pred_check
          %p289 = pneg %p76
        $region75: #{encoder_block.5} parent=31 // pred_check_branch
          %291 = sbr.rel (%p289) target = $region77
        $region76: #{encoder_block.5} parent=31 // pred_region
          %s292 = sand.u32 %s66, 1
          %s293 = sand.u32 %s66, 1
          %s294 = smul.addr %s293, 16
          %s295 = scalar_lea.vmem [#allocation3], %s294
          %s296 = sadd.s32 %s20, 1
          %s297 = smul.addr %s19, 20
          %s298 = sadd.s32 %s296, %s297
          %s299 = smul.addr %s298, 4
          %s300 = scalar_lea.vmem %s1, %s299
          // Predicated region
          $region78: #{encoder_block.5} parent=76 // pred_check
            _
          $region79: #{encoder_block.5} parent=76 // pred_check_branch
            %302 = sbr.rel (0) target = $region81
          $region80: #{encoder_block.5} parent=76 // pred_region
            // Predicated region
            $region82: #{encoder_block.5} parent=80 // pred_check
              _
            $region83: #{encoder_block.5} parent=80 // pred_check_branch
              %304 = sbr.rel target = $region85
            $region84: #{encoder_block.5} parent=80 // pred_region
              // Predicated region
              $region97: #{encoder_block.5} parent=84 // pred_check
                _
              $region98: #{encoder_block.5} parent=84 // pred_check_branch
                %326 = sbr.rel (0) target = $region100
              $region99: #{encoder_block.5} parent=84 // pred_region
                loop: start=0, step=1, limit=1
                $region101: #{encoder_block.5} parent=99 // loop_pre_header
                  _
                $region102: #{encoder_block.5} parent=99 // loop_header
                  %s328 = sphi 0, %s332
                  %p329 = scmp.ge.s32.totalorder %s328, 1
                  %s333 = sphi %s300, %s300
                  %s334 = sphi %s295, %s295
                $region103: #{encoder_block.5} parent=99 // loop_header_branch
                  %331 = sbr.rel (%p329) target = $region107
                $region104: #{encoder_block.5} parent=99 // loop_body
                  _
                $region105: #{encoder_block.5} parent=99 // loop_footer
                  %s332 = sadd.s32 1, %s328
                $region106: #{encoder_block.5} parent=99 // loop_footer_branch
                  %327 = sbr.rel target = $region102
                $region107: #{encoder_block.5} parent=99 // loop_exit
                  _
                %s336 = ssub.s32 16, 1
                loop: start=0, step=1, limit=1
                $region108: #{encoder_block.5} parent=99 // loop_pre_header
                  _
                $region109: #{encoder_block.5} parent=99 // loop_header
                  %s338 = sphi 0, %s342
                  %p339 = scmp.ge.s32.totalorder %s338, 1
                  %s343 = sphi %s300, %s300
                  %s344 = sphi %s295, %s295
                $region110: #{encoder_block.5} parent=99 // loop_header_branch
                  %341 = sbr.rel (%p339) target = $region114
                $region111: #{encoder_block.5} parent=99 // loop_body
                  %v345 = vld [vmem:[%s343] sm:%s336]
                  %346 = vst [vmem:[%s344] sm:%s336] %v345
                  %v347 = vld [vmem:[%s343 + $0x14] sm:%s336]
                  %348 = vst [vmem:[%s344 + $0x4] sm:%s336] %v347
                  %v349 = vld [vmem:[%s343 + $0x28] sm:%s336]
                  %350 = vst [vmem:[%s344 + $0x8] sm:%s336] %v349
                  %v351 = vld [vmem:[%s343 + $0x3c] sm:%s336]
                  %352 = vst [vmem:[%s344 + $0xc] sm:%s336] %v351
                $region112: #{encoder_block.5} parent=99 // loop_footer
                  %s342 = sadd.s32 1, %s338
                $region113: #{encoder_block.5} parent=99 // loop_footer_branch
                  %337 = sbr.rel target = $region109
                $region114: #{encoder_block.5} parent=99 // loop_exit
                  _
              $region100: #{encoder_block.5} parent=84 // pred_fallthru
                _
            $region85: #{encoder_block.5} parent=80 // pred_fallthru
              _
            // Predicated region
            $region86: #{encoder_block.5} parent=80 // pred_check
              _
            $region87: #{encoder_block.5} parent=80 // pred_check_branch
              %306 = sbr.rel (0) target = $region89
            $region88: #{encoder_block.5} parent=80 // pred_region
              %s308 = ssub.s32 16, 1
              loop: start=0, step=1, limit=1
              $region90: #{encoder_block.5} parent=88 // loop_pre_header
                _
              $region91: #{encoder_block.5} parent=88 // loop_header
                %s310 = sphi 0, %s314
                %p311 = scmp.ge.s32.totalorder %s310, 1
                %s315 = sphi %s300, %s300
                %s316 = sphi %s295, %s295
              $region92: #{encoder_block.5} parent=88 // loop_header_branch
                %313 = sbr.rel (%p311) target = $region96
              $region93: #{encoder_block.5} parent=88 // loop_body
                %v317 = vld [vmem:[%s315] sm:%s308]
                %318 = vst [vmem:[%s316] sm:%s308] %v317
                %v319 = vld [vmem:[%s315 + $0x14] sm:%s308]
                %320 = vst [vmem:[%s316 + $0x4] sm:%s308] %v319
                %v321 = vld [vmem:[%s315 + $0x28] sm:%s308]
                %322 = vst [vmem:[%s316 + $0x8] sm:%s308] %v321
                %v323 = vld [vmem:[%s315 + $0x3c] sm:%s308]
                %324 = vst [vmem:[%s316 + $0xc] sm:%s308] %v323
              $region94: #{encoder_block.5} parent=88 // loop_footer
                %s314 = sadd.s32 1, %s310
              $region95: #{encoder_block.5} parent=88 // loop_footer_branch
                %309 = sbr.rel target = $region91
              $region96: #{encoder_block.5} parent=88 // loop_exit
                _
            $region89: #{encoder_block.5} parent=80 // pred_fallthru
              _
          $region81: #{encoder_block.5} parent=76 // pred_fallthru
            _
          %353 = vnop
        $region77: #{encoder_block.5} parent=31 // pred_fallthru
          _
      $region32: #{encoder_block.5} parent=5 // pred_fallthru
        _
      %p354 = scmp.le.s32.totalorder 1, %s12
      %p355 = scmp.lt.s32.totalorder %s12, 9
      %p356 = pnand %p354, %p355
      %p357 = pneg %p356
      // Predicated region
      $region115: #{encoder_block.5} parent=5 // pred_check
        _
      $region116: #{encoder_block.5} parent=5 // pred_check_branch
        %359 = sbr.rel (%p356) target = $region118
      $region117: #{encoder_block.5} parent=5 // pred_region
        %s360 = ssub.s32 %s12, 1
        %s361 = sand.u32 %s39, 1
        %s362 = sand.u32 %s39, 1
        %s363 = smul.addr %s362, 16
        %s364 = scalar_lea.vmem [#allocation2], %s363
        // Predicated region
        $region119: #{encoder_block.5} parent=117 // pred_check
          %p365 = pneg %p52
        $region120: #{encoder_block.5} parent=117 // pred_check_branch
          %367 = sbr.rel (%p365) target = $region122
        $region121: #{encoder_block.5} parent=117 // pred_region
          _
        $region122: #{encoder_block.5} parent=117 // pred_fallthru
          _
        %s368 = sand.u32 %s69, 1
        %s369 = sand.u32 %s69, 1
        %s370 = smul.addr %s369, 16
        %s371 = scalar_lea.vmem [#allocation3], %s370
        // Predicated region
        $region123: #{encoder_block.5} parent=117 // pred_check
          %p372 = pneg %p82
        $region124: #{encoder_block.5} parent=117 // pred_check_branch
          %374 = sbr.rel (%p372) target = $region126
        $region125: #{encoder_block.5} parent=117 // pred_region
          _
        $region126: #{encoder_block.5} parent=117 // pred_fallthru
          _
        %s375 = sand.u32 %s39, 1
        %s376 = sand.u32 %s39, 1
        %s377 = smul.addr %s376, 16
        %s378 = scalar_lea.vmem [#allocation2], %s377
        %p379 = pneg %p52
        %p380 = pneg %p49
        %s381 = sand.u32 %s69, 1
        %s382 = sand.u32 %s69, 1
        %s383 = smul.addr %s382, 16
        %s384 = scalar_lea.vmem [#allocation3], %s383
        %p385 = pneg %p82
        %p386 = pneg %p79
        %p387 = pneg %p103
        %p388 = pneg %p100
        %p389 = pneg %p124
        %p390 = pneg %p121
        %p391 = pneg %p145
        %p392 = pneg %p142
        %p393 = pneg %p166
        %p394 = pneg %p163
        %p395 = pneg %p194
        %p396 = pneg %p191
        %s397 = sand.u32 %s181, 1
        %s398 = sand.u32 %s181, 1
        %s399 = smul.addr %s398, 16
        %s400 = scalar_lea.vmem [#allocation4], %s399
        %s401 = sadd.s32 %s22, 1
        %v403 = vld [vmem:[%s364] sm:$0xf]
        %v404 = vld [vmem:[%s364 + $0x4] sm:$0xf]
        %v405 = vld [vmem:[%s364 + $0x8] sm:$0xf]
        %v406 = vld [vmem:[%s364 + $0xc] sm:$0xf]
        %v407 = vld [vmem:[%s371] sm:$0xf]
        %v408 = vld [vmem:[%s371 + $0x4] sm:$0xf]
        %v409 = vld [vmem:[%s371 + $0x8] sm:$0xf]
        %v410 = vld [vmem:[%s371 + $0xc] sm:$0xf]
        %v415 = vunpack.c.l.b16 %v403
        %v416 = vunpack.c.l.b16 %v404
        %v417 = vunpack.c.l.b16 %v405
        %v418 = vunpack.c.l.b16 %v406
        %v419 = vpack.c.b16 %v416, %v415
        %v420 = vpack.c.b16 %v418, %v417
        %v427 = vunpack.c.l.b16 %v407
        %v428 = vunpack.c.l.b16 %v408
        %v429 = vunpack.c.l.b16 %v409
        %v430 = vunpack.c.l.b16 %v410
        %v431 = vpack.c.b16 %v428, %v427
        %v432 = vpack.c.b16 %v430, %v429
        %435 = vrot.lane.b32.xlu0 %v419, 125
        %v436 = vpop.permute.xlu0 %435
        %437 = vrot.lane.b32.xlu0 %v431, 125
        %v438 = vpop.permute.xlu0 %437
        %439 = vrot.lane.b32.xlu0 %v420, 125
        %v440 = vpop.permute.xlu0 %439
        %441 = vrot.lane.b32.xlu0 %v432, 125
        %v442 = vpop.permute.xlu0 %441
        %vm443 = vcmask 1022976
        %v444 = vsel %vm443, %v436, %v438
        %v445 = vsel %vm443, %v440, %v442
        %448 = vrot.lane.b32.xlu0 %v419, 122
        %v449 = vpop.permute.xlu0 %448
        %450 = vrot.lane.b32.xlu0 %v431, 122
        %v451 = vpop.permute.xlu0 %450
        %452 = vrot.lane.b32.xlu0 %v420, 122
        %v453 = vpop.permute.xlu0 %452
        %454 = vrot.lane.b32.xlu0 %v432, 122
        %v455 = vpop.permute.xlu0 %454
        %vm456 = vcmask 998400
        %v457 = vsel %vm456, %v449, %v451
        %v458 = vsel %vm456, %v453, %v455
        %461 = vrot.lane.b32.xlu0 %v419, 119
        %v462 = vpop.permute.xlu0 %461
        %463 = vrot.lane.b32.xlu0 %v431, 119
        %v464 = vpop.permute.xlu0 %463
        %465 = vrot.lane.b32.xlu0 %v420, 119
        %v466 = vpop.permute.xlu0 %465
        %467 = vrot.lane.b32.xlu0 %v432, 119
        %v468 = vpop.permute.xlu0 %467
        %vm469 = vcmask 973824
        %v470 = vsel %vm469, %v462, %v464
        %v471 = vsel %vm469, %v466, %v468
        %474 = vrot.lane.b32.xlu0 %v419, 116
        %v475 = vpop.permute.xlu0 %474
        %476 = vrot.lane.b32.xlu0 %v431, 116
        %v477 = vpop.permute.xlu0 %476
        %478 = vrot.lane.b32.xlu0 %v420, 116
        %v479 = vpop.permute.xlu0 %478
        %480 = vrot.lane.b32.xlu0 %v432, 116
        %v481 = vpop.permute.xlu0 %480
        %vm482 = vcmask 949248
        %v483 = vsel %vm482, %v475, %v477
        %v484 = vsel %vm482, %v479, %v481
        %487 = vrot.lane.b32.xlu0 %v419, 113
        %v488 = vpop.permute.xlu0 %487
        %489 = vrot.lane.b32.xlu0 %v431, 113
        %v490 = vpop.permute.xlu0 %489
        %491 = vrot.lane.b32.xlu0 %v420, 113
        %v492 = vpop.permute.xlu0 %491
        %493 = vrot.lane.b32.xlu0 %v432, 113
        %v494 = vpop.permute.xlu0 %493
        %vm495 = vcmask 924672
        %v496 = vsel %vm495, %v488, %v490
        %v497 = vsel %vm495, %v492, %v494
        %500 = vrot.lane.b32.xlu0 %v419, 110
        %v501 = vpop.permute.xlu0 %500
        %502 = vrot.lane.b32.xlu0 %v431, 110
        %v503 = vpop.permute.xlu0 %502
        %504 = vrot.lane.b32.xlu0 %v420, 110
        %v505 = vpop.permute.xlu0 %504
        %506 = vrot.lane.b32.xlu0 %v432, 110
        %v507 = vpop.permute.xlu0 %506
        %vm508 = vcmask 900096
        %v509 = vsel %vm508, %v501, %v503
        %v510 = vsel %vm508, %v505, %v507
        %v513 = vld [vmem:[%s2] sm:$0xff]
        %v514 = vld [vmem:[%s2 + $0x8] sm:$0xff]
        %v515 = vld [vmem:[%s2 + $0x10] sm:$0xff]
        %v516 = vld [vmem:[%s2 + $0x18] sm:$0xff]
        %v517 = vld [vmem:[%s3] sm:$0xff]
        %v518 = vld [vmem:[%s3 + $0x8] sm:$0xff]
        %v519 = vld [vmem:[%s3 + $0x10] sm:$0xff]
        %v520 = vld [vmem:[%s3 + $0x18] sm:$0xff]
        %522 = vset.pattern.permute.xlu0 0
        %523 = vperm.xlu0 %522, %v517
        %v524 = vpop.permute.xlu0 %523
        %527 = vset.pattern.permute.xlu0 0
        %528 = vperm.xlu0 %527, %v518
        %v529 = vpop.permute.xlu0 %528
        %532 = vset.pattern.permute.xlu0 0
        %533 = vperm.xlu0 %532, %v519
        %v534 = vpop.permute.xlu0 %533
        %537 = vset.pattern.permute.xlu0 0
        %538 = vperm.xlu0 %537, %v520
        %v539 = vpop.permute.xlu0 %538
        %v545 = vunpack.c.l.b16 %v513
        %v546 = vunpack.c.h.b16 %v513
        %v547 = vunpack.c.l.b16 %v514
        %v548 = vunpack.c.h.b16 %v514
        %v549 = vunpack.c.l.b16 %v515
        %v550 = vunpack.c.h.b16 %v515
        %v551 = vunpack.c.l.b16 %v516
        %v552 = vunpack.c.h.b16 %v516
        %v553 = vpack.c.b16 %v547, %v545
        %v554 = vpack.c.b16 %v548, %v546
        %v555 = vpack.c.b16 %v551, %v549
        %v556 = vpack.c.b16 %v552, %v550
        %vm559 = vcmask 785408
        %v561 = vsel %vm559, %v554, 0
        %v564 = vsel %vm559, %v556, 0
        %566 = vmatpush.bf16.msra.mxu0 %v471
        %567 = vmatpush.bf16.msra.mxu0 %v470
        %568 = vmatpush.bf16.msra.mxu0 %v458
        %569 = vmatpush.bf16.msra.mxu0 %v457
        %570 = vmatpush.bf16.msra.mxu0 %v445
        %571 = vmatpush.bf16.msra.mxu0 %v444
        %572 = vmatpush.bf16.msra.mxu0 %v420
        %573 = vmatpush.bf16.msra.mxu0 %v419
        %574 = vmatmul.bf16.gmra.mxu0 %v553
        %v575 = vpop.f32.mrf.mxu0
        %v576 = vadd.f32 %v524, %v575
        %v577 = vpop.f32.mrf.mxu0
        %v578 = vadd.f32 %v529, %v577
        %579 = vmatmul.bf16.gmra.mxu0 %v555
        %v580 = vpop.f32.mrf.mxu0
        %v581 = vadd.f32 %v534, %v580
        %v582 = vpop.f32.mrf.mxu0
        %v583 = vadd.f32 %v539, %v582
        %584 = vdwg.mxu0
        %585 = vmatpush.bf16.msra.mxu0 0
        %586 = vmatpush.bf16.msra.mxu0 0
        %587 = vmatpush.bf16.msra.mxu0 %v510
        %588 = vmatpush.bf16.msra.mxu0 %v509
        %589 = vmatpush.bf16.msra.mxu0 %v497
        %590 = vmatpush.bf16.msra.mxu0 %v496
        %591 = vmatpush.bf16.msra.mxu0 %v484
        %592 = vmatpush.bf16.msra.mxu0 %v483
        %593 = vmatmul.bf16.gmra.mxu0 %v561
        %v594 = vpop.f32.mrf.mxu0
        %v595 = vadd.f32 %v576, %v594
        %v596 = vpop.f32.mrf.mxu0
        %v597 = vadd.f32 %v578, %v596
        %598 = vmatmul.bf16.gmra.mxu0 %v564
        %v599 = vpop.f32.mrf.mxu0
        %v600 = vadd.f32 %v581, %v599
        %v601 = vpop.f32.mrf.mxu0
        %v602 = vadd.f32 %v583, %v601
        %603 = vdwg.mxu0
        %vm604 = vcmp.gt.f32.partialorder %v595, 0.0
        %vm605 = vcmp.gt.f32.partialorder %v597, 0.0
        %vm606 = vcmp.gt.f32.partialorder %v600, 0.0
        %vm607 = vcmp.gt.f32.partialorder %v602, 0.0
        %v608 = vmin.f32 %v595, 0.0
        %v609 = vmin.f32 %v597, 0.0
        %v610 = vmin.f32 %v600, 0.0
        %v611 = vmin.f32 %v602, 0.0
        %v612 = vmul.f32 %v608, 1.442695
        %v613 = vpow.pop %v612
        %v614 = vmul.f32 %v609, 1.442695
        %v615 = vpow.pop %v614
        %v616 = vmul.f32 %v610, 1.442695
        %v617 = vpow.pop %v616
        %v618 = vmul.f32 %v611, 1.442695
        %v619 = vpow.pop %v618
        %v620 = vsub.f32 %v613, 1.0
        %v621 = vsub.f32 %v615, 1.0
        %v622 = vsub.f32 %v617, 1.0
        %v623 = vsub.f32 %v619, 1.0
        %v624 = vsel %vm604, %v595, %v620
        %v625 = vsel %vm605, %v597, %v621
        %v626 = vsel %vm606, %v600, %v622
        %v627 = vsel %vm607, %v602, %v623
        %v628 = vld [vmem:[%s4] sm:$0xf]
        %v629 = vld [vmem:[%s4 + $0x4] sm:$0xf]
        %v630 = vld [vmem:[%s4 + $0x8] sm:$0xf]
        %v631 = vld [vmem:[%s4 + $0xc] sm:$0xf]
        %v632 = vpack.c.bf16 %v625, %v624
        %v633 = vpack.c.bf16 %v627, %v626
        %v634 = vld [vmem:[%s5] sm:$0xff]
        %v635 = vld [vmem:[%s5 + $0x8] sm:$0xff]
        %v636 = vld [vmem:[%s5 + $0x10] sm:$0xff]
        %v637 = vld [vmem:[%s5 + $0x18] sm:$0xff]
        %639 = vset.pattern.permute.xlu0 0
        %640 = vperm.xlu0 %639, %v634
        %v641 = vpop.permute.xlu0 %640
        %644 = vset.pattern.permute.xlu0 0
        %645 = vperm.xlu0 %644, %v635
        %v646 = vpop.permute.xlu0 %645
        %649 = vset.pattern.permute.xlu0 0
        %650 = vperm.xlu0 %649, %v636
        %v651 = vpop.permute.xlu0 %650
        %654 = vset.pattern.permute.xlu0 0
        %655 = vperm.xlu0 %654, %v637
        %v656 = vpop.permute.xlu0 %655
        %v662 = vunpack.c.l.b16 %v628
        %v663 = vunpack.c.l.b16 %v629
        %v664 = vunpack.c.l.b16 %v630
        %v665 = vunpack.c.l.b16 %v631
        %v666 = vpack.c.b16 %v663, %v662
        %v667 = vpack.c.b16 %v665, %v664
        %vm668 = vcmask 261120
        %v670 = vsel %vm668, %v666, 0
        %v673 = vsel %vm668, %v667, 0
        %675 = vmatpush.bf16.msra.mxu0 0
        %676 = vmatpush.bf16.msra.mxu0 0
        %677 = vmatpush.bf16.msra.mxu0 0
        %678 = vmatpush.bf16.msra.mxu0 0
        %679 = vmatpush.bf16.msra.mxu0 0
        %680 = vmatpush.bf16.msra.mxu0 0
        %681 = vmatpush.bf16.msra.mxu0 %v633
        %682 = vmatpush.bf16.msra.mxu0 %v632
        %683 = vmatmul.bf16.gmra.mxu0 %v670
        %v684 = vpop.f32.mrf.mxu0
        %v685 = vadd.f32 %v641, %v684
        %v686 = vpop.f32.mrf.mxu0
        %v687 = vadd.f32 %v646, %v686
        %688 = vmatmul.bf16.gmra.mxu0 %v673
        %v689 = vpop.f32.mrf.mxu0
        %v690 = vadd.f32 %v651, %v689
        %v691 = vpop.f32.mrf.mxu0
        %v692 = vadd.f32 %v656, %v691
        %693 = vdwg.mxu0
        %v694 = vunpack.c.l.bf16 %v419
        %v695 = vunpack.c.l.bf16 %v431
        %v696 = vunpack.c.h.bf16 %v419
        %v697 = vunpack.c.h.bf16 %v431
        %v698 = vunpack.c.l.bf16 %v420
        %v699 = vunpack.c.l.bf16 %v432
        %v700 = vunpack.c.h.bf16 %v420
        %v701 = vunpack.c.h.bf16 %v432
        %706 = vrot.lane.b32.xlu0 %v685, 18
        %v707 = vpop.permute.xlu0 %706
        %708 = vrot.lane.b32.xlu0 %v687, 18
        %v709 = vpop.permute.xlu0 %708
        %710 = vrot.lane.b32.xlu0 %v690, 18
        %v711 = vpop.permute.xlu0 %710
        %712 = vrot.lane.b32.xlu0 %v692, 18
        %v713 = vpop.permute.xlu0 %712
        %v718 = vadd.f32 %v694, %v707
        %v719 = vadd.f32 %v695, %v707
        %v720 = vadd.f32 %v696, %v709
        %v721 = vadd.f32 %v697, %v709
        %v722 = vadd.f32 %v698, %v711
        %v723 = vadd.f32 %v699, %v711
        %v724 = vadd.f32 %v700, %v713
        %v725 = vadd.f32 %v701, %v713
        %vm726 = vcmp.gt.f32.partialorder %v718, 0.0
        %vm727 = vcmp.gt.f32.partialorder %v719, 0.0
        %vm728 = vcmp.gt.f32.partialorder %v720, 0.0
        %vm729 = vcmp.gt.f32.partialorder %v721, 0.0
        %vm730 = vcmp.gt.f32.partialorder %v722, 0.0
        %vm731 = vcmp.gt.f32.partialorder %v723, 0.0
        %vm732 = vcmp.gt.f32.partialorder %v724, 0.0
        %vm733 = vcmp.gt.f32.partialorder %v725, 0.0
        %v734 = vmin.f32 %v718, 0.0
        %v735 = vmin.f32 %v719, 0.0
        %v736 = vmin.f32 %v720, 0.0
        %v737 = vmin.f32 %v721, 0.0
        %v738 = vmin.f32 %v722, 0.0
        %v739 = vmin.f32 %v723, 0.0
        %v740 = vmin.f32 %v724, 0.0
        %v741 = vmin.f32 %v725, 0.0
        %v742 = vmul.f32 %v734, 1.442695
        %v743 = vpow.pop %v742
        %v744 = vmul.f32 %v735, 1.442695
        %v745 = vpow.pop %v744
        %v746 = vmul.f32 %v736, 1.442695
        %v747 = vpow.pop %v746
        %v748 = vmul.f32 %v737, 1.442695
        %v749 = vpow.pop %v748
        %v750 = vmul.f32 %v738, 1.442695
        %v751 = vpow.pop %v750
        %v752 = vmul.f32 %v739, 1.442695
        %v753 = vpow.pop %v752
        %v754 = vmul.f32 %v740, 1.442695
        %v755 = vpow.pop %v754
        %v756 = vmul.f32 %v741, 1.442695
        %v757 = vpow.pop %v756
        %v758 = vsub.f32 %v743, 1.0
        %v759 = vsub.f32 %v745, 1.0
        %v760 = vsub.f32 %v747, 1.0
        %v761 = vsub.f32 %v749, 1.0
        %v762 = vsub.f32 %v751, 1.0
        %v763 = vsub.f32 %v753, 1.0
        %v764 = vsub.f32 %v755, 1.0
        %v765 = vsub.f32 %v757, 1.0
        %v766 = vsel %vm726, %v718, %v758
        %v767 = vsel %vm727, %v719, %v759
        %v768 = vsel %vm728, %v720, %v760
        %v769 = vsel %vm729, %v721, %v761
        %v770 = vsel %vm730, %v722, %v762
        %v771 = vsel %vm731, %v723, %v763
        %v772 = vsel %vm732, %v724, %v764
        %v773 = vsel %vm733, %v725, %v765
        %v774 = vpack.c.bf16 %v767, %v766
        %v775 = vpack.c.bf16 %v769, %v768
        %v776 = vpack.c.bf16 %v771, %v770
        %v777 = vpack.c.bf16 %v773, %v772
        %782 = vrot.lane.b32.xlu0 %v774, 110
        %v783 = vpop.permute.xlu0 %782
        %784 = vrot.lane.b32.xlu0 %v775, 110
        %v785 = vpop.permute.xlu0 %784
        %786 = vrot.lane.b32.xlu0 %v776, 110
        %v787 = vpop.permute.xlu0 %786
        %788 = vrot.lane.b32.xlu0 %v777, 110
        %v789 = vpop.permute.xlu0 %788
        %v790 = vrot.slane %v783, 4
        %v791 = vrot.slane %v785, 4
        %v792 = vrot.slane %v787, 4
        %v793 = vrot.slane %v789, 4
        %v794 = vsel %vm508, %v783, %v790
        %v795 = vsel %vm508, %v785, %v791
        %v796 = vsel %vm508, %v787, %v792
        %v797 = vsel %vm508, %v789, %v793
        %802 = vst [vmem:[%s400] sm:$0xf] %v794
        %803 = vst [vmem:[%s400 + $0x4] sm:$0xf] %v795
        %804 = vst [vmem:[%s400 + $0x8] sm:$0xf] %v796
        %805 = vst [vmem:[%s400 + $0xc] sm:$0xf] %v797
        %s806 = sand.u32 %s181, 1
        %s807 = sand.u32 %s181, 1
        %s808 = smul.addr %s807, 16
        %s809 = scalar_lea.vmem [#allocation4], %s808
        // Predicated region
        $region127: #{encoder_block.5} parent=117 // pred_check
          %p810 = pneg %p191
        $region128: #{encoder_block.5} parent=117 // pred_check_branch
          %812 = sbr.rel (%p810) target = $region130
        $region129: #{encoder_block.5} parent=117 // pred_region
          %s813 = smul.addr %s21, 16
          %s814 = sadd.s32 %s22, %s813
          %s815 = smul.addr %s814, 4
          %s816 = scalar_lea.vmem %s6, %s815
          // Predicated region
          $region131: #{encoder_block.5} parent=129 // pred_check
            _
          $region132: #{encoder_block.5} parent=129 // pred_check_branch
            %818 = sbr.rel (0) target = $region134
          $region133: #{encoder_block.5} parent=129 // pred_region
            // Predicated region
            $region135: #{encoder_block.5} parent=133 // pred_check
              _
            $region136: #{encoder_block.5} parent=133 // pred_check_branch
              %820 = sbr.rel target = $region138
            $region137: #{encoder_block.5} parent=133 // pred_region
              // Predicated region
              $region150: #{encoder_block.5} parent=137 // pred_check
                _
              $region151: #{encoder_block.5} parent=137 // pred_check_branch
                %842 = sbr.rel (0) target = $region153
              $region152: #{encoder_block.5} parent=137 // pred_region
                loop: start=0, step=1, limit=1
                $region154: #{encoder_block.5} parent=152 // loop_pre_header
                  _
                $region155: #{encoder_block.5} parent=152 // loop_header
                  %s844 = sphi 0, %s848
                  %p845 = scmp.ge.s32.totalorder %s844, 1
                  %s849 = sphi %s809, %s809
                  %s850 = sphi %s816, %s816
                $region156: #{encoder_block.5} parent=152 // loop_header_branch
                  %847 = sbr.rel (%p845) target = $region160
                $region157: #{encoder_block.5} parent=152 // loop_body
                  _
                $region158: #{encoder_block.5} parent=152 // loop_footer
                  %s848 = sadd.s32 1, %s844
                $region159: #{encoder_block.5} parent=152 // loop_footer_branch
                  %843 = sbr.rel target = $region155
                $region160: #{encoder_block.5} parent=152 // loop_exit
                  _
                %s852 = ssub.s32 16, 1
                loop: start=0, step=1, limit=1
                $region161: #{encoder_block.5} parent=152 // loop_pre_header
                  _
                $region162: #{encoder_block.5} parent=152 // loop_header
                  %s854 = sphi 0, %s858
                  %p855 = scmp.ge.s32.totalorder %s854, 1
                  %s859 = sphi %s809, %s809
                  %s860 = sphi %s816, %s816
                $region163: #{encoder_block.5} parent=152 // loop_header_branch
                  %857 = sbr.rel (%p855) target = $region167
                $region164: #{encoder_block.5} parent=152 // loop_body
                  %v861 = vld [vmem:[%s859] sm:%s852]
                  %862 = vst [vmem:[%s860] sm:%s852] %v861
                  %v863 = vld [vmem:[%s859 + $0x4] sm:%s852]
                  %864 = vst [vmem:[%s860 + $0x10] sm:%s852] %v863
                  %v865 = vld [vmem:[%s859 + $0x8] sm:%s852]
                  %866 = vst [vmem:[%s860 + $0x20] sm:%s852] %v865
                  %v867 = vld [vmem:[%s859 + $0xc] sm:%s852]
                  %868 = vst [vmem:[%s860 + $0x30] sm:%s852] %v867
                $region165: #{encoder_block.5} parent=152 // loop_footer
                  %s858 = sadd.s32 1, %s854
                $region166: #{encoder_block.5} parent=152 // loop_footer_branch
                  %853 = sbr.rel target = $region162
                $region167: #{encoder_block.5} parent=152 // loop_exit
                  _
              $region153: #{encoder_block.5} parent=137 // pred_fallthru
                _
            $region138: #{encoder_block.5} parent=133 // pred_fallthru
              _
            // Predicated region
            $region139: #{encoder_block.5} parent=133 // pred_check
              _
            $region140: #{encoder_block.5} parent=133 // pred_check_branch
              %822 = sbr.rel (0) target = $region142
            $region141: #{encoder_block.5} parent=133 // pred_region
              %s824 = ssub.s32 16, 1
              loop: start=0, step=1, limit=1
              $region143: #{encoder_block.5} parent=141 // loop_pre_header
                _
              $region144: #{encoder_block.5} parent=141 // loop_header
                %s826 = sphi 0, %s830
                %p827 = scmp.ge.s32.totalorder %s826, 1
                %s831 = sphi %s809, %s809
                %s832 = sphi %s816, %s816
              $region145: #{encoder_block.5} parent=141 // loop_header_branch
                %829 = sbr.rel (%p827) target = $region149
              $region146: #{encoder_block.5} parent=141 // loop_body
                %v833 = vld [vmem:[%s831] sm:%s824]
                %834 = vst [vmem:[%s832] sm:%s824] %v833
                %v835 = vld [vmem:[%s831 + $0x4] sm:%s824]
                %836 = vst [vmem:[%s832 + $0x10] sm:%s824] %v835
                %v837 = vld [vmem:[%s831 + $0x8] sm:%s824]
                %838 = vst [vmem:[%s832 + $0x20] sm:%s824] %v837
                %v839 = vld [vmem:[%s831 + $0xc] sm:%s824]
                %840 = vst [vmem:[%s832 + $0x30] sm:%s824] %v839
              $region147: #{encoder_block.5} parent=141 // loop_footer
                %s830 = sadd.s32 1, %s826
              $region148: #{encoder_block.5} parent=141 // loop_footer_branch
                %825 = sbr.rel target = $region144
              $region149: #{encoder_block.5} parent=141 // loop_exit
                _
            $region142: #{encoder_block.5} parent=133 // pred_fallthru
              _
          $region134: #{encoder_block.5} parent=129 // pred_fallthru
            _
          %869 = vnop
        $region130: #{encoder_block.5} parent=117 // pred_fallthru
          _
      $region118: #{encoder_block.5} parent=5 // pred_fallthru
        _
      %p870 = scmp.le.s32.totalorder 2, %s12
      // Predicated region
      $region168: #{encoder_block.5} parent=5 // pred_check
        %p871 = pneg %p870
      $region169: #{encoder_block.5} parent=5 // pred_check_branch
        %873 = sbr.rel (%p871) target = $region171
      $region170: #{encoder_block.5} parent=5 // pred_region
        %s874 = ssub.s32 %s12, 2
        // Predicated region
        $region172: #{encoder_block.5} parent=170 // pred_check
          %p875 = pneg %p197
        $region173: #{encoder_block.5} parent=170 // pred_check_branch
          %877 = sbr.rel (%p875) target = $region175
        $region174: #{encoder_block.5} parent=170 // pred_region
          %s878 = sand.u32 %s182, 1
          %s879 = sand.u32 %s182, 1
          %s880 = smul.addr %s879, 16
          %s881 = scalar_lea.vmem [#allocation4], %s880
        $region175: #{encoder_block.5} parent=170 // pred_fallthru
          _
      $region171: #{encoder_block.5} parent=5 // pred_fallthru
        _
    $region6: #{encoder_block.5} parent=1 // loop_footer
      %s16 = sadd.s32 1, %s12
    $region7: #{encoder_block.5} parent=1 // loop_footer_branch
      %11 = sbr.rel target = $region3
    $region8: #{encoder_block.5} parent=1 // loop_exit
      _

// kernel: encoder_block.7
$region0: #{encoder_block.7}
  #allocation0 [shape = 'u32[]', space=smem, size = 0x4, offset = 0x4, fixed_abs, tag = 'smem constant byte address 0x4 - core index']
  #allocation1 [shape = 'u32[72,128]{1,0:T(1,128)}', space=vmem, size = 0x9000, scoped, tag = 'internal scratch']
  %s0 = inlined_call_operand.vmem [shape: bf16[2,64,384], index: 0, kind: input, shape index: {}, may-alias: {0,1}]
  %s1 = inlined_call_operand.vmem [shape: bf16[2,64,384], index: 1, kind: input, shape index: {}, may-alias: {0,1}]
  %s2 = inlined_call_operand.vmem [shape: bf16[64,128], index: 2, kind: input, shape index: {}]
  %s3 = inlined_call_operand.vmem [shape: f32[64,1], index: 3, kind: input, shape index: {}]
  %s4 = inlined_call_operand.hbm [shape: f32[2,64,256], index: 4, kind: output, shape index: {}]
  %s5 = sld [smem:[#allocation0]]
  $region131: #{encoder_block.7} parent=0
    _
  %s7 = ssub.s32 1, %s5
  %s8 = scalar_select 0, %s7, %s5
  $region1: #{encoder_block.7} parent=0
    #allocation2 [shape = 'u8[32768]{0}', space=vmem, size = 0x8000, scoped, tag = 'input window, operand 0']
    #allocation3 [shape = 'u8[32768]{0}', space=vmem, size = 0x8000, scoped, tag = 'input window, operand 1']
    #allocation4 [shape = 'u8[65536]{0}', space=vmem, size = 0x10000, scoped, tag = 'output window, operand 0']
    #allocation5 [shape = 's32[2]{0}', space=sflag, size = 0x8, scoped, tag = 'scoped memory for encoder_block.7']
    %9 = vsyncpa [#allocation5], 0
    %s10 = scalar_lea.sflag [#allocation5], 1
    %11 = vsyncpa %s10, 0
    loop: start=0, step=1, limit=6
    $region2: #{encoder_block.7} parent=1 // loop_pre_header
      _
    $region3: #{encoder_block.7} parent=1 // loop_header
      %s13 = sphi 0, %s17
      %p14 = scmp.ge.s32.totalorder %s13, 6
      %s20 = sphi 0, %s32
      %s21 = sphi 0, %s28
      %s22 = sphi 0, %s20
      %s23 = sphi 0, %s21
      %s24 = sphi 0, %s22
      %s25 = sphi 0, %s23
      %s37 = sphi 0, %s39
      %s40 = sphi 0, %s37
      %s41 = sphi 0, %s40
      %s57 = sphi 0, %s41
      %s67 = sphi 0, %s69
      %s70 = sphi 0, %s67
      %s71 = sphi 0, %s70
      %s87 = sphi 0, %s71
      %s91 = sphi 0, %s91
      %s93 = sphi 0, %s91
      %s94 = sphi 0, %s93
      %s108 = sphi 0, %s94
      %s112 = sphi 0, %s112
      %s114 = sphi 0, %s112
      %s115 = sphi 0, %s114
      %s129 = sphi 0, %s115
      %s137 = sphi 0, %s139
      %s140 = sphi 0, %s137
      %s141 = sphi 0, %s140
      %s157 = sphi 0, %s141
    $region4: #{encoder_block.7} parent=1 // loop_header_branch
      %16 = sbr.rel (%p14) target = $region8
    $region5: #{encoder_block.7} parent=1 // loop_body
      %s18 = ssub.s32 %s13, 1
      %s19 = ssub.s32 %s13, 2
      %s26 = sadd.s32 1, %s21
      %p27 = scmp.ge.s32.totalorder %s26, 2
      %s28 = scalar_select %p27, 0, %s26
      %s29 = sadd.s32 1, %s20
      %s30 = scalar_select %p27, %s29, %s20
      %p31 = scmp.ge.s32.totalorder %s30, 2
      %s32 = scalar_select %p31, 0, %s30
      %s33 = ssub.s32 %s20, %s32
      %s34 = ssub.s32 %s21, %s28
      %s35 = sor.u32 %s33, %s34
      %p36 = scmp.eq.s32.totalorder %s35, 0
      %s38 = sadd.s32 %s37, 1
      %s39 = scalar_select %p36, %s37, %s38
      %p42 = pneg %p36
      %p43 = scmp.eq.s32.totalorder %s13, 3
      %p44 = por %p42, %p43
      %p45 = scmp.ne.s32.totalorder %s37, %s40
      %p46 = scmp.eq.s32.totalorder %s13, 0
      %p47 = por %p45, %p46
      %p48 = scmp.ne.s32.totalorder %s37, %s40
      %p49 = scmp.eq.s32.totalorder %s18, 3
      %p50 = por %p48, %p49
      %p51 = scmp.ne.s32.totalorder %s40, %s41
      %p52 = scmp.eq.s32.totalorder %s18, 0
      %p53 = por %p51, %p52
      %p54 = scmp.ne.s32.totalorder %s40, %s41
      %p55 = scmp.eq.s32.totalorder %s19, 3
      %p56 = por %p54, %p55
      %p58 = scmp.ne.s32.totalorder %s41, %s57
      %p59 = scmp.eq.s32.totalorder %s19, 0
      %p60 = por %p58, %p59
      %s61 = sadd.s32 %s21, 1
      %s62 = sadd.s32 %s28, 1
      %s63 = ssub.s32 %s20, %s32
      %s64 = ssub.s32 %s61, %s62
      %s65 = sor.u32 %s63, %s64
      %p66 = scmp.eq.s32.totalorder %s65, 0
      %s68 = sadd.s32 %s67, 1
      %s69 = scalar_select %p66, %s67, %s68
      %p72 = pneg %p66
      %p73 = scmp.eq.s32.totalorder %s13, 3
      %p74 = por %p72, %p73
      %p75 = scmp.ne.s32.totalorder %s67, %s70
      %p76 = scmp.eq.s32.totalorder %s13, 0
      %p77 = por %p75, %p76
      %p78 = scmp.ne.s32.totalorder %s67, %s70
      %p79 = scmp.eq.s32.totalorder %s18, 3
      %p80 = por %p78, %p79
      %p81 = scmp.ne.s32.totalorder %s70, %s71
      %p82 = scmp.eq.s32.totalorder %s18, 0
      %p83 = por %p81, %p82
      %p84 = scmp.ne.s32.totalorder %s70, %s71
      %p85 = scmp.eq.s32.totalorder %s19, 3
      %p86 = por %p84, %p85
      %p88 = scmp.ne.s32.totalorder %s71, %s87
      %p89 = scmp.eq.s32.totalorder %s19, 0
      %p90 = por %p88, %p89
      %s92 = sadd.s32 %s91, 1
      %p95 = scmp.eq.s32.totalorder %s13, 3
      %p96 = scmp.ne.s32.totalorder %s91, %s93
      %p97 = scmp.eq.s32.totalorder %s13, 0
      %p98 = por %p96, %p97
      %p99 = scmp.ne.s32.totalorder %s91, %s93
      %p100 = scmp.eq.s32.totalorder %s18, 3
      %p101 = por %p99, %p100
      %p102 = scmp.ne.s32.totalorder %s93, %s94
      %p103 = scmp.eq.s32.totalorder %s18, 0
      %p104 = por %p102, %p103
      %p105 = scmp.ne.s32.totalorder %s93, %s94
      %p106 = scmp.eq.s32.totalorder %s19, 3
      %p107 = por %p105, %p106
      %p109 = scmp.ne.s32.totalorder %s94, %s108
      %p110 = scmp.eq.s32.totalorder %s19, 0
      %p111 = por %p109, %p110
      %s113 = sadd.s32 %s112, 1
      %p116 = scmp.eq.s32.totalorder %s13, 3
      %p117 = scmp.ne.s32.totalorder %s112, %s114
      %p118 = scmp.eq.s32.totalorder %s13, 0
      %p119 = por %p117, %p118
      %p120 = scmp.ne.s32.totalorder %s112, %s114
      %p121 = scmp.eq.s32.totalorder %s18, 3
      %p122 = por %p120, %p121
      %p123 = scmp.ne.s32.totalorder %s114, %s115
      %p124 = scmp.eq.s32.totalorder %s18, 0
      %p125 = por %p123, %p124
      %p126 = scmp.ne.s32.totalorder %s114, %s115
      %p127 = scmp.eq.s32.totalorder %s19, 3
      %p128 = por %p126, %p127
      %p130 = scmp.ne.s32.totalorder %s115, %s129
      %p131 = scmp.eq.s32.totalorder %s19, 0
      %p132 = por %p130, %p131
      %s133 = ssub.s32 %s20, %s32
      %s134 = ssub.s32 %s21, %s28
      %s135 = sor.u32 %s133, %s134
      %p136 = scmp.eq.s32.totalorder %s135, 0
      %s138 = sadd.s32 %s137, 1
      %s139 = scalar_select %p136, %s137, %s138
      %p142 = pneg %p136
      %p143 = scmp.eq.s32.totalorder %s13, 3
      %p144 = por %p142, %p143
      %p145 = scmp.ne.s32.totalorder %s137, %s140
      %p146 = scmp.eq.s32.totalorder %s13, 0
      %p147 = por %p145, %p146
      %p148 = scmp.ne.s32.totalorder %s137, %s140
      %p149 = scmp.eq.s32.totalorder %s18, 3
      %p150 = por %p148, %p149
      %p151 = scmp.ne.s32.totalorder %s140, %s141
      %p152 = scmp.eq.s32.totalorder %s18, 0
      %p153 = por %p151, %p152
      %p154 = scmp.ne.s32.totalorder %s140, %s141
      %p155 = scmp.eq.s32.totalorder %s19, 3
      %p156 = por %p154, %p155
      %p158 = scmp.ne.s32.totalorder %s141, %s157
      %p159 = scmp.eq.s32.totalorder %s19, 0
      %p160 = por %p158, %p159
      %p161 = scmp.le.s32.totalorder 1, %s13
      %p162 = scmp.lt.s32.totalorder %s13, 5
      %p163 = pnand %p161, %p162
      %p164 = pneg %p163
      // Predicated region
      $region9: #{encoder_block.7} parent=5 // pred_check
        _
      $region10: #{encoder_block.7} parent=5 // pred_check_branch
        %166 = sbr.rel (%p163) target = $region12
      $region11: #{encoder_block.7} parent=5 // pred_region
        %s167 = ssub.s32 %s13, 1
        // Predicated region
        $region13: #{encoder_block.7} parent=11 // pred_check
          %p168 = pneg %p104
        $region14: #{encoder_block.7} parent=11 // pred_check_branch
          %170 = sbr.rel (%p168) target = $region16
        $region15: #{encoder_block.7} parent=11 // pred_region
          _
        $region16: #{encoder_block.7} parent=11 // pred_fallthru
          _
        // Predicated region
        $region17: #{encoder_block.7} parent=11 // pred_check
          %p171 = pneg %p125
        $region18: #{encoder_block.7} parent=11 // pred_check_branch
          %173 = sbr.rel (%p171) target = $region20
        $region19: #{encoder_block.7} parent=11 // pred_region
          _
        $region20: #{encoder_block.7} parent=11 // pred_fallthru
          _
      $region12: #{encoder_block.7} parent=5 // pred_fallthru
        _
      %p174 = scmp.lt.s32.totalorder %s13, 4
      // Predicated region
      $region21: #{encoder_block.7} parent=5 // pred_check
        %p175 = pneg %p174
      $region22: #{encoder_block.7} parent=5 // pred_check_branch
        %177 = sbr.rel (%p175) target = $region24
      $region23: #{encoder_block.7} parent=5 // pred_region
        // Predicated region
        $region25: #{encoder_block.7} parent=23 // pred_check
          %p178 = pneg %p47
        $region26: #{encoder_block.7} parent=23 // pred_check_branch
          %180 = sbr.rel (%p178) target = $region28
        $region27: #{encoder_block.7} parent=23 // pred_region
          %s181 = sand.u32 %s37, 1
          %s182 = sand.u32 %s37, 1
          %s183 = smul.addr %s182, 32
          %s184 = scalar_lea.vmem [#allocation2], %s183
          %s185 = smul.addr %s20, 24
          %s186 = sadd.s32 %s21, %s185
          %s187 = smul.addr %s186, 4
          %s188 = scalar_lea.vmem %s0, %s187
          // Predicated region
          $region29: #{encoder_block.7} parent=27 // pred_check
            _
          $region30: #{encoder_block.7} parent=27 // pred_check_branch
            %190 = sbr.rel (0) target = $region32
          $region31: #{encoder_block.7} parent=27 // pred_region
            // Predicated region
            $region33: #{encoder_block.7} parent=31 // pred_check
              _
            $region34: #{encoder_block.7} parent=31 // pred_check_branch
              %192 = sbr.rel target = $region36
            $region35: #{encoder_block.7} parent=31 // pred_region
              // Predicated region
              $region48: #{encoder_block.7} parent=35 // pred_check
                _
              $region49: #{encoder_block.7} parent=35 // pred_check_branch
                %222 = sbr.rel (0) target = $region51
              $region50: #{encoder_block.7} parent=35 // pred_region
                loop: start=0, step=1, limit=1
                $region52: #{encoder_block.7} parent=50 // loop_pre_header
                  _
                $region53: #{encoder_block.7} parent=50 // loop_header
                  %s224 = sphi 0, %s228
                  %p225 = scmp.ge.s32.totalorder %s224, 1
                  %s229 = sphi %s188, %s188
                  %s230 = sphi %s184, %s184
                $region54: #{encoder_block.7} parent=50 // loop_header_branch
                  %227 = sbr.rel (%p225) target = $region58
                $region55: #{encoder_block.7} parent=50 // loop_body
                  _
                $region56: #{encoder_block.7} parent=50 // loop_footer
                  %s228 = sadd.s32 1, %s224
                $region57: #{encoder_block.7} parent=50 // loop_footer_branch
                  %223 = sbr.rel target = $region53
                $region58: #{encoder_block.7} parent=50 // loop_exit
                  _
                %s232 = ssub.s32 16, 1
                loop: start=0, step=1, limit=1
                $region59: #{encoder_block.7} parent=50 // loop_pre_header
                  _
                $region60: #{encoder_block.7} parent=50 // loop_header
                  %s234 = sphi 0, %s238
                  %p235 = scmp.ge.s32.totalorder %s234, 1
                  %s239 = sphi %s188, %s188
                  %s240 = sphi %s184, %s184
                $region61: #{encoder_block.7} parent=50 // loop_header_branch
                  %237 = sbr.rel (%p235) target = $region65
                $region62: #{encoder_block.7} parent=50 // loop_body
                  %v241 = vld [vmem:[%s239] sm:%s232]
                  %242 = vst [vmem:[%s240] sm:%s232] %v241
                  %v243 = vld [vmem:[%s239 + $0xc] sm:%s232]
                  %244 = vst [vmem:[%s240 + $0x4] sm:%s232] %v243
                  %v245 = vld [vmem:[%s239 + $0x18] sm:%s232]
                  %246 = vst [vmem:[%s240 + $0x8] sm:%s232] %v245
                  %v247 = vld [vmem:[%s239 + $0x24] sm:%s232]
                  %248 = vst [vmem:[%s240 + $0xc] sm:%s232] %v247
                  %v249 = vld [vmem:[%s239 + $0x30] sm:%s232]
                  %250 = vst [vmem:[%s240 + $0x10] sm:%s232] %v249
                  %v251 = vld [vmem:[%s239 + $0x3c] sm:%s232]
                  %252 = vst [vmem:[%s240 + $0x14] sm:%s232] %v251
                  %v253 = vld [vmem:[%s239 + $0x48] sm:%s232]
                  %254 = vst [vmem:[%s240 + $0x18] sm:%s232] %v253
                  %v255 = vld [vmem:[%s239 + $0x54] sm:%s232]
                  %256 = vst [vmem:[%s240 + $0x1c] sm:%s232] %v255
                $region63: #{encoder_block.7} parent=50 // loop_footer
                  %s238 = sadd.s32 1, %s234
                $region64: #{encoder_block.7} parent=50 // loop_footer_branch
                  %233 = sbr.rel target = $region60
                $region65: #{encoder_block.7} parent=50 // loop_exit
                  _
              $region51: #{encoder_block.7} parent=35 // pred_fallthru
                _
            $region36: #{encoder_block.7} parent=31 // pred_fallthru
              _
            // Predicated region
            $region37: #{encoder_block.7} parent=31 // pred_check
              _
            $region38: #{encoder_block.7} parent=31 // pred_check_branch
              %194 = sbr.rel (0) target = $region40
            $region39: #{encoder_block.7} parent=31 // pred_region
              %s196 = ssub.s32 16, 1
              loop: start=0, step=1, limit=1
              $region41: #{encoder_block.7} parent=39 // loop_pre_header
                _
              $region42: #{encoder_block.7} parent=39 // loop_header
                %s198 = sphi 0, %s202
                %p199 = scmp.ge.s32.totalorder %s198, 1
                %s203 = sphi %s188, %s188
                %s204 = sphi %s184, %s184
              $region43: #{encoder_block.7} parent=39 // loop_header_branch
                %201 = sbr.rel (%p199) target = $region47
              $region44: #{encoder_block.7} parent=39 // loop_body
                %v205 = vld [vmem:[%s203] sm:%s196]
                %206 = vst [vmem:[%s204] sm:%s196] %v205
                %v207 = vld [vmem:[%s203 + $0xc] sm:%s196]
                %208 = vst [vmem:[%s204 + $0x4] sm:%s196] %v207
                %v209 = vld [vmem:[%s203 + $0x18] sm:%s196]
                %210 = vst [vmem:[%s204 + $0x8] sm:%s196] %v209
                %v211 = vld [vmem:[%s203 + $0x24] sm:%s196]
                %212 = vst [vmem:[%s204 + $0xc] sm:%s196] %v211
                %v213 = vld [vmem:[%s203 + $0x30] sm:%s196]
                %214 = vst [vmem:[%s204 + $0x10] sm:%s196] %v213
                %v215 = vld [vmem:[%s203 + $0x3c] sm:%s196]
                %216 = vst [vmem:[%s204 + $0x14] sm:%s196] %v215
                %v217 = vld [vmem:[%s203 + $0x48] sm:%s196]
                %218 = vst [vmem:[%s204 + $0x18] sm:%s196] %v217
                %v219 = vld [vmem:[%s203 + $0x54] sm:%s196]
                %220 = vst [vmem:[%s204 + $0x1c] sm:%s196] %v219
              $region45: #{encoder_block.7} parent=39 // loop_footer
                %s202 = sadd.s32 1, %s198
              $region46: #{encoder_block.7} parent=39 // loop_footer_branch
                %197 = sbr.rel target = $region42
              $region47: #{encoder_block.7} parent=39 // loop_exit
                _
            $region40: #{encoder_block.7} parent=31 // pred_fallthru
              _
          $region32: #{encoder_block.7} parent=27 // pred_fallthru
            _
          %257 = vnop
        $region28: #{encoder_block.7} parent=23 // pred_fallthru
          _
        // Predicated region
        $region66: #{encoder_block.7} parent=23 // pred_check
          %p258 = pneg %p77
        $region67: #{encoder_block.7} parent=23 // pred_check_branch
          %260 = sbr.rel (%p258) target = $region69
        $region68: #{encoder_block.7} parent=23 // pred_region
          %s261 = sand.u32 %s67, 1
          %s262 = sand.u32 %s67, 1
          %s263 = smul.addr %s262, 32
          %s264 = scalar_lea.vmem [#allocation3], %s263
          %s265 = sadd.s32 %s21, 1
          %s266 = smul.addr %s20, 24
          %s267 = sadd.s32 %s265, %s266
          %s268 = smul.addr %s267, 4
          %s269 = scalar_lea.vmem %s1, %s268
          // Predicated region
          $region70: #{encoder_block.7} parent=68 // pred_check
            _
          $region71: #{encoder_block.7} parent=68 // pred_check_branch
            %271 = sbr.rel (0) target = $region73
          $region72: #{encoder_block.7} parent=68 // pred_region
            // Predicated region
            $region74: #{encoder_block.7} parent=72 // pred_check
              _
            $region75: #{encoder_block.7} parent=72 // pred_check_branch
              %273 = sbr.rel target = $region77
            $region76: #{encoder_block.7} parent=72 // pred_region
              // Predicated region
              $region89: #{encoder_block.7} parent=76 // pred_check
                _
              $region90: #{encoder_block.7} parent=76 // pred_check_branch
                %303 = sbr.rel (0) target = $region92
              $region91: #{encoder_block.7} parent=76 // pred_region
                loop: start=0, step=1, limit=1
                $region93: #{encoder_block.7} parent=91 // loop_pre_header
                  _
                $region94: #{encoder_block.7} parent=91 // loop_header
                  %s305 = sphi 0, %s309
                  %p306 = scmp.ge.s32.totalorder %s305, 1
                  %s310 = sphi %s269, %s269
                  %s311 = sphi %s264, %s264
                $region95: #{encoder_block.7} parent=91 // loop_header_branch
                  %308 = sbr.rel (%p306) target = $region99
                $region96: #{encoder_block.7} parent=91 // loop_body
                  _
                $region97: #{encoder_block.7} parent=91 // loop_footer
                  %s309 = sadd.s32 1, %s305
                $region98: #{encoder_block.7} parent=91 // loop_footer_branch
                  %304 = sbr.rel target = $region94
                $region99: #{encoder_block.7} parent=91 // loop_exit
                  _
                %s313 = ssub.s32 16, 1
                loop: start=0, step=1, limit=1
                $region100: #{encoder_block.7} parent=91 // loop_pre_header
                  _
                $region101: #{encoder_block.7} parent=91 // loop_header
                  %s315 = sphi 0, %s319
                  %p316 = scmp.ge.s32.totalorder %s315, 1
                  %s320 = sphi %s269, %s269
                  %s321 = sphi %s264, %s264
                $region102: #{encoder_block.7} parent=91 // loop_header_branch
                  %318 = sbr.rel (%p316) target = $region106
                $region103: #{encoder_block.7} parent=91 // loop_body
                  %v322 = vld [vmem:[%s320] sm:%s313]
                  %323 = vst [vmem:[%s321] sm:%s313] %v322
                  %v324 = vld [vmem:[%s320 + $0xc] sm:%s313]
                  %325 = vst [vmem:[%s321 + $0x4] sm:%s313] %v324
                  %v326 = vld [vmem:[%s320 + $0x18] sm:%s313]
                  %327 = vst [vmem:[%s321 + $0x8] sm:%s313] %v326
                  %v328 = vld [vmem:[%s320 + $0x24] sm:%s313]
                  %329 = vst [vmem:[%s321 + $0xc] sm:%s313] %v328
                  %v330 = vld [vmem:[%s320 + $0x30] sm:%s313]
                  %331 = vst [vmem:[%s321 + $0x10] sm:%s313] %v330
                  %v332 = vld [vmem:[%s320 + $0x3c] sm:%s313]
                  %333 = vst [vmem:[%s321 + $0x14] sm:%s313] %v332
                  %v334 = vld [vmem:[%s320 + $0x48] sm:%s313]
                  %335 = vst [vmem:[%s321 + $0x18] sm:%s313] %v334
                  %v336 = vld [vmem:[%s320 + $0x54] sm:%s313]
                  %337 = vst [vmem:[%s321 + $0x1c] sm:%s313] %v336
                $region104: #{encoder_block.7} parent=91 // loop_footer
                  %s319 = sadd.s32 1, %s315
                $region105: #{encoder_block.7} parent=91 // loop_footer_branch
                  %314 = sbr.rel target = $region101
                $region106: #{encoder_block.7} parent=91 // loop_exit
                  _
              $region92: #{encoder_block.7} parent=76 // pred_fallthru
                _
            $region77: #{encoder_block.7} parent=72 // pred_fallthru
              _
            // Predicated region
            $region78: #{encoder_block.7} parent=72 // pred_check
              _
            $region79: #{encoder_block.7} parent=72 // pred_check_branch
              %275 = sbr.rel (0) target = $region81
            $region80: #{encoder_block.7} parent=72 // pred_region
              %s277 = ssub.s32 16, 1
              loop: start=0, step=1, limit=1
              $region82: #{encoder_block.7} parent=80 // loop_pre_header
                _
              $region83: #{encoder_block.7} parent=80 // loop_header
                %s279 = sphi 0, %s283
                %p280 = scmp.ge.s32.totalorder %s279, 1
                %s284 = sphi %s269, %s269
                %s285 = sphi %s264, %s264
              $region84: #{encoder_block.7} parent=80 // loop_header_branch
                %282 = sbr.rel (%p280) target = $region88
              $region85: #{encoder_block.7} parent=80 // loop_body
                %v286 = vld [vmem:[%s284] sm:%s277]
                %287 = vst [vmem:[%s285] sm:%s277] %v286
                %v288 = vld [vmem:[%s284 + $0xc] sm:%s277]
                %289 = vst [vmem:[%s285 + $0x4] sm:%s277] %v288
                %v290 = vld [vmem:[%s284 + $0x18] sm:%s277]
                %291 = vst [vmem:[%s285 + $0x8] sm:%s277] %v290
                %v292 = vld [vmem:[%s284 + $0x24] sm:%s277]
                %293 = vst [vmem:[%s285 + $0xc] sm:%s277] %v292
                %v294 = vld [vmem:[%s284 + $0x30] sm:%s277]
                %295 = vst [vmem:[%s285 + $0x10] sm:%s277] %v294
                %v296 = vld [vmem:[%s284 + $0x3c] sm:%s277]
                %297 = vst [vmem:[%s285 + $0x14] sm:%s277] %v296
                %v298 = vld [vmem:[%s284 + $0x48] sm:%s277]
                %299 = vst [vmem:[%s285 + $0x18] sm:%s277] %v298
                %v300 = vld [vmem:[%s284 + $0x54] sm:%s277]
                %301 = vst [vmem:[%s285 + $0x1c] sm:%s277] %v300
              $region86: #{encoder_block.7} parent=80 // loop_footer
                %s283 = sadd.s32 1, %s279
              $region87: #{encoder_block.7} parent=80 // loop_footer_branch
                %278 = sbr.rel target = $region83
              $region88: #{encoder_block.7} parent=80 // loop_exit
                _
            $region81: #{encoder_block.7} parent=72 // pred_fallthru
              _
          $region73: #{encoder_block.7} parent=68 // pred_fallthru
            _
          %338 = vnop
        $region69: #{encoder_block.7} parent=23 // pred_fallthru
          _
      $region24: #{encoder_block.7} parent=5 // pred_fallthru
        _
      %p339 = scmp.le.s32.totalorder 1, %s13
      %p340 = scmp.lt.s32.totalorder %s13, 5
      %p341 = pnand %p339, %p340
      %p342 = pneg %p341
      // Predicated region
      $region107: #{encoder_block.7} parent=5 // pred_check
        _
      $region108: #{encoder_block.7} parent=5 // pred_check_branch
        %344 = sbr.rel (%p341) target = $region110
      $region109: #{encoder_block.7} parent=5 // pred_region
        %s345 = ssub.s32 %s13, 1
        %s346 = sand.u32 %s40, 1
        %s347 = sand.u32 %s40, 1
        %s348 = smul.addr %s347, 32
        %s349 = scalar_lea.vmem [#allocation2], %s348
        // Predicated region
        $region111: #{encoder_block.7} parent=109 // pred_check
          %p350 = pneg %p53
        $region112: #{encoder_block.7} parent=109 // pred_check_branch
          %352 = sbr.rel (%p350) target = $region114
        $region113: #{encoder_block.7} parent=109 // pred_region
          _
        $region114: #{encoder_block.7} parent=109 // pred_fallthru
          _
        %s353 = sand.u32 %s70, 1
        %s354 = sand.u32 %s70, 1
        %s355 = smul.addr %s354, 32
        %s356 = scalar_lea.vmem [#allocation3], %s355
        // Predicated region
        $region115: #{encoder_block.7} parent=109 // pred_check
          %p357 = pneg %p83
        $region116: #{encoder_block.7} parent=109 // pred_check_branch
          %359 = sbr.rel (%p357) target = $region118
        $region117: #{encoder_block.7} parent=109 // pred_region
          _
        $region118: #{encoder_block.7} parent=109 // pred_fallthru
          _
        %s360 = sand.u32 %s40, 1
        %s361 = sand.u32 %s40, 1
        %s362 = smul.addr %s361, 32
        %s363 = scalar_lea.vmem [#allocation2], %s362
        %p364 = pneg %p53
        %p365 = pneg %p50
        %s366 = sand.u32 %s70, 1
        %s367 = sand.u32 %s70, 1
        %s368 = smul.addr %s367, 32
        %s369 = scalar_lea.vmem [#allocation3], %s368
        %p370 = pneg %p83
        %p371 = pneg %p80
        %p372 = pneg %p104
        %p373 = pneg %p101
        %p374 = pneg %p125
        %p375 = pneg %p122
        %p376 = pneg %p153
        %p377 = pneg %p150
        %s378 = sand.u32 %s140, 1
        %s379 = scalar_lea.sflag [#allocation5], %s378
        %s380 = sand.u32 %s140, 1
        %s381 = smul.addr %s380, 64
        %s382 = scalar_lea.vmem [#allocation4], %s381
        %s383 = sadd.s32 %s23, 1
        %v384 = vld [vmem:[%s349] sm:$0xf]
        %v385 = vld [vmem:[%s349 + $0x4] sm:$0xf]
        %v386 = vld [vmem:[%s349 + $0x8] sm:$0xf]
        %v387 = vld [vmem:[%s349 + $0xc] sm:$0xf]
        %v388 = vld [vmem:[%s349 + $0x10] sm:$0xf]
        %v389 = vld [vmem:[%s349 + $0x14] sm:$0xf]
        %v390 = vld [vmem:[%s349 + $0x18] sm:$0xf]
        %v391 = vld [vmem:[%s349 + $0x1c] sm:$0xf]
        %v392 = vld [vmem:[%s356] sm:$0xf]
        %v393 = vld [vmem:[%s356 + $0x4] sm:$0xf]
        %v394 = vld [vmem:[%s356 + $0x8] sm:$0xf]
        %v395 = vld [vmem:[%s356 + $0xc] sm:$0xf]
        %v396 = vld [vmem:[%s356 + $0x10] sm:$0xf]
        %v397 = vld [vmem:[%s356 + $0x14] sm:$0xf]
        %v398 = vld [vmem:[%s356 + $0x18] sm:$0xf]
        %v399 = vld [vmem:[%s356 + $0x1c] sm:$0xf]
        %v408 = vunpack.c.l.b16 %v384
        %v409 = vunpack.c.l.b16 %v385
        %v410 = vunpack.c.l.b16 %v386
        %v411 = vunpack.c.l.b16 %v387
        %v412 = vunpack.c.l.b16 %v388
        %v413 = vunpack.c.l.b16 %v389
        %v414 = vunpack.c.l.b16 %v390
        %v415 = vunpack.c.l.b16 %v391
        %v416 = vpack.c.b16 %v409, %v408
        %v417 = vpack.c.b16 %v411, %v410
        %v418 = vpack.c.b16 %v413, %v412
        %v419 = vpack.c.b16 %v415, %v414
        %v432 = vunpack.c.l.b16 %v392
        %v433 = vunpack.c.l.b16 %v393
        %v434 = vunpack.c.l.b16 %v394
        %v435 = vunpack.c.l.b16 %v395
        %v436 = vunpack.c.l.b16 %v396
        %v437 = vunpack.c.l.b16 %v397
        %v438 = vunpack.c.l.b16 %v398
        %v439 = vunpack.c.l.b16 %v399
        %v440 = vpack.c.b16 %v433, %v432
        %v441 = vpack.c.b16 %v435, %v434
        %v442 = vpack.c.b16 %v437, %v436
        %v443 = vpack.c.b16 %v439, %v438
        %444 = vrot.lane.b32.xlu0 %v416, 127
        %v445 = vpop.permute.xlu0 %444
        %446 = vrot.lane.b32.xlu0 %v440, 127
        %v447 = vpop.permute.xlu0 %446
        %448 = vrot.lane.b32.xlu0 %v417, 127
        %v449 = vpop.permute.xlu0 %448
        %450 = vrot.lane.b32.xlu0 %v441, 127
        %v451 = vpop.permute.xlu0 %450
        %vm452 = vcmask 1039360
        %v453 = vsel %vm452, %v445, %v447
        %v454 = vsel %vm452, %v449, %v451
        %457 = vrot.lane.b32.xlu0 %v418, 127
        %v458 = vpop.permute.xlu0 %457
        %459 = vrot.lane.b32.xlu0 %v442, 127
        %v460 = vpop.permute.xlu0 %459
        %461 = vrot.lane.b32.xlu0 %v419, 127
        %v462 = vpop.permute.xlu0 %461
        %463 = vrot.lane.b32.xlu0 %v443, 127
        %v464 = vpop.permute.xlu0 %463
        %v465 = vsel %vm452, %v458, %v460
        %v466 = vsel %vm452, %v462, %v464
        %v469 = vld [vmem:[%s2] sm:$0xf]
        %v470 = vld [vmem:[%s2 + $0x4] sm:$0xf]
        %v471 = vld [vmem:[%s2 + $0x8] sm:$0xf]
        %v472 = vld [vmem:[%s2 + $0xc] sm:$0xf]
        %v473 = vld [vmem:[%s2 + $0x10] sm:$0xf]
        %v474 = vld [vmem:[%s2 + $0x14] sm:$0xf]
        %v475 = vld [vmem:[%s2 + $0x18] sm:$0xf]
        %v476 = vld [vmem:[%s2 + $0x1c] sm:$0xf]
        %v477 = vld [vmem:[%s3] sm:$0xff]
        %v478 = vld [vmem:[%s3 + $0x8] sm:$0xff]
        %v479 = vld [vmem:[%s3 + $0x10] sm:$0xff]
        %v480 = vld [vmem:[%s3 + $0x18] sm:$0xff]
        %v481 = vld [vmem:[%s3 + $0x20] sm:$0xff]
        %v482 = vld [vmem:[%s3 + $0x28] sm:$0xff]
        %v483 = vld [vmem:[%s3 + $0x30] sm:$0xff]
        %v484 = vld [vmem:[%s3 + $0x38] sm:$0xff]
        %486 = vset.pattern.permute.xlu0 0
        %487 = vperm.xlu0 %486, %v477
        %v488 = vpop.permute.xlu0 %487
        %491 = vset.pattern.permute.xlu0 0
        %492 = vperm.xlu0 %491, %v478
        %v493 = vpop.permute.xlu0 %492
        %496 = vset.pattern.permute.xlu0 0
        %497 = vperm.xlu0 %496, %v479
        %v498 = vpop.permute.xlu0 %497
        %501 = vset.pattern.permute.xlu0 0
        %502 = vperm.xlu0 %501, %v480
        %v503 = vpop.permute.xlu0 %502
        %506 = vset.pattern.permute.xlu0 0
        %507 = vperm.xlu0 %506, %v481
        %v508 = vpop.permute.xlu0 %507
        %511 = vset.pattern.permute.xlu0 0
        %512 = vperm.xlu0 %511, %v482
        %v513 = vpop.permute.xlu0 %512
        %516 = vset.pattern.permute.xlu0 0
        %517 = vperm.xlu0 %516, %v483
        %v518 = vpop.permute.xlu0 %517
        %521 = vset.pattern.permute.xlu0 0
        %522 = vperm.xlu0 %521, %v484
        %v523 = vpop.permute.xlu0 %522
        %v533 = vunpack.c.l.b16 %v469
        %v534 = vunpack.c.l.b16 %v470
        %v535 = vunpack.c.l.b16 %v471
        %v536 = vunpack.c.l.b16 %v472
        %v537 = vunpack.c.l.b16 %v473
        %v538 = vunpack.c.l.b16 %v474
        %v539 = vunpack.c.l.b16 %v475
        %v540 = vunpack.c.l.b16 %v476
        %v541 = vpack.c.b16 %v534, %v533
        %v542 = vpack.c.b16 %v536, %v535
        %v543 = vpack.c.b16 %v538, %v537
        %v544 = vpack.c.b16 %v540, %v539
        %549 = vmatpush.bf16.msra.mxu0 %v466
        %550 = vmatpush.bf16.msra.mxu0 %v465
        %551 = vmatpush.bf16.msra.mxu0 %v454
        %552 = vmatpush.bf16.msra.mxu0 %v453
        %553 = vmatpush.bf16.msra.mxu0 %v419
        %554 = vmatpush.bf16.msra.mxu0 %v418
        %555 = vmatpush.bf16.msra.mxu0 %v417
        %556 = vmatpush.bf16.msra.mxu0 %v416
        %557 = vmatmul.bf16.gmra.mxu0 %v541
        %v558 = vpop.f32.mrf.mxu0
        %v559 = vadd.f32 %v488, %v558
        %v560 = vpop.f32.mrf.mxu0
        %v561 = vadd.f32 %v493, %v560
        %562 = vmatmul.bf16.gmra.mxu0 %v542
        %v563 = vpop.f32.mrf.mxu0
        %v564 = vadd.f32 %v498, %v563
        %v565 = vpop.f32.mrf.mxu0
        %v566 = vadd.f32 %v503, %v565
        %567 = vmatmul.bf16.gmra.mxu0 %v543
        %v568 = vpop.f32.mrf.mxu0
        %v569 = vadd.f32 %v508, %v568
        %v570 = vpop.f32.mrf.mxu0
        %v571 = vadd.f32 %v513, %v570
        %572 = vmatmul.bf16.gmra.mxu0 %v544
        %v573 = vpop.f32.mrf.mxu0
        %v574 = vadd.f32 %v518, %v573
        %v575 = vpop.f32.mrf.mxu0
        %v576 = vadd.f32 %v523, %v575
        %577 = vdwg.mxu0
        %578 = vst [vmem:[%s382] sm:$0xff] %v559
        %579 = vst [vmem:[%s382 + $0x8] sm:$0xff] %v561
        %580 = vst [vmem:[%s382 + $0x10] sm:$0xff] %v564
        %581 = vst [vmem:[%s382 + $0x18] sm:$0xff] %v566
        %582 = vst [vmem:[%s382 + $0x20] sm:$0xff] %v569
        %583 = vst [vmem:[%s382 + $0x28] sm:$0xff] %v571
        %584 = vst [vmem:[%s382 + $0x30] sm:$0xff] %v574
        %585 = vst [vmem:[%s382 + $0x38] sm:$0xff] %v576
        %s586 = sand.u32 %s140, 1
        %s587 = scalar_lea.sflag [#allocation5], %s586
        %s588 = sand.u32 %s140, 1
        %s589 = smul.addr %s588, 64
        %s590 = scalar_lea.vmem [#allocation4], %s589
        // Predicated region
        $region119: #{encoder_block.7} parent=109 // pred_check
          %p591 = pneg %p150
        $region120: #{encoder_block.7} parent=109 // pred_check_branch
          %593 = sbr.rel (%p591) target = $region122
        $region121: #{encoder_block.7} parent=109 // pred_region
          %595 = vsyncadd %s587, 0
          %s596 = smul.addr %s22, 16
          %s597 = sadd.s32 %s23, %s596
          %s598 = smul.addr %s597, 8
          %s599 = scalar_lea.hbm %s4, %s598
          %s600 = sshll.u32 %s590, 4
          %s601 = int_to_ptr.vmem [resolvable:$true] %s600
          %s602 = sshll.u32 %s599, 4
          %s603 = int_to_ptr.hbm [resolvable:$true] %s602
          %608 = dma.vmem_to_hbm [thread:$0]  %s601, 1024, %s603, %s587, 128, 256, 8
        $region122: #{encoder_block.7} parent=109 // pred_fallthru
          _
      $region110: #{encoder_block.7} parent=5 // pred_fallthru
        _
      %p609 = scmp.le.s32.totalorder 2, %s13
      // Predicated region
      $region123: #{encoder_block.7} parent=5 // pred_check
        %p610 = pneg %p609
      $region124: #{encoder_block.7} parent=5 // pred_check_branch
        %612 = sbr.rel (%p610) target = $region126
      $region125: #{encoder_block.7} parent=5 // pred_region
        %s613 = ssub.s32 %s13, 2
        // Predicated region
        $region127: #{encoder_block.7} parent=125 // pred_check
          %p614 = pneg %p156
        $region128: #{encoder_block.7} parent=125 // pred_check_branch
          %616 = sbr.rel (%p614) target = $region130
        $region129: #{encoder_block.7} parent=125 // pred_region
          %s617 = sand.u32 %s141, 1
          %s618 = scalar_lea.sflag [#allocation5], %s617
          %s619 = sand.u32 %s141, 1
          %s620 = smul.addr %s619, 64
          %s621 = scalar_lea.vmem [#allocation4], %s620
          %623 = dma.done %s618, 1024
        $region130: #{encoder_block.7} parent=125 // pred_fallthru
          _
      $region126: #{encoder_block.7} parent=5 // pred_fallthru
        _
    $region6: #{encoder_block.7} parent=1 // loop_footer
      %s17 = sadd.s32 1, %s13
    $region7: #{encoder_block.7} parent=1 // loop_footer_branch
      %12 = sbr.rel target = $region3
    $region8: #{encoder_block.7} parent=1 // loop_exit
      _
    %624 = vsyncpa [#allocation5], 1
    %s625 = scalar_lea.sflag [#allocation5], 1
    %626 = vsyncpa %s625, 1

</llo_original>
